<compile_context>
chip_gen: v6e
topology: v6e:2x2x1
jax: 0.10.0
libtpu: 0.0.40
codegen_flags: <defaults>
</compile_context>

<pallas_src>
import functools

import jax
import jax.numpy as jnp
from jax.experimental import pallas as pl
from jax.experimental.pallas import tpu as pltpu

_EPS = 1e-5


# --------------------------------------------------------------------------- #
# helpers
# --------------------------------------------------------------------------- #
def _vmem_capacity_bytes():
    """Trace-time VMEM capacity query; conservative (v7x) fallback."""
    try:
        info = pltpu.get_tpu_info()
        return int(getattr(info, "vmem_capacity_bytes", 64 << 20))
    except Exception:  # not on TPU / API drift
        return 64 << 20


def _pick_m_tile(m, target):
    """Largest multiple of 16 (bf16 sublane packing) <= target that divides m.

    Falls back to multiples of 8, then (small m only) m itself.
    """
    target = max(8, min(int(target), m))
    for step in (16, 8):
        t = (target // step) * step
        while t >= step:
            if m % t == 0:
                return t
            t -= step
    if m <= 2048:          # guard: never silently blow VMEM on awkward large M
        return m
    raise ValueError(f"no VMEM-safe row tile divides M={m}")


def _m_tile_for_rows(m, row_bytes, cap, override=None):
    """Generation-aware row-tile pick: ~1024 rows on 128 MiB parts (v5e/v6e),
    ~384 on v7x's 64 MiB, further bounded so a double-buffered step fits."""
    if override is not None:
        return _pick_m_tile(m, override)
    target = 1024 if cap >= (96 << 20) else 384
    budget_rows = max(16, int(0.30 * cap) // max(1, 2 * row_bytes))
    return _pick_m_tile(m, min(target, budget_rows))


def _tpu_params(sems, step_bytes, cap):
    kw = dict(dimension_semantics=sems)
    # Double-buffered pipelining roughly doubles the per-step working set.
    need = 2 * int(step_bytes) + (4 << 20)
    # Threshold sits below v5e's 16 MiB scoped default; cap leaves Mosaic
    # internal-scratch headroom on v7x's 64 MiB physical VMEM.
    if need > 12 * (1 << 20):
        kw["vmem_limit_bytes"] = int(min(need, int(0.75 * cap)))
    return pltpu.CompilerParams(**kw)


def _im2col(x, ksize, stride, pad, order):
    """(B,Cin,H,W) -> (B*Ho*Wo, ksize*ksize*Cin) with taps in `order`
    (centre tap first -> shortcut slice starts at lane offset 0)."""
    B, C, H, W = x.shape
    xp = jnp.pad(x, ((0, 0), (0, 0), (pad, pad), (pad, pad)))
    Ho = (H + 2 * pad - ksize) // stride + 1
    Wo = (W + 2 * pad - ksize) // stride + 1
    cols = [xp[:, :, kh:kh + stride * Ho:stride, kw:kw + stride * Wo:stride]
            for kh, kw in order]
    p = jnp.stack(cols, axis=1)                       # (B, 9, Cin, Ho, Wo)
    p = p.transpose(0, 3, 4, 1, 2).reshape(B * Ho * Wo, ksize * ksize * C)
    return p, Ho, Wo


# --------------------------------------------------------------------------- #
# Kernel 1: conv1 (im2col matmul) + shortcut 1x1 conv + BN partial statistics
# --------------------------------------------------------------------------- #
def _conv1_shortcut_kernel(patch_ref, w1_ref, wsc_ref,
                           conv_ref, sc_ref, stats_ref, *, cin):
    p = patch_ref[...]                                            # (tm, 9*Cin) bf16
    conv = jnp.dot(p, w1_ref[...], preferred_element_type=jnp.float32)   # (tm, C)
    # Centre tap of the 3x3 window == stride-subsampled input pixel == the input
    # of the 1x1 stride-s shortcut conv; it is the first Cin columns (offset 0).
    sc = jnp.dot(p[:, :cin], wsc_ref[...], preferred_element_type=jnp.float32)
    conv_ref[...] = conv.astype(conv_ref.dtype)                   # bf16 writeback
    sc_ref[...] = sc.astype(sc_ref.dtype)                         # bf16 writeback
    # Per-tile channel partials from the f32 values, one lane-dense row each
    # (no lane-axis concatenation in vregs).
    stats_ref[0, 0:1, :] = jnp.sum(conv, axis=0, keepdims=True)
    stats_ref[0, 1:2, :] = jnp.sum(conv * conv, axis=0, keepdims=True)
    stats_ref[0, 2:3, :] = jnp.sum(sc, axis=0, keepdims=True)
    stats_ref[0, 3:4, :] = jnp.sum(sc * sc, axis=0, keepdims=True)


# --------------------------------------------------------------------------- #
# Kernel 2: relu(bn1) apply + fused q/k/v projection + per-head attention
# --------------------------------------------------------------------------- #
def _mhsa_kernel(x_ref, s1_ref, b1_ref, wqkv_ref, bqkv_ref, rel_ref,
                 out_ref, stats_ref, *, C, heads, d):
    # relu(bn1(conv1)) with the affine precomputed in glue.
    x = x_ref[0].astype(jnp.float32) * s1_ref[...] + b1_ref[...]
    x = jnp.maximum(x, 0.0).astype(jnp.bfloat16)                  # (N, C)
    # Lane-dense fused projection: (N, C) x (C, 3C), f32 accumulation.
    qkv = jnp.dot(x, wqkv_ref[...], preferred_element_type=jnp.float32)
    qkv = qkv + bqkv_ref[...]                                     # (N, 3C) f32
    qkv_b = qkv.astype(jnp.bfloat16)                              # single repack pass
    rel = rel_ref[...]                                            # (N, C) bf16

    # TODO(synk): at realistic sizes (C>=512) pad each head's q/k/v/rel chunk to
    # a 128-lane multiple (or pick heads=4 -> d=128) so per-head slices are
    # lane-aligned and the MXU contraction dim is filled on v6e/v7x.
    for h in range(heads):                                        # static unroll
        lo, hi = h * d, (h + 1) * d
        qh = qkv_b[:, lo:hi]                                      # (N, d)
        kh = qkv_b[:, C + lo:C + hi]
        vh = qkv_b[:, 2 * C + lo:2 * C + hi]
        # content-content:  cc[i, j] = <q_i, k_j>
        cc = jax.lax.dot_general(qh, kh, (((1,), (1,)), ((), ())),
                                 preferred_element_type=jnp.float32)
        # content-position: cp[i, j] = <rel_i, q_j>   (asymmetric, as in the ref)
        cp = jax.lax.dot_general(rel[:, lo:hi], qh, (((1,), (1,)), ((), ())),
                                 preferred_element_type=jnp.float32)
        e = cc + cp
        e = e - jnp.max(e, axis=-1, keepdims=True)
        p = jnp.exp(e)
        attn = p * pl.reciprocal(jnp.sum(p, axis=-1, keepdims=True), approx=True)
        oh = jnp.dot(attn.astype(jnp.bfloat16), vh,
                     preferred_element_type=jnp.float32)          # (N, d) f32
        # Write this head's lane slice directly (no list + concat epilogue that
        # keeps all heads live -> spills) and fold its BN2 partials in now,
        # from the f32 values, while oh is the only live head output.
        out_ref[0, :, lo:hi] = oh.astype(out_ref.dtype)
        stats_ref[0, 0:1, lo:hi] = jnp.sum(oh, axis=0, keepdims=True)
        stats_ref[0, 1:2, lo:hi] = jnp.sum(oh * oh, axis=0, keepdims=True)


# --------------------------------------------------------------------------- #
# Kernel 3: bn2-apply + bn_shortcut-apply + residual + ReLU (affines folded)
# --------------------------------------------------------------------------- #
def _residual_kernel(att_ref, sc_ref, a2_ref, asc_ref, bias_ref, out_ref):
    # out = relu( bnsc(sc) + gamma * bn2(att) ), gamma folded into a2/bias.
    out_ref[...] = jnp.maximum(
        att_ref[...].astype(jnp.float32) * a2_ref[...]
        + sc_ref[...].astype(jnp.float32) * asc_ref[...]
        + bias_ref[...], 0.0)


# --------------------------------------------------------------------------- #
# forward
# --------------------------------------------------------------------------- #
def botneck2_forward(x, params, *, stride=1, heads=8, m_tile=None):
    B, Cin, H, W = x.shape
    C = params["w1"].shape[0]                         # planes
    d = C // heads
    cap = _vmem_capacity_bytes()

    # Centre tap first -> shortcut's 1x1-conv input is the offset-0 lane slice.
    order = [(1, 1)] + [(kh, kw) for kh in range(3) for kw in range(3)
                        if (kh, kw) != (1, 1)]
    patches, Ho, Wo = _im2col(x, 3, stride, 1, order)
    N = Ho * Wo
    M = B * N
    K = 9 * Cin

    tm1 = _m_tile_for_rows(M, 2 * K + 4 * C, cap, m_tile)
    assert M % tm1 == 0
    nt1 = M // tm1

    patches = patches.astype(jnp.bfloat16)
    # torch conv weight (C, Cin, 3, 3) -> rows reordered to match the patch
    # column order (centre tap first).
    w1k = params["w1"].transpose(2, 3, 1, 0)                      # (3,3,Cin,C)
    w1 = jnp.concatenate([w1k[kh, kw] for kh, kw in order],
                         axis=0).astype(jnp.bfloat16)             # (9*Cin, C)
    wsc = params["wsc"].reshape(C, Cin).T.astype(jnp.bfloat16)    # (Cin, C)

    # ---- K1: conv1 + shortcut conv + BN partials, tiled over M --------------
    k1_step = tm1 * (2 * K + 2 * C + 2 * C) + 2 * K * C + 2 * Cin * C
    cost1 = pl.CostEstimate(
        flops=int(2 * M * K * C + 2 * M * Cin * C), transcendentals=0,
        bytes_accessed=int(2 * M * K + 2 * K * C + 2 * Cin * C
                           + 4 * M * C + 16 * nt1 * C))
    conv_raw, sc_raw, stats1 = pl.pallas_call(
        functools.partial(_conv1_shortcut_kernel, cin=Cin),
        grid=(nt1,),
        in_specs=[
            pl.BlockSpec((tm1, K), lambda i: (i, 0)),
            pl.BlockSpec((K, C), lambda i: (0, 0)),
            pl.BlockSpec((Cin, C), lambda i: (0, 0)),
        ],
        out_specs=[
            pl.BlockSpec((tm1, C), lambda i: (i, 0)),
            pl.BlockSpec((tm1, C), lambda i: (i, 0)),
            pl.BlockSpec((1, 4, C), lambda i: (i, 0, 0)),
        ],
        out_shape=[
            jax.ShapeDtypeStruct((M, C), jnp.bfloat16),           # conv1 raw
            jax.ShapeDtypeStruct((M, C), jnp.bfloat16),           # shortcut raw
            jax.ShapeDtypeStruct((nt1, 4, C), jnp.float32),       # BN partials
        ],
        compiler_params=_tpu_params(("parallel",), k1_step, cap),
        cost_estimate=cost1,
    )(patches, w1, wsc)

    # ---- glue: global BN1 / BN-shortcut statistics -> per-channel affines ----
    s = jnp.sum(stats1, axis=0)                      # (4, C)
    inv_m = 1.0 / M
    mean1, mean_sc = s[0] * inv_m, s[2] * inv_m
    var1 = jnp.maximum(s[1] * inv_m - mean1 * mean1, 0.0)
    var_sc = jnp.maximum(s[3] * inv_m - mean_sc * mean_sc, 0.0)
    scale1 = params["bn1_w"] * jax.lax.rsqrt(var1 + _EPS)
    shift1 = params["bn1_b"] - mean1 * scale1
    scale_sc = params["bnsc_w"] * jax.lax.rsqrt(var_sc + _EPS)
    shift_sc = params["bnsc_b"] - mean_sc * scale_sc

    # ---- K2: MHSA, gridded over batch, lane-dense bf16 (B, N, C) output ------
    def proj(w):                                     # torch 1x1 conv -> (Cin, Cout)
        return w.reshape(C, C).T
    wqkv = jnp.concatenate([proj(params["wq"]), proj(params["wk"]),
                            proj(params["wv"])], axis=1).astype(jnp.bfloat16)
    bqkv = jnp.concatenate([params["bq"], params["bk"],
                            params["bv"]]).reshape(1, 3 * C).astype(jnp.float32)
    rel = (params["rel_h"] + params["rel_w"]).reshape(heads, d, N)
    rel_all = rel.transpose(2, 0, 1).reshape(N, C).astype(jnp.bfloat16)   # (N, C)

    x_act = conv_raw.reshape(B, N, C)                # free reshape, no transpose
    k2_step = 6 * N * C + 2 * 3 * C * C + 4 * (3 * C + 2 * C + 2 * C)
    cost2 = pl.CostEstimate(
        flops=int(B * (6 * N * C * C + 6 * N * N * C)),
        transcendentals=int(B * heads * N * N),
        bytes_accessed=int(4 * B * N * C + 2 * 3 * C * C + 2 * N * C
                           + 8 * B * C + 8 * C))
    # TODO(synk): on v7x add a second "parallel" grid axis (head groups) so the
    # grid stays >= 2x the TensorCore count even at small batch.
    att, stats2 = pl.pallas_call(
        functools.partial(_mhsa_kernel, C=C, heads=heads, d=d),
        grid=(B,),
        in_specs=[
            pl.BlockSpec((1, N, C), lambda b: (b, 0, 0)),
            pl.BlockSpec((1, C), lambda b: (0, 0)),
            pl.BlockSpec((1, C), lambda b: (0, 0)),
            pl.BlockSpec((C, 3 * C), lambda b: (0, 0)),
            pl.BlockSpec((1, 3 * C), lambda b: (0, 0)),
            pl.BlockSpec((N, C), lambda b: (0, 0)),
        ],
        out_specs=[
            pl.BlockSpec((1, N, C), lambda b: (b, 0, 0)),
            pl.BlockSpec((1, 2, C), lambda b: (b, 0, 0)),
        ],
        out_shape=[
            jax.ShapeDtypeStruct((B, N, C), jnp.bfloat16),        # attention out
            jax.ShapeDtypeStruct((B, 2, C), jnp.float32),         # BN2 partials
        ],
        compiler_params=_tpu_params(("parallel",), k2_step, cap),
        cost_estimate=cost2,
    )(x_act, scale1.reshape(1, C), shift1.reshape(1, C), wqkv, bqkv, rel_all)

    # ---- glue: BN2 affine with gamma folded ----------------------------------
    s2 = jnp.sum(stats2, axis=0)                     # (2, C)
    mean2 = s2[0] * inv_m
    var2 = jnp.maximum(s2[1] * inv_m - mean2 * mean2, 0.0)
    scale2 = params["bn2_w"] * jax.lax.rsqrt(var2 + _EPS)
    shift2 = params["bn2_b"] - mean2 * scale2
    gamma = params["gamma"][0]
    a2 = (gamma * scale2).reshape(1, C)              # gamma folded into BN2 scale
    asc = scale_sc.reshape(1, C)
    bias = (gamma * shift2 + shift_sc).reshape(1, C)

    # ---- K3: residual epilogue, tiled over M (bf16 reads, f32 out) -----------
    tm3 = _m_tile_for_rows(M, 8 * C, cap, m_tile)
    assert M % tm3 == 0
    nt3 = M // tm3
    att_flat = att.reshape(M, C)                     # (b, n) row-major == sc layout
    k3_step = tm3 * (2 * C + 2 * C + 4 * C) + 3 * 4 * C
    cost3 = pl.CostEstimate(flops=int(6 * M * C), transcendentals=0,
                            bytes_accessed=int(8 * M * C))
    out = pl.pallas_call(
        _residual_kernel,
        grid=(nt3,),
        in_specs=[
            pl.BlockSpec((tm3, C), lambda i: (i, 0)),
            pl.BlockSpec((tm3, C), lambda i: (i, 0)),
            pl.BlockSpec((1, C), lambda i: (0, 0)),
            pl.BlockSpec((1, C), lambda i: (0, 0)),
            pl.BlockSpec((1, C), lambda i: (0, 0)),
        ],
        out_specs=pl.BlockSpec((tm3, C), lambda i: (i, 0)),
        out_shape=jax.ShapeDtypeStruct((M, C), jnp.float32),
        compiler_params=_tpu_params(("parallel",), k3_step, cap),
        cost_estimate=cost3,
    )(att_flat, sc_raw, a2, asc, bias)

    # TODO(synk): NHWC->NCHW transpose is an extra HBM round trip comparable to
    # K3's cost; return NHWC directly if the consumer allows.
    return out.reshape(B, Ho, Wo, C).transpose(0, 3, 1, 2)        # NCHW


# --------------------------------------------------------------------------- #
# parameter init (mirrors the PyTorch module's shapes)
# --------------------------------------------------------------------------- #
def init_params(key, in_planes, planes, size, heads=8):
    d = planes // heads
    ks = jax.random.split(key, 16)

    def rnd(i, shape, s=0.1):
        return s * jax.random.normal(ks[i], shape, jnp.float32)

    return {
        "w1": rnd(0, (planes, in_planes, 3, 3)),
        "bn1_w": 1.0 + rnd(1, (planes,)),
        "bn1_b": rnd(2, (planes,)),
        "wq": rnd(3, (planes, planes, 1, 1)),
        "bq": rnd(4, (planes,)),
        "wk": rnd(5, (planes, planes, 1, 1)),
        "bk": rnd(6, (planes,)),
        "wv": rnd(7, (planes, planes, 1, 1)),
        "bv": rnd(8, (planes,)),
        "rel_h": jax.random.normal(ks[9], (1, heads, d, 1, size), jnp.float32),
        "rel_w": jax.random.normal(ks[10], (1, heads, d, size, 1), jnp.float32),
        "bn2_w": 1.0 + rnd(11, (planes,)),
        "bn2_b": rnd(12, (planes,)),
        "wsc": rnd(13, (planes, in_planes, 1, 1)),
        "bnsc_w": 1.0 + rnd(14, (planes,)),
        "bnsc_b": rnd(15, (planes,)),
        # Botneck2 init is torch.zeros(1); nonzero here so the MHSA branch
        # contributes in this synthetic run.
        "gamma": jnp.full((1,), 0.5, jnp.float32),
    }


if __name__ == "__main__":
    key = jax.random.PRNGKey(0)
    k_x, k_p = jax.random.split(key)

    # Botneck2(in_planes=16, planes=32, stride=1): planes != 256 -> size = 4,
    # heads = 8, d_head = 4.  Input spatial must equal `size` (4x4).
    B, in_planes, planes, size, stride = 2, 16, 32, 4, 1
    x = jax.random.normal(k_x, (B, in_planes, size, size), jnp.float32)
    params = init_params(k_p, in_planes, planes, size)

    # m_tile=16 exercises the multi-tile BN-partials path at this toy size;
    # at realistic sizes leave m_tile=None (VMEM-capacity-aware auto pick).
    fwd = jax.jit(functools.partial(botneck2_forward, stride=stride, m_tile=16))
    out = fwd(x, params)
    out = jax.block_until_ready(out)
    assert out.shape == (B, planes, size, size), out.shape
    assert bool(jnp.all(jnp.isfinite(out)))
    print("KERNEL_OK")
</pallas_src>

<mosaic_0001>
module attributes {stable_mosaic.version = 11 : i64} {
  func.func @_conv1_shortcut_kernel(%arg0: i32, %arg1: memref<16x144xbf16, #tpu.memory_space<vmem>>, %arg2: memref<144x32xbf16, #tpu.memory_space<vmem>>, %arg3: memref<16x32xbf16, #tpu.memory_space<vmem>>, %arg4: memref<16x32xbf16, #tpu.memory_space<vmem>>, %arg5: memref<16x32xbf16, #tpu.memory_space<vmem>>, %arg6: memref<1x4x32xf32, #tpu.memory_space<vmem>>) attributes {dimension_semantics = [#tpu.dimension_semantics<parallel>], iteration_bounds = array<i64: 2>, scalar_prefetch = 0 : i64, scratch_operands = 0 : i64, tpu.core_type = #tpu.core_type<tc>, window_params = [{transform_indices = @transform_0, window_bounds = array<i64: 16, 144>}, {pipeline_mode = #tpu.pipeline_mode<synchronous>, transform_indices = @transform_1, window_bounds = array<i64: 144, 32>}, {pipeline_mode = #tpu.pipeline_mode<synchronous>, transform_indices = @transform_2, window_bounds = array<i64: 16, 32>}, {transform_indices = @transform_3, window_bounds = array<i64: 16, 32>}, {transform_indices = @transform_4, window_bounds = array<i64: 16, 32>}, {transform_indices = @transform_5, window_bounds = array<i64: 1, 4, 32>}]} {
    %c0 = arith.constant 0 : index
    %c0_0 = arith.constant 0 : index
    %0 = vector.load %arg1[%c0, %c0_0] : memref<16x144xbf16, #tpu.memory_space<vmem>>, vector<16x144xbf16>
    %c0_1 = arith.constant 0 : index
    %c0_2 = arith.constant 0 : index
    %1 = vector.load %arg2[%c0_1, %c0_2] : memref<144x32xbf16, #tpu.memory_space<vmem>>, vector<144x32xbf16>
    %cst = arith.constant dense<0.000000e+00> : vector<16x32xf32>
    %2 = tpu.matmul %0, %1, %cst {dimension_numbers = #tpu.dot_dimension_numbers<[1], [0], [0], [1], [0, 0, 1, 1], [], []>} : vector<16x144xbf16>, vector<144x32xbf16>, vector<16x32xf32> -> vector<16x32xf32>
    %3 = vector.extract_strided_slice %0 {offsets = [0, 0], sizes = [16, 16], strides = [1, 1]} : vector<16x144xbf16> to vector<16x16xbf16>
    %c0_3 = arith.constant 0 : index
    %c0_4 = arith.constant 0 : index
    %4 = vector.load %arg3[%c0_3, %c0_4] : memref<16x32xbf16, #tpu.memory_space<vmem>>, vector<16x32xbf16>
    %cst_5 = arith.constant dense<0.000000e+00> : vector<16x32xf32>
    %5 = tpu.matmul %3, %4, %cst_5 {dimension_numbers = #tpu.dot_dimension_numbers<[1], [0], [0], [1], [0, 0, 1, 1], [], []>} : vector<16x16xbf16>, vector<16x32xbf16>, vector<16x32xf32> -> vector<16x32xf32>
    %6 = arith.truncf %2 : vector<16x32xf32> to vector<16x32xbf16>
    %c0_6 = arith.constant 0 : index
    %c0_7 = arith.constant 0 : index
    %7 = vector.load %arg4[%c0_6, %c0_7] : memref<16x32xbf16, #tpu.memory_space<vmem>>, vector<16x32xbf16>
    tpu.vector_store %arg4[%c0_6, %c0_7], %6 {strides = array<i32>} : memref<16x32xbf16, #tpu.memory_space<vmem>>, vector<16x32xbf16>,
    %8 = arith.truncf %5 : vector<16x32xf32> to vector<16x32xbf16>
    %c0_8 = arith.constant 0 : index
    %c0_9 = arith.constant 0 : index
    %9 = vector.load %arg5[%c0_8, %c0_9] : memref<16x32xbf16, #tpu.memory_space<vmem>>, vector<16x32xbf16>
    tpu.vector_store %arg5[%c0_8, %c0_9], %8 {strides = array<i32>} : memref<16x32xbf16, #tpu.memory_space<vmem>>, vector<16x32xbf16>,
    %cst_10 = arith.constant dense<0.000000e+00> : vector<32xf32>
    %10 = vector.multi_reduction <add>, %2, %cst_10 [0] : vector<16x32xf32> to vector<32xf32>
    %11 = vector.shape_cast %10 : vector<32xf32> to vector<1x32xf32>
    %c0_11 = arith.constant 0 : index
    %c0_12 = arith.constant 0 : index
    %c0_13 = arith.constant 0 : index
    %12 = vector.load %arg6[%c0_11, %c0_12, %c0_13] : memref<1x4x32xf32, #tpu.memory_space<vmem>>, vector<1x1x32xf32>
    %13 = vector.shape_cast %12 : vector<1x1x32xf32> to vector<1x32xf32>
    %14 = vector.shape_cast %11 : vector<1x32xf32> to vector<1x1x32xf32>
    tpu.vector_store %arg6[%c0_11, %c0_12, %c0_13], %14 {strides = array<i32>} : memref<1x4x32xf32, #tpu.memory_space<vmem>>, vector<1x1x32xf32>,
    %15 = arith.mulf %2, %2 : vector<16x32xf32>
    %cst_14 = arith.constant dense<0.000000e+00> : vector<32xf32>
    %16 = vector.multi_reduction <add>, %15, %cst_14 [0] : vector<16x32xf32> to vector<32xf32>
    %17 = vector.shape_cast %16 : vector<32xf32> to vector<1x32xf32>
    %c0_15 = arith.constant 0 : index
    %c1 = arith.constant 1 : index
    %c0_16 = arith.constant 0 : index
    %18 = vector.load %arg6[%c0_15, %c1, %c0_16] : memref<1x4x32xf32, #tpu.memory_space<vmem>>, vector<1x1x32xf32>
    %19 = vector.shape_cast %18 : vector<1x1x32xf32> to vector<1x32xf32>
    %20 = vector.shape_cast %17 : vector<1x32xf32> to vector<1x1x32xf32>
    tpu.vector_store %arg6[%c0_15, %c1, %c0_16], %20 {strides = array<i32>} : memref<1x4x32xf32, #tpu.memory_space<vmem>>, vector<1x1x32xf32>,
    %cst_17 = arith.constant dense<0.000000e+00> : vector<32xf32>
    %21 = vector.multi_reduction <add>, %5, %cst_17 [0] : vector<16x32xf32> to vector<32xf32>
    %22 = vector.shape_cast %21 : vector<32xf32> to vector<1x32xf32>
    %c0_18 = arith.constant 0 : index
    %c2 = arith.constant 2 : index
    %c0_19 = arith.constant 0 : index
    %23 = vector.load %arg6[%c0_18, %c2, %c0_19] : memref<1x4x32xf32, #tpu.memory_space<vmem>>, vector<1x1x32xf32>
    %24 = vector.shape_cast %23 : vector<1x1x32xf32> to vector<1x32xf32>
    %25 = vector.shape_cast %22 : vector<1x32xf32> to vector<1x1x32xf32>
    tpu.vector_store %arg6[%c0_18, %c2, %c0_19], %25 {strides = array<i32>} : memref<1x4x32xf32, #tpu.memory_space<vmem>>, vector<1x1x32xf32>,
    %26 = arith.mulf %5, %5 : vector<16x32xf32>
    %cst_20 = arith.constant dense<0.000000e+00> : vector<32xf32>
    %27 = vector.multi_reduction <add>, %26, %cst_20 [0] : vector<16x32xf32> to vector<32xf32>
    %28 = vector.shape_cast %27 : vector<32xf32> to vector<1x32xf32>
    %c0_21 = arith.constant 0 : index
    %c3 = arith.constant 3 : index
    %c0_22 = arith.constant 0 : index
    %29 = vector.load %arg6[%c0_21, %c3, %c0_22] : memref<1x4x32xf32, #tpu.memory_space<vmem>>, vector<1x1x32xf32>
    %30 = vector.shape_cast %29 : vector<1x1x32xf32> to vector<1x32xf32>
    %31 = vector.shape_cast %28 : vector<1x32xf32> to vector<1x1x32xf32>
    tpu.vector_store %arg6[%c0_21, %c3, %c0_22], %31 {strides = array<i32>} : memref<1x4x32xf32, #tpu.memory_space<vmem>>, vector<1x1x32xf32>,
    return
  }
  func.func @transform_0(%arg0: i32) -> (i32, i32) {
    %c0_i32 = arith.constant 0 : i32
    %c0_i32_0 = arith.constant 0 : i32
    return %arg0, %c0_i32 : i32, i32
  }
  func.func @transform_1(%arg0: i32) -> (i32, i32) {
    %c0_i32 = arith.constant 0 : i32
    %c0_i32_0 = arith.constant 0 : i32
    %c0_i32_1 = arith.constant 0 : i32
    return %c0_i32, %c0_i32_0 : i32, i32
  }
  func.func @transform_2(%arg0: i32) -> (i32, i32) {
    %c0_i32 = arith.constant 0 : i32
    %c0_i32_0 = arith.constant 0 : i32
    %c0_i32_1 = arith.constant 0 : i32
    return %c0_i32, %c0_i32_0 : i32, i32
  }
  func.func @transform_3(%arg0: i32) -> (i32, i32) {
    %c0_i32 = arith.constant 0 : i32
    %c0_i32_0 = arith.constant 0 : i32
    return %arg0, %c0_i32 : i32, i32
  }
  func.func @transform_4(%arg0: i32) -> (i32, i32) {
    %c0_i32 = arith.constant 0 : i32
    %c0_i32_0 = arith.constant 0 : i32
    return %arg0, %c0_i32 : i32, i32
  }
  func.func @transform_5(%arg0: i32) -> (i32, i32, i32) {
    %c0_i32 = arith.constant 0 : i32
    %c0_i32_0 = arith.constant 0 : i32
    %c0_i32_1 = arith.constant 0 : i32
    return %arg0, %c0_i32, %c0_i32_0 : i32, i32, i32
  }
}

module attributes {stable_mosaic.version = 11 : i64} {
  func.func @_mhsa_kernel(%arg0: i32, %arg1: memref<1x16x32xbf16, #tpu.memory_space<vmem>>, %arg2: memref<1x32xf32, #tpu.memory_space<vmem>>, %arg3: memref<1x32xf32, #tpu.memory_space<vmem>>, %arg4: memref<32x96xbf16, #tpu.memory_space<vmem>>, %arg5: memref<1x96xf32, #tpu.memory_space<vmem>>, %arg6: memref<16x32xbf16, #tpu.memory_space<vmem>>, %arg7: memref<1x16x32xbf16, #tpu.memory_space<vmem>>, %arg8: memref<1x2x32xf32, #tpu.memory_space<vmem>>) attributes {dimension_semantics = [#tpu.dimension_semantics<parallel>], iteration_bounds = array<i64: 2>, scalar_prefetch = 0 : i64, scratch_operands = 0 : i64, tpu.core_type = #tpu.core_type<tc>, window_params = [{transform_indices = @transform_0, window_bounds = array<i64: 1, 16, 32>}, {pipeline_mode = #tpu.pipeline_mode<synchronous>, transform_indices = @transform_1, window_bounds = array<i64: 1, 32>}, {pipeline_mode = #tpu.pipeline_mode<synchronous>, transform_indices = @transform_2, window_bounds = array<i64: 1, 32>}, {pipeline_mode = #tpu.pipeline_mode<synchronous>, transform_indices = @transform_3, window_bounds = array<i64: 32, 96>}, {pipeline_mode = #tpu.pipeline_mode<synchronous>, transform_indices = @transform_4, window_bounds = array<i64: 1, 96>}, {pipeline_mode = #tpu.pipeline_mode<synchronous>, transform_indices = @transform_5, window_bounds = array<i64: 16, 32>}, {transform_indices = @transform_6, window_bounds = array<i64: 1, 16, 32>}, {transform_indices = @transform_7, window_bounds = array<i64: 1, 2, 32>}]} {
    %c0 = arith.constant 0 : index
    %c0_0 = arith.constant 0 : index
    %c0_1 = arith.constant 0 : index
    %0 = vector.load %arg1[%c0, %c0_0, %c0_1] : memref<1x16x32xbf16, #tpu.memory_space<vmem>>, vector<1x16x32xbf16>
    %1 = vector.shape_cast %0 : vector<1x16x32xbf16> to vector<16x32xbf16>
    %2 = arith.extf %1 : vector<16x32xbf16> to vector<16x32xf32>
    %c0_2 = arith.constant 0 : index
    %c0_3 = arith.constant 0 : index
    %3 = vector.load %arg2[%c0_2, %c0_3] : memref<1x32xf32, #tpu.memory_space<vmem>>, vector<1x32xf32>
    %4 = vector.broadcast %3 : vector<1x32xf32> to vector<16x32xf32>
    %5 = arith.mulf %2, %4 : vector<16x32xf32>
    %c0_4 = arith.constant 0 : index
    %c0_5 = arith.constant 0 : index
    %6 = vector.load %arg3[%c0_4, %c0_5] : memref<1x32xf32, #tpu.memory_space<vmem>>, vector<1x32xf32>
    %7 = vector.broadcast %6 : vector<1x32xf32> to vector<16x32xf32>
    %8 = arith.addf %5, %7 : vector<16x32xf32>
    %cst = arith.constant 0.000000e+00 : f32
    %9 = vector.broadcast %cst : f32 to vector<16x32xf32>
    %10 = arith.maximumf %8, %9 : vector<16x32xf32>
    %11 = arith.truncf %10 : vector<16x32xf32> to vector<16x32xbf16>
    %c0_6 = arith.constant 0 : index
    %c0_7 = arith.constant 0 : index
    %12 = vector.load %arg4[%c0_6, %c0_7] : memref<32x96xbf16, #tpu.memory_space<vmem>>, vector<32x96xbf16>
    %cst_8 = arith.constant dense<0.000000e+00> : vector<16x96xf32>
    %13 = tpu.matmul %11, %12, %cst_8 {dimension_numbers = #tpu.dot_dimension_numbers<[1], [0], [0], [1], [0, 0, 1, 1], [], []>} : vector<16x32xbf16>, vector<32x96xbf16>, vector<16x96xf32> -> vector<16x96xf32>
    %c0_9 = arith.constant 0 : index
    %c0_10 = arith.constant 0 : index
    %14 = vector.load %arg5[%c0_9, %c0_10] : memref<1x96xf32, #tpu.memory_space<vmem>>, vector<1x96xf32>
    %15 = vector.broadcast %14 : vector<1x96xf32> to vector<16x96xf32>
    %16 = arith.addf %13, %15 : vector<16x96xf32>
    %17 = arith.truncf %16 : vector<16x96xf32> to vector<16x96xbf16>
    %c0_11 = arith.constant 0 : index
    %c0_12 = arith.constant 0 : index
    %18 = vector.load %arg6[%c0_11, %c0_12] : memref<16x32xbf16, #tpu.memory_space<vmem>>, vector<16x32xbf16>
    %19 = vector.extract_strided_slice %17 {offsets = [0, 0], sizes = [16, 4], strides = [1, 1]} : vector<16x96xbf16> to vector<16x4xbf16>
    %20 = vector.extract_strided_slice %17 {offsets = [0, 32], sizes = [16, 4], strides = [1, 1]} : vector<16x96xbf16> to vector<16x4xbf16>
    %21 = vector.extract_strided_slice %17 {offsets = [0, 64], sizes = [16, 4], strides = [1, 1]} : vector<16x96xbf16> to vector<16x4xbf16>
    %cst_13 = arith.constant dense<0.000000e+00> : vector<16x16xf32>
    %22 = tpu.matmul %19, %20, %cst_13 {dimension_numbers = #tpu.dot_dimension_numbers<[1], [1], [0], [0], [0, 0, 1, 0], [], []>} : vector<16x4xbf16>, vector<16x4xbf16>, vector<16x16xf32> -> vector<16x16xf32>
    %23 = vector.extract_strided_slice %18 {offsets = [0, 0], sizes = [16, 4], strides = [1, 1]} : vector<16x32xbf16> to vector<16x4xbf16>
    %cst_14 = arith.constant dense<0.000000e+00> : vector<16x16xf32>
    %24 = tpu.matmul %23, %19, %cst_14 {dimension_numbers = #tpu.dot_dimension_numbers<[1], [1], [0], [0], [0, 0, 1, 0], [], []>} : vector<16x4xbf16>, vector<16x4xbf16>, vector<16x16xf32> -> vector<16x16xf32>
    %25 = arith.addf %22, %24 : vector<16x16xf32>
    %cst_15 = arith.constant dense<0xFF800000> : vector<16xf32>
    %26 = vector.multi_reduction <maximumf>, %25, %cst_15 [1] : vector<16x16xf32> to vector<16xf32>
    %27 = vector.shape_cast %26 : vector<16xf32> to vector<16x1xf32>
    %28 = vector.broadcast %27 : vector<16x1xf32> to vector<16x16xf32>
    %29 = arith.subf %25, %28 : vector<16x16xf32>
    %30 = math.exp %29 : vector<16x16xf32>
    %cst_16 = arith.constant dense<0.000000e+00> : vector<16xf32>
    %31 = vector.multi_reduction <add>, %30, %cst_16 [1] : vector<16x16xf32> to vector<16xf32>
    %32 = vector.shape_cast %31 : vector<16xf32> to vector<16x1xf32>
    %33 = tpu.reciprocal %32 {approx = true} : vector<16x1xf32> -> vector<16x1xf32>
    %34 = vector.broadcast %33 : vector<16x1xf32> to vector<16x16xf32>
    %35 = arith.mulf %30, %34 : vector<16x16xf32>
    %36 = arith.truncf %35 : vector<16x16xf32> to vector<16x16xbf16>
    %cst_17 = arith.constant dense<0.000000e+00> : vector<16x4xf32>
    %37 = tpu.matmul %36, %21, %cst_17 {dimension_numbers = #tpu.dot_dimension_numbers<[1], [0], [0], [1], [0, 0, 1, 1], [], []>} : vector<16x16xbf16>, vector<16x4xbf16>, vector<16x4xf32> -> vector<16x4xf32>
    %38 = arith.truncf %37 : vector<16x4xf32> to vector<16x4xbf16>
    %c0_18 = arith.constant 0 : index
    %c0_19 = arith.constant 0 : index
    %c0_20 = arith.constant 0 : index
    %39 = vector.load %arg7[%c0_18, %c0_19, %c0_20] : memref<1x16x32xbf16, #tpu.memory_space<vmem>>, vector<1x16x4xbf16>
    %40 = vector.shape_cast %39 : vector<1x16x4xbf16> to vector<16x4xbf16>
    %41 = vector.shape_cast %38 : vector<16x4xbf16> to vector<1x16x4xbf16>
    tpu.vector_store %arg7[%c0_18, %c0_19, %c0_20], %41 {strides = array<i32>} : memref<1x16x32xbf16, #tpu.memory_space<vmem>>, vector<1x16x4xbf16>,
    %cst_21 = arith.constant dense<0.000000e+00> : vector<4xf32>
    %42 = vector.multi_reduction <add>, %37, %cst_21 [0] : vector<16x4xf32> to vector<4xf32>
    %43 = vector.shape_cast %42 : vector<4xf32> to vector<1x4xf32>
    %c0_22 = arith.constant 0 : index
    %c0_23 = arith.constant 0 : index
    %c0_24 = arith.constant 0 : index
    %44 = vector.load %arg8[%c0_22, %c0_23, %c0_24] : memref<1x2x32xf32, #tpu.memory_space<vmem>>, vector<1x1x4xf32>
    %45 = vector.shape_cast %44 : vector<1x1x4xf32> to vector<1x4xf32>
    %46 = vector.shape_cast %43 : vector<1x4xf32> to vector<1x1x4xf32>
    tpu.vector_store %arg8[%c0_22, %c0_23, %c0_24], %46 {strides = array<i32>} : memref<1x2x32xf32, #tpu.memory_space<vmem>>, vector<1x1x4xf32>,
    %47 = arith.mulf %37, %37 : vector<16x4xf32>
    %cst_25 = arith.constant dense<0.000000e+00> : vector<4xf32>
    %48 = vector.multi_reduction <add>, %47, %cst_25 [0] : vector<16x4xf32> to vector<4xf32>
    %49 = vector.shape_cast %48 : vector<4xf32> to vector<1x4xf32>
    %c0_26 = arith.constant 0 : index
    %c1 = arith.constant 1 : index
    %c0_27 = arith.constant 0 : index
    %50 = vector.load %arg8[%c0_26, %c1, %c0_27] : memref<1x2x32xf32, #tpu.memory_space<vmem>>, vector<1x1x4xf32>
    %51 = vector.shape_cast %50 : vector<1x1x4xf32> to vector<1x4xf32>
    %52 = vector.shape_cast %49 : vector<1x4xf32> to vector<1x1x4xf32>
    tpu.vector_store %arg8[%c0_26, %c1, %c0_27], %52 {strides = array<i32>} : memref<1x2x32xf32, #tpu.memory_space<vmem>>, vector<1x1x4xf32>,
    %53 = vector.extract_strided_slice %17 {offsets = [0, 4], sizes = [16, 4], strides = [1, 1]} : vector<16x96xbf16> to vector<16x4xbf16>
    %54 = vector.extract_strided_slice %17 {offsets = [0, 36], sizes = [16, 4], strides = [1, 1]} : vector<16x96xbf16> to vector<16x4xbf16>
    %55 = vector.extract_strided_slice %17 {offsets = [0, 68], sizes = [16, 4], strides = [1, 1]} : vector<16x96xbf16> to vector<16x4xbf16>
    %cst_28 = arith.constant dense<0.000000e+00> : vector<16x16xf32>
    %56 = tpu.matmul %53, %54, %cst_28 {dimension_numbers = #tpu.dot_dimension_numbers<[1], [1], [0], [0], [0, 0, 1, 0], [], []>} : vector<16x4xbf16>, vector<16x4xbf16>, vector<16x16xf32> -> vector<16x16xf32>
    %57 = vector.extract_strided_slice %18 {offsets = [0, 4], sizes = [16, 4], strides = [1, 1]} : vector<16x32xbf16> to vector<16x4xbf16>
    %cst_29 = arith.constant dense<0.000000e+00> : vector<16x16xf32>
    %58 = tpu.matmul %57, %53, %cst_29 {dimension_numbers = #tpu.dot_dimension_numbers<[1], [1], [0], [0], [0, 0, 1, 0], [], []>} : vector<16x4xbf16>, vector<16x4xbf16>, vector<16x16xf32> -> vector<16x16xf32>
    %59 = arith.addf %56, %58 : vector<16x16xf32>
    %cst_30 = arith.constant dense<0xFF800000> : vector<16xf32>
    %60 = vector.multi_reduction <maximumf>, %59, %cst_30 [1] : vector<16x16xf32> to vector<16xf32>
    %61 = vector.shape_cast %60 : vector<16xf32> to vector<16x1xf32>
    %62 = vector.broadcast %61 : vector<16x1xf32> to vector<16x16xf32>
    %63 = arith.subf %59, %62 : vector<16x16xf32>
    %64 = math.exp %63 : vector<16x16xf32>
    %cst_31 = arith.constant dense<0.000000e+00> : vector<16xf32>
    %65 = vector.multi_reduction <add>, %64, %cst_31 [1] : vector<16x16xf32> to vector<16xf32>
    %66 = vector.shape_cast %65 : vector<16xf32> to vector<16x1xf32>
    %67 = tpu.reciprocal %66 {approx = true} : vector<16x1xf32> -> vector<16x1xf32>
    %68 = vector.broadcast %67 : vector<16x1xf32> to vector<16x16xf32>
    %69 = arith.mulf %64, %68 : vector<16x16xf32>
    %70 = arith.truncf %69 : vector<16x16xf32> to vector<16x16xbf16>
    %cst_32 = arith.constant dense<0.000000e+00> : vector<16x4xf32>
    %71 = tpu.matmul %70, %55, %cst_32 {dimension_numbers = #tpu.dot_dimension_numbers<[1], [0], [0], [1], [0, 0, 1, 1], [], []>} : vector<16x16xbf16>, vector<16x4xbf16>, vector<16x4xf32> -> vector<16x4xf32>
    %72 = arith.truncf %71 : vector<16x4xf32> to vector<16x4xbf16>
    %c0_33 = arith.constant 0 : index
    %c0_34 = arith.constant 0 : index
    %c4 = arith.constant 4 : index
    %73 = vector.load %arg7[%c0_33, %c0_34, %c4] : memref<1x16x32xbf16, #tpu.memory_space<vmem>>, vector<1x16x4xbf16>
    %74 = vector.shape_cast %73 : vector<1x16x4xbf16> to vector<16x4xbf16>
    %75 = vector.shape_cast %72 : vector<16x4xbf16> to vector<1x16x4xbf16>
    tpu.vector_store %arg7[%c0_33, %c0_34, %c4], %75 {strides = array<i32>} : memref<1x16x32xbf16, #tpu.memory_space<vmem>>, vector<1x16x4xbf16>,
    %cst_35 = arith.constant dense<0.000000e+00> : vector<4xf32>
    %76 = vector.multi_reduction <add>, %71, %cst_35 [0] : vector<16x4xf32> to vector<4xf32>
    %77 = vector.shape_cast %76 : vector<4xf32> to vector<1x4xf32>
    %c0_36 = arith.constant 0 : index
    %c0_37 = arith.constant 0 : index
    %c4_38 = arith.constant 4 : index
    %78 = vector.load %arg8[%c0_36, %c0_37, %c4_38] : memref<1x2x32xf32, #tpu.memory_space<vmem>>, vector<1x1x4xf32>
    %79 = vector.shape_cast %78 : vector<1x1x4xf32> to vector<1x4xf32>
    %80 = vector.shape_cast %77 : vector<1x4xf32> to vector<1x1x4xf32>
    tpu.vector_store %arg8[%c0_36, %c0_37, %c4_38], %80 {strides = array<i32>} : memref<1x2x32xf32, #tpu.memory_space<vmem>>, vector<1x1x4xf32>,
    %81 = arith.mulf %71, %71 : vector<16x4xf32>
    %cst_39 = arith.constant dense<0.000000e+00> : vector<4xf32>
    %82 = vector.multi_reduction <add>, %81, %cst_39 [0] : vector<16x4xf32> to vector<4xf32>
    %83 = vector.shape_cast %82 : vector<4xf32> to vector<1x4xf32>
    %c0_40 = arith.constant 0 : index
    %c1_41 = arith.constant 1 : index
    %c4_42 = arith.constant 4 : index
    %84 = vector.load %arg8[%c0_40, %c1_41, %c4_42] : memref<1x2x32xf32, #tpu.memory_space<vmem>>, vector<1x1x4xf32>
    %85 = vector.shape_cast %84 : vector<1x1x4xf32> to vector<1x4xf32>
    %86 = vector.shape_cast %83 : vector<1x4xf32> to vector<1x1x4xf32>
    tpu.vector_store %arg8[%c0_40, %c1_41, %c4_42], %86 {strides = array<i32>} : memref<1x2x32xf32, #tpu.memory_space<vmem>>, vector<1x1x4xf32>,
    %87 = vector.extract_strided_slice %17 {offsets = [0, 8], sizes = [16, 4], strides = [1, 1]} : vector<16x96xbf16> to vector<16x4xbf16>
    %88 = vector.extract_strided_slice %17 {offsets = [0, 40], sizes = [16, 4], strides = [1, 1]} : vector<16x96xbf16> to vector<16x4xbf16>
    %89 = vector.extract_strided_slice %17 {offsets = [0, 72], sizes = [16, 4], strides = [1, 1]} : vector<16x96xbf16> to vector<16x4xbf16>
    %cst_43 = arith.constant dense<0.000000e+00> : vector<16x16xf32>
    %90 = tpu.matmul %87, %88, %cst_43 {dimension_numbers = #tpu.dot_dimension_numbers<[1], [1], [0], [0], [0, 0, 1, 0], [], []>} : vector<16x4xbf16>, vector<16x4xbf16>, vector<16x16xf32> -> vector<16x16xf32>
    %91 = vector.extract_strided_slice %18 {offsets = [0, 8], sizes = [16, 4], strides = [1, 1]} : vector<16x32xbf16> to vector<16x4xbf16>
    %cst_44 = arith.constant dense<0.000000e+00> : vector<16x16xf32>
    %92 = tpu.matmul %91, %87, %cst_44 {dimension_numbers = #tpu.dot_dimension_numbers<[1], [1], [0], [0], [0, 0, 1, 0], [], []>} : vector<16x4xbf16>, vector<16x4xbf16>, vector<16x16xf32> -> vector<16x16xf32>
    %93 = arith.addf %90, %92 : vector<16x16xf32>
    %cst_45 = arith.constant dense<0xFF800000> : vector<16xf32>
    %94 = vector.multi_reduction <maximumf>, %93, %cst_45 [1] : vector<16x16xf32> to vector<16xf32>
    %95 = vector.shape_cast %94 : vector<16xf32> to vector<16x1xf32>
    %96 = vector.broadcast %95 : vector<16x1xf32> to vector<16x16xf32>
    %97 = arith.subf %93, %96 : vector<16x16xf32>
    %98 = math.exp %97 : vector<16x16xf32>
    %cst_46 = arith.constant dense<0.000000e+00> : vector<16xf32>
    %99 = vector.multi_reduction <add>, %98, %cst_46 [1] : vector<16x16xf32> to vector<16xf32>
    %100 = vector.shape_cast %99 : vector<16xf32> to vector<16x1xf32>
    %101 = tpu.reciprocal %100 {approx = true} : vector<16x1xf32> -> vector<16x1xf32>
    %102 = vector.broadcast %101 : vector<16x1xf32> to vector<16x16xf32>
    %103 = arith.mulf %98, %102 : vector<16x16xf32>
    %104 = arith.truncf %103 : vector<16x16xf32> to vector<16x16xbf16>
    %cst_47 = arith.constant dense<0.000000e+00> : vector<16x4xf32>
    %105 = tpu.matmul %104, %89, %cst_47 {dimension_numbers = #tpu.dot_dimension_numbers<[1], [0], [0], [1], [0, 0, 1, 1], [], []>} : vector<16x16xbf16>, vector<16x4xbf16>, vector<16x4xf32> -> vector<16x4xf32>
    %106 = arith.truncf %105 : vector<16x4xf32> to vector<16x4xbf16>
    %c0_48 = arith.constant 0 : index
    %c0_49 = arith.constant 0 : index
    %c8 = arith.constant 8 : index
    %107 = vector.load %arg7[%c0_48, %c0_49, %c8] : memref<1x16x32xbf16, #tpu.memory_space<vmem>>, vector<1x16x4xbf16>
    %108 = vector.shape_cast %107 : vector<1x16x4xbf16> to vector<16x4xbf16>
    %109 = vector.shape_cast %106 : vector<16x4xbf16> to vector<1x16x4xbf16>
    tpu.vector_store %arg7[%c0_48, %c0_49, %c8], %109 {strides = array<i32>} : memref<1x16x32xbf16, #tpu.memory_space<vmem>>, vector<1x16x4xbf16>,
    %cst_50 = arith.constant dense<0.000000e+00> : vector<4xf32>
    %110 = vector.multi_reduction <add>, %105, %cst_50 [0] : vector<16x4xf32> to vector<4xf32>
    %111 = vector.shape_cast %110 : vector<4xf32> to vector<1x4xf32>
    %c0_51 = arith.constant 0 : index
    %c0_52 = arith.constant 0 : index
    %c8_53 = arith.constant 8 : index
    %112 = vector.load %arg8[%c0_51, %c0_52, %c8_53] : memref<1x2x32xf32, #tpu.memory_space<vmem>>, vector<1x1x4xf32>
    %113 = vector.shape_cast %112 : vector<1x1x4xf32> to vector<1x4xf32>
    %114 = vector.shape_cast %111 : vector<1x4xf32> to vector<1x1x4xf32>
    tpu.vector_store %arg8[%c0_51, %c0_52, %c8_53], %114 {strides = array<i32>} : memref<1x2x32xf32, #tpu.memory_space<vmem>>, vector<1x1x4xf32>,
    %115 = arith.mulf %105, %105 : vector<16x4xf32>
    %cst_54 = arith.constant dense<0.000000e+00> : vector<4xf32>
    %116 = vector.multi_reduction <add>, %115, %cst_54 [0] : vector<16x4xf32> to vector<4xf32>
    %117 = vector.shape_cast %116 : vector<4xf32> to vector<1x4xf32>
    %c0_55 = arith.constant 0 : index
    %c1_56 = arith.constant 1 : index
    %c8_57 = arith.constant 8 : index
    %118 = vector.load %arg8[%c0_55, %c1_56, %c8_57] : memref<1x2x32xf32, #tpu.memory_space<vmem>>, vector<1x1x4xf32>
    %119 = vector.shape_cast %118 : vector<1x1x4xf32> to vector<1x4xf32>
    %120 = vector.shape_cast %117 : vector<1x4xf32> to vector<1x1x4xf32>
    tpu.vector_store %arg8[%c0_55, %c1_56, %c8_57], %120 {strides = array<i32>} : memref<1x2x32xf32, #tpu.memory_space<vmem>>, vector<1x1x4xf32>,
    %121 = vector.extract_strided_slice %17 {offsets = [0, 12], sizes = [16, 4], strides = [1, 1]} : vector<16x96xbf16> to vector<16x4xbf16>
    %122 = vector.extract_strided_slice %17 {offsets = [0, 44], sizes = [16, 4], strides = [1, 1]} : vector<16x96xbf16> to vector<16x4xbf16>
    %123 = vector.extract_strided_slice %17 {offsets = [0, 76], sizes = [16, 4], strides = [1, 1]} : vector<16x96xbf16> to vector<16x4xbf16>
    %cst_58 = arith.constant dense<0.000000e+00> : vector<16x16xf32>
    %124 = tpu.matmul %121, %122, %cst_58 {dimension_numbers = #tpu.dot_dimension_numbers<[1], [1], [0], [0], [0, 0, 1, 0], [], []>} : vector<16x4xbf16>, vector<16x4xbf16>, vector<16x16xf32> -> vector<16x16xf32>
    %125 = vector.extract_strided_slice %18 {offsets = [0, 12], sizes = [16, 4], strides = [1, 1]} : vector<16x32xbf16> to vector<16x4xbf16>
    %cst_59 = arith.constant dense<0.000000e+00> : vector<16x16xf32>
    %126 = tpu.matmul %125, %121, %cst_59 {dimension_numbers = #tpu.dot_dimension_numbers<[1], [1], [0], [0], [0, 0, 1, 0], [], []>} : vector<16x4xbf16>, vector<16x4xbf16>, vector<16x16xf32> -> vector<16x16xf32>
    %127 = arith.addf %124, %126 : vector<16x16xf32>
    %cst_60 = arith.constant dense<0xFF800000> : vector<16xf32>
    %128 = vector.multi_reduction <maximumf>, %127, %cst_60 [1] : vector<16x16xf32> to vector<16xf32>
    %129 = vector.shape_cast %128 : vector<16xf32> to vector<16x1xf32>
    %130 = vector.broadcast %129 : vector<16x1xf32> to vector<16x16xf32>
    %131 = arith.subf %127, %130 : vector<16x16xf32>
    %132 = math.exp %131 : vector<16x16xf32>
    %cst_61 = arith.constant dense<0.000000e+00> : vector<16xf32>
    %133 = vector.multi_reduction <add>, %132, %cst_61 [1] : vector<16x16xf32> to vector<16xf32>
    %134 = vector.shape_cast %133 : vector<16xf32> to vector<16x1xf32>
    %135 = tpu.reciprocal %134 {approx = true} : vector<16x1xf32> -> vector<16x1xf32>
    %136 = vector.broadcast %135 : vector<16x1xf32> to vector<16x16xf32>
    %137 = arith.mulf %132, %136 : vector<16x16xf32>
    %138 = arith.truncf %137 : vector<16x16xf32> to vector<16x16xbf16>
    %cst_62 = arith.constant dense<0.000000e+00> : vector<16x4xf32>
    %139 = tpu.matmul %138, %123, %cst_62 {dimension_numbers = #tpu.dot_dimension_numbers<[1], [0], [0], [1], [0, 0, 1, 1], [], []>} : vector<16x16xbf16>, vector<16x4xbf16>, vector<16x4xf32> -> vector<16x4xf32>
    %140 = arith.truncf %139 : vector<16x4xf32> to vector<16x4xbf16>
    %c0_63 = arith.constant 0 : index
    %c0_64 = arith.constant 0 : index
    %c12 = arith.constant 12 : index
    %141 = vector.load %arg7[%c0_63, %c0_64, %c12] : memref<1x16x32xbf16, #tpu.memory_space<vmem>>, vector<1x16x4xbf16>
    %142 = vector.shape_cast %141 : vector<1x16x4xbf16> to vector<16x4xbf16>
    %143 = vector.shape_cast %140 : vector<16x4xbf16> to vector<1x16x4xbf16>
    tpu.vector_store %arg7[%c0_63, %c0_64, %c12], %143 {strides = array<i32>} : memref<1x16x32xbf16, #tpu.memory_space<vmem>>, vector<1x16x4xbf16>,
    %cst_65 = arith.constant dense<0.000000e+00> : vector<4xf32>
    %144 = vector.multi_reduction <add>, %139, %cst_65 [0] : vector<16x4xf32> to vector<4xf32>
    %145 = vector.shape_cast %144 : vector<4xf32> to vector<1x4xf32>
    %c0_66 = arith.constant 0 : index
    %c0_67 = arith.constant 0 : index
    %c12_68 = arith.constant 12 : index
    %146 = vector.load %arg8[%c0_66, %c0_67, %c12_68] : memref<1x2x32xf32, #tpu.memory_space<vmem>>, vector<1x1x4xf32>
    %147 = vector.shape_cast %146 : vector<1x1x4xf32> to vector<1x4xf32>
    %148 = vector.shape_cast %145 : vector<1x4xf32> to vector<1x1x4xf32>
    tpu.vector_store %arg8[%c0_66, %c0_67, %c12_68], %148 {strides = array<i32>} : memref<1x2x32xf32, #tpu.memory_space<vmem>>, vector<1x1x4xf32>,
    %149 = arith.mulf %139, %139 : vector<16x4xf32>
    %cst_69 = arith.constant dense<0.000000e+00> : vector<4xf32>
    %150 = vector.multi_reduction <add>, %149, %cst_69 [0] : vector<16x4xf32> to vector<4xf32>
    %151 = vector.shape_cast %150 : vector<4xf32> to vector<1x4xf32>
    %c0_70 = arith.constant 0 : index
    %c1_71 = arith.constant 1 : index
    %c12_72 = arith.constant 12 : index
    %152 = vector.load %arg8[%c0_70, %c1_71, %c12_72] : memref<1x2x32xf32, #tpu.memory_space<vmem>>, vector<1x1x4xf32>
    %153 = vector.shape_cast %152 : vector<1x1x4xf32> to vector<1x4xf32>
    %154 = vector.shape_cast %151 : vector<1x4xf32> to vector<1x1x4xf32>
    tpu.vector_store %arg8[%c0_70, %c1_71, %c12_72], %154 {strides = array<i32>} : memref<1x2x32xf32, #tpu.memory_space<vmem>>, vector<1x1x4xf32>,
    %155 = vector.extract_strided_slice %17 {offsets = [0, 16], sizes = [16, 4], strides = [1, 1]} : vector<16x96xbf16> to vector<16x4xbf16>
    %156 = vector.extract_strided_slice %17 {offsets = [0, 48], sizes = [16, 4], strides = [1, 1]} : vector<16x96xbf16> to vector<16x4xbf16>
    %157 = vector.extract_strided_slice %17 {offsets = [0, 80], sizes = [16, 4], strides = [1, 1]} : vector<16x96xbf16> to vector<16x4xbf16>
    %cst_73 = arith.constant dense<0.000000e+00> : vector<16x16xf32>
    %158 = tpu.matmul %155, %156, %cst_73 {dimension_numbers = #tpu.dot_dimension_numbers<[1], [1], [0], [0], [0, 0, 1, 0], [], []>} : vector<16x4xbf16>, vector<16x4xbf16>, vector<16x16xf32> -> vector<16x16xf32>
    %159 = vector.extract_strided_slice %18 {offsets = [0, 16], sizes = [16, 4], strides = [1, 1]} : vector<16x32xbf16> to vector<16x4xbf16>
    %cst_74 = arith.constant dense<0.000000e+00> : vector<16x16xf32>
    %160 = tpu.matmul %159, %155, %cst_74 {dimension_numbers = #tpu.dot_dimension_numbers<[1], [1], [0], [0], [0, 0, 1, 0], [], []>} : vector<16x4xbf16>, vector<16x4xbf16>, vector<16x16xf32> -> vector<16x16xf32>
    %161 = arith.addf %158, %160 : vector<16x16xf32>
    %cst_75 = arith.constant dense<0xFF800000> : vector<16xf32>
    %162 = vector.multi_reduction <maximumf>, %161, %cst_75 [1] : vector<16x16xf32> to vector<16xf32>
    %163 = vector.shape_cast %162 : vector<16xf32> to vector<16x1xf32>
    %164 = vector.broadcast %163 : vector<16x1xf32> to vector<16x16xf32>
    %165 = arith.subf %161, %164 : vector<16x16xf32>
    %166 = math.exp %165 : vector<16x16xf32>
    %cst_76 = arith.constant dense<0.000000e+00> : vector<16xf32>
    %167 = vector.multi_reduction <add>, %166, %cst_76 [1] : vector<16x16xf32> to vector<16xf32>
    %168 = vector.shape_cast %167 : vector<16xf32> to vector<16x1xf32>
    %169 = tpu.reciprocal %168 {approx = true} : vector<16x1xf32> -> vector<16x1xf32>
    %170 = vector.broadcast %169 : vector<16x1xf32> to vector<16x16xf32>
    %171 = arith.mulf %166, %170 : vector<16x16xf32>
    %172 = arith.truncf %171 : vector<16x16xf32> to vector<16x16xbf16>
    %cst_77 = arith.constant dense<0.000000e+00> : vector<16x4xf32>
    %173 = tpu.matmul %172, %157, %cst_77 {dimension_numbers = #tpu.dot_dimension_numbers<[1], [0], [0], [1], [0, 0, 1, 1], [], []>} : vector<16x16xbf16>, vector<16x4xbf16>, vector<16x4xf32> -> vector<16x4xf32>
    %174 = arith.truncf %173 : vector<16x4xf32> to vector<16x4xbf16>
    %c0_78 = arith.constant 0 : index
    %c0_79 = arith.constant 0 : index
    %c16 = arith.constant 16 : index
    %175 = vector.load %arg7[%c0_78, %c0_79, %c16] : memref<1x16x32xbf16, #tpu.memory_space<vmem>>, vector<1x16x4xbf16>
    %176 = vector.shape_cast %175 : vector<1x16x4xbf16> to vector<16x4xbf16>
    %177 = vector.shape_cast %174 : vector<16x4xbf16> to vector<1x16x4xbf16>
    tpu.vector_store %arg7[%c0_78, %c0_79, %c16], %177 {strides = array<i32>} : memref<1x16x32xbf16, #tpu.memory_space<vmem>>, vector<1x16x4xbf16>,
    %cst_80 = arith.constant dense<0.000000e+00> : vector<4xf32>
    %178 = vector.multi_reduction <add>, %173, %cst_80 [0] : vector<16x4xf32> to vector<4xf32>
    %179 = vector.shape_cast %178 : vector<4xf32> to vector<1x4xf32>
    %c0_81 = arith.constant 0 : index
    %c0_82 = arith.constant 0 : index
    %c16_83 = arith.constant 16 : index
    %180 = vector.load %arg8[%c0_81, %c0_82, %c16_83] : memref<1x2x32xf32, #tpu.memory_space<vmem>>, vector<1x1x4xf32>
    %181 = vector.shape_cast %180 : vector<1x1x4xf32> to vector<1x4xf32>
    %182 = vector.shape_cast %179 : vector<1x4xf32> to vector<1x1x4xf32>
    tpu.vector_store %arg8[%c0_81, %c0_82, %c16_83], %182 {strides = array<i32>} : memref<1x2x32xf32, #tpu.memory_space<vmem>>, vector<1x1x4xf32>,
    %183 = arith.mulf %173, %173 : vector<16x4xf32>
    %cst_84 = arith.constant dense<0.000000e+00> : vector<4xf32>
    %184 = vector.multi_reduction <add>, %183, %cst_84 [0] : vector<16x4xf32> to vector<4xf32>
    %185 = vector.shape_cast %184 : vector<4xf32> to vector<1x4xf32>
    %c0_85 = arith.constant 0 : index
    %c1_86 = arith.constant 1 : index
    %c16_87 = arith.constant 16 : index
    %186 = vector.load %arg8[%c0_85, %c1_86, %c16_87] : memref<1x2x32xf32, #tpu.memory_space<vmem>>, vector<1x1x4xf32>
    %187 = vector.shape_cast %186 : vector<1x1x4xf32> to vector<1x4xf32>
    %188 = vector.shape_cast %185 : vector<1x4xf32> to vector<1x1x4xf32>
    tpu.vector_store %arg8[%c0_85, %c1_86, %c16_87], %188 {strides = array<i32>} : memref<1x2x32xf32, #tpu.memory_space<vmem>>, vector<1x1x4xf32>,
    %189 = vector.extract_strided_slice %17 {offsets = [0, 20], sizes = [16, 4], strides = [1, 1]} : vector<16x96xbf16> to vector<16x4xbf16>
    %190 = vector.extract_strided_slice %17 {offsets = [0, 52], sizes = [16, 4], strides = [1, 1]} : vector<16x96xbf16> to vector<16x4xbf16>
    %191 = vector.extract_strided_slice %17 {offsets = [0, 84], sizes = [16, 4], strides = [1, 1]} : vector<16x96xbf16> to vector<16x4xbf16>
    %cst_88 = arith.constant dense<0.000000e+00> : vector<16x16xf32>
    %192 = tpu.matmul %189, %190, %cst_88 {dimension_numbers = #tpu.dot_dimension_numbers<[1], [1], [0], [0], [0, 0, 1, 0], [], []>} : vector<16x4xbf16>, vector<16x4xbf16>, vector<16x16xf32> -> vector<16x16xf32>
    %193 = vector.extract_strided_slice %18 {offsets = [0, 20], sizes = [16, 4], strides = [1, 1]} : vector<16x32xbf16> to vector<16x4xbf16>
    %cst_89 = arith.constant dense<0.000000e+00> : vector<16x16xf32>
    %194 = tpu.matmul %193, %189, %cst_89 {dimension_numbers = #tpu.dot_dimension_numbers<[1], [1], [0], [0], [0, 0, 1, 0], [], []>} : vector<16x4xbf16>, vector<16x4xbf16>, vector<16x16xf32> -> vector<16x16xf32>
    %195 = arith.addf %192, %194 : vector<16x16xf32>
    %cst_90 = arith.constant dense<0xFF800000> : vector<16xf32>
    %196 = vector.multi_reduction <maximumf>, %195, %cst_90 [1] : vector<16x16xf32> to vector<16xf32>
    %197 = vector.shape_cast %196 : vector<16xf32> to vector<16x1xf32>
    %198 = vector.broadcast %197 : vector<16x1xf32> to vector<16x16xf32>
    %199 = arith.subf %195, %198 : vector<16x16xf32>
    %200 = math.exp %199 : vector<16x16xf32>
    %cst_91 = arith.constant dense<0.000000e+00> : vector<16xf32>
    %201 = vector.multi_reduction <add>, %200, %cst_91 [1] : vector<16x16xf32> to vector<16xf32>
    %202 = vector.shape_cast %201 : vector<16xf32> to vector<16x1xf32>
    %203 = tpu.reciprocal %202 {approx = true} : vector<16x1xf32> -> vector<16x1xf32>
    %204 = vector.broadcast %203 : vector<16x1xf32> to vector<16x16xf32>
    %205 = arith.mulf %200, %204 : vector<16x16xf32>
    %206 = arith.truncf %205 : vector<16x16xf32> to vector<16x16xbf16>
    %cst_92 = arith.constant dense<0.000000e+00> : vector<16x4xf32>
    %207 = tpu.matmul %206, %191, %cst_92 {dimension_numbers = #tpu.dot_dimension_numbers<[1], [0], [0], [1], [0, 0, 1, 1], [], []>} : vector<16x16xbf16>, vector<16x4xbf16>, vector<16x4xf32> -> vector<16x4xf32>
    %208 = arith.truncf %207 : vector<16x4xf32> to vector<16x4xbf16>
    %c0_93 = arith.constant 0 : index
    %c0_94 = arith.constant 0 : index
    %c20 = arith.constant 20 : index
    %209 = vector.load %arg7[%c0_93, %c0_94, %c20] : memref<1x16x32xbf16, #tpu.memory_space<vmem>>, vector<1x16x4xbf16>
    %210 = vector.shape_cast %209 : vector<1x16x4xbf16> to vector<16x4xbf16>
    %211 = vector.shape_cast %208 : vector<16x4xbf16> to vector<1x16x4xbf16>
    tpu.vector_store %arg7[%c0_93, %c0_94, %c20], %211 {strides = array<i32>} : memref<1x16x32xbf16, #tpu.memory_space<vmem>>, vector<1x16x4xbf16>,
    %cst_95 = arith.constant dense<0.000000e+00> : vector<4xf32>
    %212 = vector.multi_reduction <add>, %207, %cst_95 [0] : vector<16x4xf32> to vector<4xf32>
    %213 = vector.shape_cast %212 : vector<4xf32> to vector<1x4xf32>
    %c0_96 = arith.constant 0 : index
    %c0_97 = arith.constant 0 : index
    %c20_98 = arith.constant 20 : index
    %214 = vector.load %arg8[%c0_96, %c0_97, %c20_98] : memref<1x2x32xf32, #tpu.memory_space<vmem>>, vector<1x1x4xf32>
    %215 = vector.shape_cast %214 : vector<1x1x4xf32> to vector<1x4xf32>
    %216 = vector.shape_cast %213 : vector<1x4xf32> to vector<1x1x4xf32>
    tpu.vector_store %arg8[%c0_96, %c0_97, %c20_98], %216 {strides = array<i32>} : memref<1x2x32xf32, #tpu.memory_space<vmem>>, vector<1x1x4xf32>,
    %217 = arith.mulf %207, %207 : vector<16x4xf32>
    %cst_99 = arith.constant dense<0.000000e+00> : vector<4xf32>
    %218 = vector.multi_reduction <add>, %217, %cst_99 [0] : vector<16x4xf32> to vector<4xf32>
    %219 = vector.shape_cast %218 : vector<4xf32> to vector<1x4xf32>
    %c0_100 = arith.constant 0 : index
    %c1_101 = arith.constant 1 : index
    %c20_102 = arith.constant 20 : index
    %220 = vector.load %arg8[%c0_100, %c1_101, %c20_102] : memref<1x2x32xf32, #tpu.memory_space<vmem>>, vector<1x1x4xf32>
    %221 = vector.shape_cast %220 : vector<1x1x4xf32> to vector<1x4xf32>
    %222 = vector.shape_cast %219 : vector<1x4xf32> to vector<1x1x4xf32>
    tpu.vector_store %arg8[%c0_100, %c1_101, %c20_102], %222 {strides = array<i32>} : memref<1x2x32xf32, #tpu.memory_space<vmem>>, vector<1x1x4xf32>,
    %223 = vector.extract_strided_slice %17 {offsets = [0, 24], sizes = [16, 4], strides = [1, 1]} : vector<16x96xbf16> to vector<16x4xbf16>
    %224 = vector.extract_strided_slice %17 {offsets = [0, 56], sizes = [16, 4], strides = [1, 1]} : vector<16x96xbf16> to vector<16x4xbf16>
    %225 = vector.extract_strided_slice %17 {offsets = [0, 88], sizes = [16, 4], strides = [1, 1]} : vector<16x96xbf16> to vector<16x4xbf16>
    %cst_103 = arith.constant dense<0.000000e+00> : vector<16x16xf32>
    %226 = tpu.matmul %223, %224, %cst_103 {dimension_numbers = #tpu.dot_dimension_numbers<[1], [1], [0], [0], [0, 0, 1, 0], [], []>} : vector<16x4xbf16>, vector<16x4xbf16>, vector<16x16xf32> -> vector<16x16xf32>
    %227 = vector.extract_strided_slice %18 {offsets = [0, 24], sizes = [16, 4], strides = [1, 1]} : vector<16x32xbf16> to vector<16x4xbf16>
    %cst_104 = arith.constant dense<0.000000e+00> : vector<16x16xf32>
    %228 = tpu.matmul %227, %223, %cst_104 {dimension_numbers = #tpu.dot_dimension_numbers<[1], [1], [0], [0], [0, 0, 1, 0], [], []>} : vector<16x4xbf16>, vector<16x4xbf16>, vector<16x16xf32> -> vector<16x16xf32>
    %229 = arith.addf %226, %228 : vector<16x16xf32>
    %cst_105 = arith.constant dense<0xFF800000> : vector<16xf32>
    %230 = vector.multi_reduction <maximumf>, %229, %cst_105 [1] : vector<16x16xf32> to vector<16xf32>
    %231 = vector.shape_cast %230 : vector<16xf32> to vector<16x1xf32>
    %232 = vector.broadcast %231 : vector<16x1xf32> to vector<16x16xf32>
    %233 = arith.subf %229, %232 : vector<16x16xf32>
    %234 = math.exp %233 : vector<16x16xf32>
    %cst_106 = arith.constant dense<0.000000e+00> : vector<16xf32>
    %235 = vector.multi_reduction <add>, %234, %cst_106 [1] : vector<16x16xf32> to vector<16xf32>
    %236 = vector.shape_cast %235 : vector<16xf32> to vector<16x1xf32>
    %237 = tpu.reciprocal %236 {approx = true} : vector<16x1xf32> -> vector<16x1xf32>
    %238 = vector.broadcast %237 : vector<16x1xf32> to vector<16x16xf32>
    %239 = arith.mulf %234, %238 : vector<16x16xf32>
    %240 = arith.truncf %239 : vector<16x16xf32> to vector<16x16xbf16>
    %cst_107 = arith.constant dense<0.000000e+00> : vector<16x4xf32>
    %241 = tpu.matmul %240, %225, %cst_107 {dimension_numbers = #tpu.dot_dimension_numbers<[1], [0], [0], [1], [0, 0, 1, 1], [], []>} : vector<16x16xbf16>, vector<16x4xbf16>, vector<16x4xf32> -> vector<16x4xf32>
    %242 = arith.truncf %241 : vector<16x4xf32> to vector<16x4xbf16>
    %c0_108 = arith.constant 0 : index
    %c0_109 = arith.constant 0 : index
    %c24 = arith.constant 24 : index
    %243 = vector.load %arg7[%c0_108, %c0_109, %c24] : memref<1x16x32xbf16, #tpu.memory_space<vmem>>, vector<1x16x4xbf16>
    %244 = vector.shape_cast %243 : vector<1x16x4xbf16> to vector<16x4xbf16>
    %245 = vector.shape_cast %242 : vector<16x4xbf16> to vector<1x16x4xbf16>
    tpu.vector_store %arg7[%c0_108, %c0_109, %c24], %245 {strides = array<i32>} : memref<1x16x32xbf16, #tpu.memory_space<vmem>>, vector<1x16x4xbf16>,
    %cst_110 = arith.constant dense<0.000000e+00> : vector<4xf32>
    %246 = vector.multi_reduction <add>, %241, %cst_110 [0] : vector<16x4xf32> to vector<4xf32>
    %247 = vector.shape_cast %246 : vector<4xf32> to vector<1x4xf32>
    %c0_111 = arith.constant 0 : index
    %c0_112 = arith.constant 0 : index
    %c24_113 = arith.constant 24 : index
    %248 = vector.load %arg8[%c0_111, %c0_112, %c24_113] : memref<1x2x32xf32, #tpu.memory_space<vmem>>, vector<1x1x4xf32>
    %249 = vector.shape_cast %248 : vector<1x1x4xf32> to vector<1x4xf32>
    %250 = vector.shape_cast %247 : vector<1x4xf32> to vector<1x1x4xf32>
    tpu.vector_store %arg8[%c0_111, %c0_112, %c24_113], %250 {strides = array<i32>} : memref<1x2x32xf32, #tpu.memory_space<vmem>>, vector<1x1x4xf32>,
    %251 = arith.mulf %241, %241 : vector<16x4xf32>
    %cst_114 = arith.constant dense<0.000000e+00> : vector<4xf32>
    %252 = vector.multi_reduction <add>, %251, %cst_114 [0] : vector<16x4xf32> to vector<4xf32>
    %253 = vector.shape_cast %252 : vector<4xf32> to vector<1x4xf32>
    %c0_115 = arith.constant 0 : index
    %c1_116 = arith.constant 1 : index
    %c24_117 = arith.constant 24 : index
    %254 = vector.load %arg8[%c0_115, %c1_116, %c24_117] : memref<1x2x32xf32, #tpu.memory_space<vmem>>, vector<1x1x4xf32>
    %255 = vector.shape_cast %254 : vector<1x1x4xf32> to vector<1x4xf32>
    %256 = vector.shape_cast %253 : vector<1x4xf32> to vector<1x1x4xf32>
    tpu.vector_store %arg8[%c0_115, %c1_116, %c24_117], %256 {strides = array<i32>} : memref<1x2x32xf32, #tpu.memory_space<vmem>>, vector<1x1x4xf32>,
    %257 = vector.extract_strided_slice %17 {offsets = [0, 28], sizes = [16, 4], strides = [1, 1]} : vector<16x96xbf16> to vector<16x4xbf16>
    %258 = vector.extract_strided_slice %17 {offsets = [0, 60], sizes = [16, 4], strides = [1, 1]} : vector<16x96xbf16> to vector<16x4xbf16>
    %259 = vector.extract_strided_slice %17 {offsets = [0, 92], sizes = [16, 4], strides = [1, 1]} : vector<16x96xbf16> to vector<16x4xbf16>
    %cst_118 = arith.constant dense<0.000000e+00> : vector<16x16xf32>
    %260 = tpu.matmul %257, %258, %cst_118 {dimension_numbers = #tpu.dot_dimension_numbers<[1], [1], [0], [0], [0, 0, 1, 0], [], []>} : vector<16x4xbf16>, vector<16x4xbf16>, vector<16x16xf32> -> vector<16x16xf32>
    %261 = vector.extract_strided_slice %18 {offsets = [0, 28], sizes = [16, 4], strides = [1, 1]} : vector<16x32xbf16> to vector<16x4xbf16>
    %cst_119 = arith.constant dense<0.000000e+00> : vector<16x16xf32>
    %262 = tpu.matmul %261, %257, %cst_119 {dimension_numbers = #tpu.dot_dimension_numbers<[1], [1], [0], [0], [0, 0, 1, 0], [], []>} : vector<16x4xbf16>, vector<16x4xbf16>, vector<16x16xf32> -> vector<16x16xf32>
    %263 = arith.addf %260, %262 : vector<16x16xf32>
    %cst_120 = arith.constant dense<0xFF800000> : vector<16xf32>
    %264 = vector.multi_reduction <maximumf>, %263, %cst_120 [1] : vector<16x16xf32> to vector<16xf32>
    %265 = vector.shape_cast %264 : vector<16xf32> to vector<16x1xf32>
    %266 = vector.broadcast %265 : vector<16x1xf32> to vector<16x16xf32>
    %267 = arith.subf %263, %266 : vector<16x16xf32>
    %268 = math.exp %267 : vector<16x16xf32>
    %cst_121 = arith.constant dense<0.000000e+00> : vector<16xf32>
    %269 = vector.multi_reduction <add>, %268, %cst_121 [1] : vector<16x16xf32> to vector<16xf32>
    %270 = vector.shape_cast %269 : vector<16xf32> to vector<16x1xf32>
    %271 = tpu.reciprocal %270 {approx = true} : vector<16x1xf32> -> vector<16x1xf32>
    %272 = vector.broadcast %271 : vector<16x1xf32> to vector<16x16xf32>
    %273 = arith.mulf %268, %272 : vector<16x16xf32>
    %274 = arith.truncf %273 : vector<16x16xf32> to vector<16x16xbf16>
    %cst_122 = arith.constant dense<0.000000e+00> : vector<16x4xf32>
    %275 = tpu.matmul %274, %259, %cst_122 {dimension_numbers = #tpu.dot_dimension_numbers<[1], [0], [0], [1], [0, 0, 1, 1], [], []>} : vector<16x16xbf16>, vector<16x4xbf16>, vector<16x4xf32> -> vector<16x4xf32>
    %276 = arith.truncf %275 : vector<16x4xf32> to vector<16x4xbf16>
    %c0_123 = arith.constant 0 : index
    %c0_124 = arith.constant 0 : index
    %c28 = arith.constant 28 : index
    %277 = vector.load %arg7[%c0_123, %c0_124, %c28] : memref<1x16x32xbf16, #tpu.memory_space<vmem>>, vector<1x16x4xbf16>
    %278 = vector.shape_cast %277 : vector<1x16x4xbf16> to vector<16x4xbf16>
    %279 = vector.shape_cast %276 : vector<16x4xbf16> to vector<1x16x4xbf16>
    tpu.vector_store %arg7[%c0_123, %c0_124, %c28], %279 {strides = array<i32>} : memref<1x16x32xbf16, #tpu.memory_space<vmem>>, vector<1x16x4xbf16>,
    %cst_125 = arith.constant dense<0.000000e+00> : vector<4xf32>
    %280 = vector.multi_reduction <add>, %275, %cst_125 [0] : vector<16x4xf32> to vector<4xf32>
    %281 = vector.shape_cast %280 : vector<4xf32> to vector<1x4xf32>
    %c0_126 = arith.constant 0 : index
    %c0_127 = arith.constant 0 : index
    %c28_128 = arith.constant 28 : index
    %282 = vector.load %arg8[%c0_126, %c0_127, %c28_128] : memref<1x2x32xf32, #tpu.memory_space<vmem>>, vector<1x1x4xf32>
    %283 = vector.shape_cast %282 : vector<1x1x4xf32> to vector<1x4xf32>
    %284 = vector.shape_cast %281 : vector<1x4xf32> to vector<1x1x4xf32>
    tpu.vector_store %arg8[%c0_126, %c0_127, %c28_128], %284 {strides = array<i32>} : memref<1x2x32xf32, #tpu.memory_space<vmem>>, vector<1x1x4xf32>,
    %285 = arith.mulf %275, %275 : vector<16x4xf32>
    %cst_129 = arith.constant dense<0.000000e+00> : vector<4xf32>
    %286 = vector.multi_reduction <add>, %285, %cst_129 [0] : vector<16x4xf32> to vector<4xf32>
    %287 = vector.shape_cast %286 : vector<4xf32> to vector<1x4xf32>
    %c0_130 = arith.constant 0 : index
    %c1_131 = arith.constant 1 : index
    %c28_132 = arith.constant 28 : index
    %288 = vector.load %arg8[%c0_130, %c1_131, %c28_132] : memref<1x2x32xf32, #tpu.memory_space<vmem>>, vector<1x1x4xf32>
    %289 = vector.shape_cast %288 : vector<1x1x4xf32> to vector<1x4xf32>
    %290 = vector.shape_cast %287 : vector<1x4xf32> to vector<1x1x4xf32>
    tpu.vector_store %arg8[%c0_130, %c1_131, %c28_132], %290 {strides = array<i32>} : memref<1x2x32xf32, #tpu.memory_space<vmem>>, vector<1x1x4xf32>,
    return
  }
  func.func @transform_0(%arg0: i32) -> (i32, i32, i32) {
    %c0_i32 = arith.constant 0 : i32
    %c0_i32_0 = arith.constant 0 : i32
    %c0_i32_1 = arith.constant 0 : i32
    return %arg0, %c0_i32, %c0_i32_0 : i32, i32, i32
  }
  func.func @transform_1(%arg0: i32) -> (i32, i32) {
    %c0_i32 = arith.constant 0 : i32
    %c0_i32_0 = arith.constant 0 : i32
    %c0_i32_1 = arith.constant 0 : i32
    return %c0_i32, %c0_i32_0 : i32, i32
  }
  func.func @transform_2(%arg0: i32) -> (i32, i32) {
    %c0_i32 = arith.constant 0 : i32
    %c0_i32_0 = arith.constant 0 : i32
    %c0_i32_1 = arith.constant 0 : i32
    return %c0_i32, %c0_i32_0 : i32, i32
  }
  func.func @transform_3(%arg0: i32) -> (i32, i32) {
    %c0_i32 = arith.constant 0 : i32
    %c0_i32_0 = arith.constant 0 : i32
    %c0_i32_1 = arith.constant 0 : i32
    return %c0_i32, %c0_i32_0 : i32, i32
  }
  func.func @transform_4(%arg0: i32) -> (i32, i32) {
    %c0_i32 = arith.constant 0 : i32
    %c0_i32_0 = arith.constant 0 : i32
    %c0_i32_1 = arith.constant 0 : i32
    return %c0_i32, %c0_i32_0 : i32, i32
  }
  func.func @transform_5(%arg0: i32) -> (i32, i32) {
    %c0_i32 = arith.constant 0 : i32
    %c0_i32_0 = arith.constant 0 : i32
    %c0_i32_1 = arith.constant 0 : i32
    return %c0_i32, %c0_i32_0 : i32, i32
  }
  func.func @transform_6(%arg0: i32) -> (i32, i32, i32) {
    %c0_i32 = arith.constant 0 : i32
    %c0_i32_0 = arith.constant 0 : i32
    %c0_i32_1 = arith.constant 0 : i32
    return %arg0, %c0_i32, %c0_i32_0 : i32, i32, i32
  }
  func.func @transform_7(%arg0: i32) -> (i32, i32, i32) {
    %c0_i32 = arith.constant 0 : i32
    %c0_i32_0 = arith.constant 0 : i32
    %c0_i32_1 = arith.constant 0 : i32
    return %arg0, %c0_i32, %c0_i32_0 : i32, i32, i32
  }
}

module attributes {stable_mosaic.version = 11 : i64} {
  func.func @_residual_kernel(%arg0: i32, %arg1: memref<16x32xbf16, #tpu.memory_space<vmem>>, %arg2: memref<16x32xbf16, #tpu.memory_space<vmem>>, %arg3: memref<1x32xf32, #tpu.memory_space<vmem>>, %arg4: memref<1x32xf32, #tpu.memory_space<vmem>>, %arg5: memref<1x32xf32, #tpu.memory_space<vmem>>, %arg6: memref<16x32xf32, #tpu.memory_space<vmem>>) attributes {dimension_semantics = [#tpu.dimension_semantics<parallel>], iteration_bounds = array<i64: 2>, scalar_prefetch = 0 : i64, scratch_operands = 0 : i64, tpu.core_type = #tpu.core_type<tc>, window_params = [{transform_indices = @transform_0, window_bounds = array<i64: 16, 32>}, {transform_indices = @transform_1, window_bounds = array<i64: 16, 32>}, {pipeline_mode = #tpu.pipeline_mode<synchronous>, transform_indices = @transform_2, window_bounds = array<i64: 1, 32>}, {pipeline_mode = #tpu.pipeline_mode<synchronous>, transform_indices = @transform_3, window_bounds = array<i64: 1, 32>}, {pipeline_mode = #tpu.pipeline_mode<synchronous>, transform_indices = @transform_4, window_bounds = array<i64: 1, 32>}, {transform_indices = @transform_5, window_bounds = array<i64: 16, 32>}]} {
    %c0 = arith.constant 0 : index
    %c0_0 = arith.constant 0 : index
    %0 = vector.load %arg1[%c0, %c0_0] : memref<16x32xbf16, #tpu.memory_space<vmem>>, vector<16x32xbf16>
    %1 = arith.extf %0 : vector<16x32xbf16> to vector<16x32xf32>
    %c0_1 = arith.constant 0 : index
    %c0_2 = arith.constant 0 : index
    %2 = vector.load %arg3[%c0_1, %c0_2] : memref<1x32xf32, #tpu.memory_space<vmem>>, vector<1x32xf32>
    %3 = vector.broadcast %2 : vector<1x32xf32> to vector<16x32xf32>
    %4 = arith.mulf %1, %3 : vector<16x32xf32>
    %c0_3 = arith.constant 0 : index
    %c0_4 = arith.constant 0 : index
    %5 = vector.load %arg2[%c0_3, %c0_4] : memref<16x32xbf16, #tpu.memory_space<vmem>>, vector<16x32xbf16>
    %6 = arith.extf %5 : vector<16x32xbf16> to vector<16x32xf32>
    %c0_5 = arith.constant 0 : index
    %c0_6 = arith.constant 0 : index
    %7 = vector.load %arg4[%c0_5, %c0_6] : memref<1x32xf32, #tpu.memory_space<vmem>>, vector<1x32xf32>
    %8 = vector.broadcast %7 : vector<1x32xf32> to vector<16x32xf32>
    %9 = arith.mulf %6, %8 : vector<16x32xf32>
    %10 = arith.addf %4, %9 : vector<16x32xf32>
    %c0_7 = arith.constant 0 : index
    %c0_8 = arith.constant 0 : index
    %11 = vector.load %arg5[%c0_7, %c0_8] : memref<1x32xf32, #tpu.memory_space<vmem>>, vector<1x32xf32>
    %12 = vector.broadcast %11 : vector<1x32xf32> to vector<16x32xf32>
    %13 = arith.addf %10, %12 : vector<16x32xf32>
    %cst = arith.constant 0.000000e+00 : f32
    %14 = vector.broadcast %cst : f32 to vector<16x32xf32>
    %15 = arith.maximumf %13, %14 : vector<16x32xf32>
    %c0_9 = arith.constant 0 : index
    %c0_10 = arith.constant 0 : index
    %16 = vector.load %arg6[%c0_9, %c0_10] : memref<16x32xf32, #tpu.memory_space<vmem>>, vector<16x32xf32>
    tpu.vector_store %arg6[%c0_9, %c0_10], %15 {strides = array<i32>} : memref<16x32xf32, #tpu.memory_space<vmem>>, vector<16x32xf32>,
    return
  }
  func.func @transform_0(%arg0: i32) -> (i32, i32) {
    %c0_i32 = arith.constant 0 : i32
    %c0_i32_0 = arith.constant 0 : i32
    return %arg0, %c0_i32 : i32, i32
  }
  func.func @transform_1(%arg0: i32) -> (i32, i32) {
    %c0_i32 = arith.constant 0 : i32
    %c0_i32_0 = arith.constant 0 : i32
    return %arg0, %c0_i32 : i32, i32
  }
  func.func @transform_2(%arg0: i32) -> (i32, i32) {
    %c0_i32 = arith.constant 0 : i32
    %c0_i32_0 = arith.constant 0 : i32
    %c0_i32_1 = arith.constant 0 : i32
    return %c0_i32, %c0_i32_0 : i32, i32
  }
  func.func @transform_3(%arg0: i32) -> (i32, i32) {
    %c0_i32 = arith.constant 0 : i32
    %c0_i32_0 = arith.constant 0 : i32
    %c0_i32_1 = arith.constant 0 : i32
    return %c0_i32, %c0_i32_0 : i32, i32
  }
  func.func @transform_4(%arg0: i32) -> (i32, i32) {
    %c0_i32 = arith.constant 0 : i32
    %c0_i32_0 = arith.constant 0 : i32
    %c0_i32_1 = arith.constant 0 : i32
    return %c0_i32, %c0_i32_0 : i32, i32
  }
  func.func @transform_5(%arg0: i32) -> (i32, i32) {
    %c0_i32 = arith.constant 0 : i32
    %c0_i32_0 = arith.constant 0 : i32
    return %arg0, %c0_i32 : i32, i32
  }
}

</mosaic_0001>

<llo_original>
// kernel: botneck2_forward.3
$region0: #{botneck2_forward.3}
  #allocation0 [shape = 'u32[]', space=smem, size = 0x4, offset = 0x4, fixed_abs, tag = 'smem constant byte address 0x4 - core index']
  #allocation1 [shape = 'u32[144,128]{1,0:T(1,128)}', space=vmem, size = 0x12000, scoped, tag = 'internal scratch']
  %s0 = inlined_call_operand.vmem [shape: bf16[32,144], index: 0, kind: input, shape index: {}]
  %s1 = inlined_call_operand.vmem [shape: bf16[144,32], index: 1, kind: input, shape index: {}]
  %s2 = inlined_call_operand.vmem [shape: bf16[16,32], index: 2, kind: input, shape index: {}]
  %s3 = inlined_call_operand.vmem [shape: bf16[32,32], index: 3, kind: output, shape index: {0}]
  %s4 = inlined_call_operand.vmem [shape: bf16[32,32], index: 4, kind: output, shape index: {1}]
  %s5 = inlined_call_operand.vmem [shape: f32[2,4,32], index: 5, kind: output, shape index: {2}]
  %6 = xla_tuple %s3, %s4, %s5
  %s7 = sld [smem:[#allocation0]]
  $region61: #{botneck2_forward.3} parent=0
    _
  %s9 = ssub.s32 1, %s7
  %s10 = scalar_select 0, %s9, %s7
  loop: start=0, step=1, limit=4
  $region2: #{botneck2_forward.3} parent=0 // loop_pre_header
    _
  $region3: #{botneck2_forward.3} parent=0 // loop_header
    %s12 = sphi 0, %s16
    %p13 = scmp.ge.s32.totalorder %s12, 4
    %s22 = sphi 0, %s24
    %s25 = sphi 0, %s22
    %s26 = sphi 0, %s25
    %s42 = sphi 0, %s26
    %s46 = sphi 0, %s46
    %s48 = sphi 0, %s46
    %s49 = sphi 0, %s48
    %s63 = sphi 0, %s49
    %s67 = sphi 0, %s67
    %s69 = sphi 0, %s67
    %s70 = sphi 0, %s69
    %s84 = sphi 0, %s70
    %s90 = sphi 0, %s92
    %s93 = sphi 0, %s90
    %s94 = sphi 0, %s93
    %s110 = sphi 0, %s94
    %s116 = sphi 0, %s118
    %s119 = sphi 0, %s116
    %s120 = sphi 0, %s119
    %s136 = sphi 0, %s120
    %s142 = sphi 0, %s144
    %s145 = sphi 0, %s142
    %s146 = sphi 0, %s145
    %s162 = sphi 0, %s146
  $region4: #{botneck2_forward.3} parent=0 // loop_header_branch
    %15 = sbr.rel (%p13) target = $region8
  $region5: #{botneck2_forward.3} parent=0 // loop_body
    %s17 = ssub.s32 %s12, 1
    %s18 = ssub.s32 %s12, 2
    %s19 = sadd.s32 %s12, 1
    %s20 = ssub.s32 %s12, %s19
    %p21 = scmp.eq.s32.totalorder %s20, 0
    %s23 = sadd.s32 %s22, 1
    %s24 = scalar_select %p21, %s22, %s23
    %p27 = pneg %p21
    %p28 = scmp.eq.s32.totalorder %s12, 1
    %p29 = por %p27, %p28
    %p30 = scmp.ne.s32.totalorder %s22, %s25
    %p31 = scmp.eq.s32.totalorder %s12, 0
    %p32 = por %p30, %p31
    %p33 = scmp.ne.s32.totalorder %s22, %s25
    %p34 = scmp.eq.s32.totalorder %s17, 1
    %p35 = por %p33, %p34
    %p36 = scmp.ne.s32.totalorder %s25, %s26
    %p37 = scmp.eq.s32.totalorder %s17, 0
    %p38 = por %p36, %p37
    %p39 = scmp.ne.s32.totalorder %s25, %s26
    %p40 = scmp.eq.s32.totalorder %s18, 1
    %p41 = por %p39, %p40
    %p43 = scmp.ne.s32.totalorder %s26, %s42
    %p44 = scmp.eq.s32.totalorder %s18, 0
    %p45 = por %p43, %p44
    %s47 = sadd.s32 %s46, 1
    %p50 = scmp.eq.s32.totalorder %s12, 1
    %p51 = scmp.ne.s32.totalorder %s46, %s48
    %p52 = scmp.eq.s32.totalorder %s12, 0
    %p53 = por %p51, %p52
    %p54 = scmp.ne.s32.totalorder %s46, %s48
    %p55 = scmp.eq.s32.totalorder %s17, 1
    %p56 = por %p54, %p55
    %p57 = scmp.ne.s32.totalorder %s48, %s49
    %p58 = scmp.eq.s32.totalorder %s17, 0
    %p59 = por %p57, %p58
    %p60 = scmp.ne.s32.totalorder %s48, %s49
    %p61 = scmp.eq.s32.totalorder %s18, 1
    %p62 = por %p60, %p61
    %p64 = scmp.ne.s32.totalorder %s49, %s63
    %p65 = scmp.eq.s32.totalorder %s18, 0
    %p66 = por %p64, %p65
    %s68 = sadd.s32 %s67, 1
    %p71 = scmp.eq.s32.totalorder %s12, 1
    %p72 = scmp.ne.s32.totalorder %s67, %s69
    %p73 = scmp.eq.s32.totalorder %s12, 0
    %p74 = por %p72, %p73
    %p75 = scmp.ne.s32.totalorder %s67, %s69
    %p76 = scmp.eq.s32.totalorder %s17, 1
    %p77 = por %p75, %p76
    %p78 = scmp.ne.s32.totalorder %s69, %s70
    %p79 = scmp.eq.s32.totalorder %s17, 0
    %p80 = por %p78, %p79
    %p81 = scmp.ne.s32.totalorder %s69, %s70
    %p82 = scmp.eq.s32.totalorder %s18, 1
    %p83 = por %p81, %p82
    %p85 = scmp.ne.s32.totalorder %s70, %s84
    %p86 = scmp.eq.s32.totalorder %s18, 0
    %p87 = por %p85, %p86
    %s88 = ssub.s32 %s12, %s19
    %p89 = scmp.eq.s32.totalorder %s88, 0
    %s91 = sadd.s32 %s90, 1
    %s92 = scalar_select %p89, %s90, %s91
    %p95 = pneg %p89
    %p96 = scmp.eq.s32.totalorder %s12, 1
    %p97 = por %p95, %p96
    %p98 = scmp.ne.s32.totalorder %s90, %s93
    %p99 = scmp.eq.s32.totalorder %s12, 0
    %p100 = por %p98, %p99
    %p101 = scmp.ne.s32.totalorder %s90, %s93
    %p102 = scmp.eq.s32.totalorder %s17, 1
    %p103 = por %p101, %p102
    %p104 = scmp.ne.s32.totalorder %s93, %s94
    %p105 = scmp.eq.s32.totalorder %s17, 0
    %p106 = por %p104, %p105
    %p107 = scmp.ne.s32.totalorder %s93, %s94
    %p108 = scmp.eq.s32.totalorder %s18, 1
    %p109 = por %p107, %p108
    %p111 = scmp.ne.s32.totalorder %s94, %s110
    %p112 = scmp.eq.s32.totalorder %s18, 0
    %p113 = por %p111, %p112
    %s114 = ssub.s32 %s12, %s19
    %p115 = scmp.eq.s32.totalorder %s114, 0
    %s117 = sadd.s32 %s116, 1
    %s118 = scalar_select %p115, %s116, %s117
    %p121 = pneg %p115
    %p122 = scmp.eq.s32.totalorder %s12, 1
    %p123 = por %p121, %p122
    %p124 = scmp.ne.s32.totalorder %s116, %s119
    %p125 = scmp.eq.s32.totalorder %s12, 0
    %p126 = por %p124, %p125
    %p127 = scmp.ne.s32.totalorder %s116, %s119
    %p128 = scmp.eq.s32.totalorder %s17, 1
    %p129 = por %p127, %p128
    %p130 = scmp.ne.s32.totalorder %s119, %s120
    %p131 = scmp.eq.s32.totalorder %s17, 0
    %p132 = por %p130, %p131
    %p133 = scmp.ne.s32.totalorder %s119, %s120
    %p134 = scmp.eq.s32.totalorder %s18, 1
    %p135 = por %p133, %p134
    %p137 = scmp.ne.s32.totalorder %s120, %s136
    %p138 = scmp.eq.s32.totalorder %s18, 0
    %p139 = por %p137, %p138
    %s140 = ssub.s32 %s12, %s19
    %p141 = scmp.eq.s32.totalorder %s140, 0
    %s143 = sadd.s32 %s142, 1
    %s144 = scalar_select %p141, %s142, %s143
    %p147 = pneg %p141
    %p148 = scmp.eq.s32.totalorder %s12, 1
    %p149 = por %p147, %p148
    %p150 = scmp.ne.s32.totalorder %s142, %s145
    %p151 = scmp.eq.s32.totalorder %s12, 0
    %p152 = por %p150, %p151
    %p153 = scmp.ne.s32.totalorder %s142, %s145
    %p154 = scmp.eq.s32.totalorder %s17, 1
    %p155 = por %p153, %p154
    %p156 = scmp.ne.s32.totalorder %s145, %s146
    %p157 = scmp.eq.s32.totalorder %s17, 0
    %p158 = por %p156, %p157
    %p159 = scmp.ne.s32.totalorder %s145, %s146
    %p160 = scmp.eq.s32.totalorder %s18, 1
    %p161 = por %p159, %p160
    %p163 = scmp.ne.s32.totalorder %s146, %s162
    %p164 = scmp.eq.s32.totalorder %s18, 0
    %p165 = por %p163, %p164
    %p166 = scmp.le.s32.totalorder 1, %s12
    %p167 = scmp.lt.s32.totalorder %s12, 3
    %p168 = pnand %p166, %p167
    %p169 = pneg %p168
    // Predicated region
    $region9: #{botneck2_forward.3} parent=5 // pred_check
      _
    $region10: #{botneck2_forward.3} parent=5 // pred_check_branch
      %171 = sbr.rel (%p168) target = $region12
    $region11: #{botneck2_forward.3} parent=5 // pred_region
      %s172 = ssub.s32 %s12, 1
      // Predicated region
      $region13: #{botneck2_forward.3} parent=11 // pred_check
        %p173 = pneg %p59
      $region14: #{botneck2_forward.3} parent=11 // pred_check_branch
        %175 = sbr.rel (%p173) target = $region16
      $region15: #{botneck2_forward.3} parent=11 // pred_region
        _
      $region16: #{botneck2_forward.3} parent=11 // pred_fallthru
        _
      // Predicated region
      $region17: #{botneck2_forward.3} parent=11 // pred_check
        %p176 = pneg %p80
      $region18: #{botneck2_forward.3} parent=11 // pred_check_branch
        %178 = sbr.rel (%p176) target = $region20
      $region19: #{botneck2_forward.3} parent=11 // pred_region
        _
      $region20: #{botneck2_forward.3} parent=11 // pred_fallthru
        _
    $region12: #{botneck2_forward.3} parent=5 // pred_fallthru
      _
    %p179 = scmp.lt.s32.totalorder %s12, 2
    // Predicated region
    $region21: #{botneck2_forward.3} parent=5 // pred_check
      %p180 = pneg %p179
    $region22: #{botneck2_forward.3} parent=5 // pred_check_branch
      %182 = sbr.rel (%p180) target = $region24
    $region23: #{botneck2_forward.3} parent=5 // pred_region
      // Predicated region
      $region25: #{botneck2_forward.3} parent=23 // pred_check
        %p183 = pneg %p32
      $region26: #{botneck2_forward.3} parent=23 // pred_check_branch
        %185 = sbr.rel (%p183) target = $region28
      $region27: #{botneck2_forward.3} parent=23 // pred_region
        %s186 = smul.u32 2, %s12
        %p187 = scmp.lt.s32.totalorder %s186, 3
        %s188 = scalar_select %p187, %s186, 3
        %s189 = smul.addr %s188, 2
        %s190 = smul.addr %s189, 4
        %s191 = scalar_lea.vmem %s0, %s190
        %s192 = smul.u32 2, %s12
      $region28: #{botneck2_forward.3} parent=23 // pred_fallthru
        _
    $region24: #{botneck2_forward.3} parent=5 // pred_fallthru
      _
    %p193 = scmp.le.s32.totalorder 1, %s12
    %p194 = scmp.lt.s32.totalorder %s12, 3
    %p195 = pnand %p193, %p194
    %p196 = pneg %p195
    // Predicated region
    $region29: #{botneck2_forward.3} parent=5 // pred_check
      _
    $region30: #{botneck2_forward.3} parent=5 // pred_check_branch
      %198 = sbr.rel (%p195) target = $region32
    $region31: #{botneck2_forward.3} parent=5 // pred_region
      %s199 = ssub.s32 %s12, 1
      %s200 = smul.u32 2, %s17
      %p201 = scmp.lt.s32.totalorder %s200, 3
      %s202 = scalar_select %p201, %s200, 3
      %s203 = smul.addr %s202, 2
      %s204 = smul.addr %s203, 4
      %s205 = scalar_lea.vmem %s0, %s204
      %p206 = pneg %p38
      %p207 = pneg %p35
      %p208 = pneg %p59
      %p209 = pneg %p56
      %p210 = pneg %p80
      %p211 = pneg %p77
      %p212 = pneg %p106
      %p213 = pneg %p103
      %s214 = smul.u32 2, %s17
      %p215 = scmp.lt.s32.totalorder %s214, 3
      %s216 = scalar_select %p215, %s214, 3
      %s217 = smul.addr %s216, 4
      %s218 = scalar_lea.vmem %s3, %s217
      %p219 = pneg %p132
      %p220 = pneg %p129
      %s221 = smul.u32 2, %s17
      %p222 = scmp.lt.s32.totalorder %s221, 3
      %s223 = scalar_select %p222, %s221, 3
      %s224 = smul.addr %s223, 4
      %s225 = scalar_lea.vmem %s4, %s224
      %p226 = pneg %p158
      %p227 = pneg %p155
      %p228 = scmp.lt.s32.totalorder %s17, 1
      %s229 = scalar_select %p228, %s17, 1
      %s230 = smul.addr %s229, 4
      %s231 = scalar_lea.vmem %s5, %s230
      %s232 = smul.u32 2, %s17
      %p233 = scmp.lt.s32.totalorder %s232, 3
      %s234 = scalar_select %p233, %s232, 3
      %s235 = smul.addr %s234, 2
      %s236 = smul.addr %s235, 4
      %s237 = scalar_lea.vmem %s0, %s236
      %s238 = smul.u32 2, %s17
      %s239 = smul.u32 2, %s17
      %p240 = scmp.lt.s32.totalorder %s239, 3
      %s241 = scalar_select %p240, %s239, 3
      %s242 = smul.addr %s241, 4
      %s243 = scalar_lea.vmem %s3, %s242
      %s244 = smul.u32 2, %s17
      %s245 = smul.u32 2, %s17
      %p246 = scmp.lt.s32.totalorder %s245, 3
      %s247 = scalar_select %p246, %s245, 3
      %s248 = smul.addr %s247, 4
      %s249 = scalar_lea.vmem %s4, %s248
      %s250 = smul.u32 2, %s17
      %p251 = scmp.lt.s32.totalorder %s17, 1
      %s252 = scalar_select %p251, %s17, 1
      %s253 = smul.addr %s252, 4
      %s254 = scalar_lea.vmem %s5, %s253
      %v256 = vld [vmem:[%s237] sm:$0xff]
      %v257 = vld [vmem:[%s237 + $0x8] sm:$0xff]
      %v258 = vld [vmem:[%s1] sm:$0xf]
      %v259 = vld [vmem:[%s1 + $0x4] sm:$0xf]
      %v260 = vld [vmem:[%s1 + $0x8] sm:$0xf]
      %v261 = vld [vmem:[%s1 + $0xc] sm:$0xf]
      %v262 = vld [vmem:[%s1 + $0x10] sm:$0xf]
      %v263 = vld [vmem:[%s1 + $0x14] sm:$0xf]
      %v264 = vld [vmem:[%s1 + $0x18] sm:$0xf]
      %v265 = vld [vmem:[%s1 + $0x1c] sm:$0xf]
      %v266 = vld [vmem:[%s1 + $0x20] sm:$0xf]
      %v267 = vld [vmem:[%s1 + $0x24] sm:$0xf]
      %v268 = vld [vmem:[%s1 + $0x28] sm:$0xf]
      %v269 = vld [vmem:[%s1 + $0x2c] sm:$0xf]
      %v270 = vld [vmem:[%s1 + $0x30] sm:$0xf]
      %v271 = vld [vmem:[%s1 + $0x34] sm:$0xf]
      %v272 = vld [vmem:[%s1 + $0x38] sm:$0xf]
      %v273 = vld [vmem:[%s1 + $0x3c] sm:$0xf]
      %v274 = vld [vmem:[%s1 + $0x40] sm:$0xf]
      %v275 = vld [vmem:[%s1 + $0x44] sm:$0xf]
      %v278 = vunpack.c.l.b16 %v256
      %v279 = vunpack.c.h.b16 %v256
      %v280 = vunpack.c.l.b16 %v257
      %v281 = vunpack.c.h.b16 %v257
      %v282 = vpack.c.b16 %v280, %v278
      %v283 = vpack.c.b16 %v281, %v279
      %v303 = vunpack.c.l.b16 %v258
      %v304 = vunpack.c.l.b16 %v259
      %v305 = vunpack.c.l.b16 %v260
      %v306 = vunpack.c.l.b16 %v261
      %v307 = vunpack.c.l.b16 %v262
      %v308 = vunpack.c.l.b16 %v263
      %v309 = vunpack.c.l.b16 %v264
      %v310 = vunpack.c.l.b16 %v265
      %v311 = vunpack.c.l.b16 %v266
      %v312 = vunpack.c.l.b16 %v267
      %v313 = vunpack.c.l.b16 %v268
      %v314 = vunpack.c.l.b16 %v269
      %v315 = vunpack.c.l.b16 %v270
      %v316 = vunpack.c.l.b16 %v271
      %v317 = vunpack.c.l.b16 %v272
      %v318 = vunpack.c.l.b16 %v273
      %v319 = vunpack.c.l.b16 %v274
      %v320 = vunpack.c.l.b16 %v275
      %v321 = vpack.c.b16 %v304, %v303
      %v322 = vpack.c.b16 %v306, %v305
      %v323 = vpack.c.b16 %v308, %v307
      %v324 = vpack.c.b16 %v310, %v309
      %v325 = vpack.c.b16 %v312, %v311
      %v326 = vpack.c.b16 %v314, %v313
      %v327 = vpack.c.b16 %v316, %v315
      %v328 = vpack.c.b16 %v318, %v317
      %v329 = vpack.c.b16 %v320, %v319
      %vm339 = vcmask 130048
      %v341 = vsel %vm339, %v283, 0
      %343 = vmatprep.subr.bf16.mxu0 0
      %344 = vmatpush1.bf16.msra.mxu0 %v328
      %345 = vmatprep.subr.bf16.mxu0 0
      %346 = vmatpush1.bf16.msra.mxu0 %v327
      %347 = vmatprep.subr.bf16.mxu0 0
      %348 = vmatpush1.bf16.msra.mxu0 %v326
      %349 = vmatprep.subr.bf16.mxu0 0
      %350 = vmatpush1.bf16.msra.mxu0 %v325
      %351 = vmatprep.subr.bf16.mxu0 0
      %352 = vmatpush1.bf16.msra.mxu0 %v324
      %353 = vmatprep.subr.bf16.mxu0 0
      %354 = vmatpush1.bf16.msra.mxu0 %v323
      %355 = vmatprep.subr.bf16.mxu0 0
      %356 = vmatpush1.bf16.msra.mxu0 %v322
      %357 = vmatprep.subr.bf16.mxu0 0
      %358 = vmatpush1.bf16.msra.mxu0 %v321
      %359 = vmatprep.subr.bf16.mxu0 0
      %360 = vmatpush2.bf16.msra.mxu0 0
      %361 = vmatprep.subr.bf16.mxu0 0
      %362 = vmatpush2.bf16.msra.mxu0 0
      %363 = vmatprep.subr.bf16.mxu0 0
      %364 = vmatpush2.bf16.msra.mxu0 0
      %365 = vmatprep.subr.bf16.mxu0 0
      %366 = vmatpush2.bf16.msra.mxu0 0
      %367 = vmatprep.subr.bf16.mxu0 0
      %368 = vmatpush2.bf16.msra.mxu0 0
      %369 = vmatprep.subr.bf16.mxu0 0
      %370 = vmatpush2.bf16.msra.mxu0 0
      %371 = vmatprep.subr.bf16.mxu0 0
      %372 = vmatpush2.bf16.msra.mxu0 0
      %373 = vmatprep.subr.bf16.mxu0 0
      %374 = vmatpush2.bf16.msra.mxu0 %v329
      %375 = vmatprep.mubr.bf16.mxu0 %v341
      %376 = vmatmul.mubr.bf16.gmra.mxu0 %v282
      %v377 = vpop.f32.mrf.mxu0
      %v378 = vadd.f32 0.0, %v377
      %v379 = vpop.f32.mrf.mxu0
      %v380 = vpop.f32.mrf.mxu0
      %v381 = vadd.f32 0.0, %v380
      %v382 = vpop.f32.mrf.mxu0
      %383 = vdwg.mxu0
      %v384 = vld [vmem:[%s2] sm:$0xf]
      %v385 = vld [vmem:[%s2 + $0x4] sm:$0xf]
      %v388 = vunpack.c.l.b16 %v384
      %v389 = vunpack.c.l.b16 %v385
      %v390 = vpack.c.b16 %v389, %v388
      %v393 = vsel %vm339, %v282, 0
      %395 = vmatprep.subr.bf16.mxu0 0
      %396 = vmatpush1.bf16.msra.mxu0 0
      %397 = vmatprep.subr.bf16.mxu0 0
      %398 = vmatpush1.bf16.msra.mxu0 0
      %399 = vmatprep.subr.bf16.mxu0 0
      %400 = vmatpush1.bf16.msra.mxu0 0
      %401 = vmatprep.subr.bf16.mxu0 0
      %402 = vmatpush1.bf16.msra.mxu0 0
      %403 = vmatprep.subr.bf16.mxu0 0
      %404 = vmatpush1.bf16.msra.mxu0 0
      %405 = vmatprep.subr.bf16.mxu0 0
      %406 = vmatpush1.bf16.msra.mxu0 0
      %407 = vmatprep.subr.bf16.mxu0 0
      %408 = vmatpush1.bf16.msra.mxu0 0
      %409 = vmatprep.subr.bf16.mxu0 0
      %410 = vmatpush1.bf16.msra.mxu0 %v390
      %411 = vmatprep.subr.bf16.mxu0 0
      %412 = vmatpush2.bf16.msra.mxu0 0
      %413 = vmatprep.subr.bf16.mxu0 0
      %414 = vmatpush2.bf16.msra.mxu0 0
      %415 = vmatprep.subr.bf16.mxu0 0
      %416 = vmatpush2.bf16.msra.mxu0 0
      %417 = vmatprep.subr.bf16.mxu0 0
      %418 = vmatpush2.bf16.msra.mxu0 0
      %419 = vmatprep.subr.bf16.mxu0 0
      %420 = vmatpush2.bf16.msra.mxu0 0
      %421 = vmatprep.subr.bf16.mxu0 0
      %422 = vmatpush2.bf16.msra.mxu0 0
      %423 = vmatprep.subr.bf16.mxu0 0
      %424 = vmatpush2.bf16.msra.mxu0 0
      %425 = vmatprep.subr.bf16.mxu0 0
      %426 = vmatpush2.bf16.msra.mxu0 0
      %427 = vmatprep.mubr.bf16.mxu0 0
      %428 = vmatmul.mubr.bf16.gmra.mxu0 %v393
      %v429 = vpop.f32.mrf.mxu0
      %v430 = vadd.f32 0.0, %v429
      %v431 = vpop.f32.mrf.mxu0
      %v432 = vpop.f32.mrf.mxu0
      %v433 = vadd.f32 0.0, %v432
      %v434 = vpop.f32.mrf.mxu0
      %435 = vdwg.mxu0
      %v436 = vpack.c.bf16 %v381, %v378
      %v438 = vunpack.c.l.b16 %v436
      %v439 = vunpack.c.h.b16 %v436
      %v440 = vpack.c.b16 %v438, %v438
      %v441 = vpack.c.b16 %v439, %v439
      %vm444 = vcmask 257024
      %445 = vst.msk [vmem:[%s243] sm:$0xf] %vm444, %v440
      %446 = vst.msk [vmem:[%s243 + $0x4] sm:$0xf] %vm444, %v441
      %v447 = vpack.c.bf16 %v433, %v430
      %v449 = vunpack.c.l.b16 %v447
      %v450 = vunpack.c.h.b16 %v447
      %v451 = vpack.c.b16 %v449, %v449
      %v452 = vpack.c.b16 %v450, %v450
      %455 = vst.msk [vmem:[%s249] sm:$0xf] %vm444, %v451
      %456 = vst.msk [vmem:[%s249 + $0x4] sm:$0xf] %vm444, %v452
      %vm457 = vcmask 261120
      %v458 = vsel %vm457, %v378, 0.0
      %v459 = vsel %vm457, %v381, 0.0
      %v460 = vadd.f32 %v458, %v459
      %v461 = vrot.slane %v460, 4
      %v462 = vadd.f32 %v460, %v461
      %v463 = vrot.slane %v462, 2
      %v464 = vadd.f32 %v462, %v463
      %v465 = vrot.slane %v464, 1
      %v466 = vadd.f32 %v464, %v465
      %vm467 = vcmask 253952
      %468 = vst.msk [vmem:[%s254] sm:$0x1] %vm467, %v466
      %v469 = vmul.f32 %v378, %v378
      %v470 = vmul.f32 %v381, %v381
      %v471 = vsel %vm457, %v469, 0.0
      %v472 = vsel %vm457, %v470, 0.0
      %v473 = vadd.f32 %v471, %v472
      %v474 = vrot.slane %v473, 4
      %v475 = vadd.f32 %v473, %v474
      %v476 = vrot.slane %v475, 2
      %v477 = vadd.f32 %v475, %v476
      %v478 = vrot.slane %v477, 1
      %v479 = vadd.f32 %v477, %v478
      %480 = vst.msk [vmem:[%s254 + $0x1] sm:$0x1] %vm467, %v479
      %v481 = vsel %vm457, %v430, 0.0
      %v482 = vsel %vm457, %v433, 0.0
      %v483 = vadd.f32 %v481, %v482
      %v484 = vrot.slane %v483, 4
      %v485 = vadd.f32 %v483, %v484
      %v486 = vrot.slane %v485, 2
      %v487 = vadd.f32 %v485, %v486
      %v488 = vrot.slane %v487, 1
      %v489 = vadd.f32 %v487, %v488
      %490 = vst.msk [vmem:[%s254 + $0x2] sm:$0x1] %vm467, %v489
      %v491 = vmul.f32 %v430, %v430
      %v492 = vmul.f32 %v433, %v433
      %v493 = vsel %vm457, %v491, 0.0
      %v494 = vsel %vm457, %v492, 0.0
      %v495 = vadd.f32 %v493, %v494
      %v496 = vrot.slane %v495, 4
      %v497 = vadd.f32 %v495, %v496
      %v498 = vrot.slane %v497, 2
      %v499 = vadd.f32 %v497, %v498
      %v500 = vrot.slane %v499, 1
      %v501 = vadd.f32 %v499, %v500
      %502 = vst.msk [vmem:[%s254 + $0x3] sm:$0x1] %vm467, %v501
      %s503 = smul.u32 2, %s17
      %p504 = scmp.lt.s32.totalorder %s503, 3
      %s505 = scalar_select %p504, %s503, 3
      %s506 = smul.addr %s505, 4
      %s507 = scalar_lea.vmem %s3, %s506
      %s508 = smul.u32 2, %s17
      %p509 = scmp.lt.s32.totalorder %s508, 3
      %s510 = scalar_select %p509, %s508, 3
      %s511 = smul.addr %s510, 4
      %s512 = scalar_lea.vmem %s4, %s511
      %p513 = scmp.lt.s32.totalorder %s17, 1
      %s514 = scalar_select %p513, %s17, 1
      %s515 = smul.addr %s514, 4
      %s516 = scalar_lea.vmem %s5, %s515
      // Predicated region
      $region33: #{botneck2_forward.3} parent=31 // pred_check
        %p517 = pneg %p103
      $region34: #{botneck2_forward.3} parent=31 // pred_check_branch
        %519 = sbr.rel (%p517) target = $region36
      $region35: #{botneck2_forward.3} parent=31 // pred_region
        %s520 = smul.u32 2, %s17
      $region36: #{botneck2_forward.3} parent=31 // pred_fallthru
        _
      // Predicated region
      $region37: #{botneck2_forward.3} parent=31 // pred_check
        %p521 = pneg %p129
      $region38: #{botneck2_forward.3} parent=31 // pred_check_branch
        %523 = sbr.rel (%p521) target = $region40
      $region39: #{botneck2_forward.3} parent=31 // pred_region
        %s524 = smul.u32 2, %s17
      $region40: #{botneck2_forward.3} parent=31 // pred_fallthru
        _
      // Predicated region
      $region41: #{botneck2_forward.3} parent=31 // pred_check
        %p525 = pneg %p155
      $region42: #{botneck2_forward.3} parent=31 // pred_check_branch
        %527 = sbr.rel (%p525) target = $region44
      $region43: #{botneck2_forward.3} parent=31 // pred_region
        _
      $region44: #{botneck2_forward.3} parent=31 // pred_fallthru
        _
    $region32: #{botneck2_forward.3} parent=5 // pred_fallthru
      _
    %p528 = scmp.le.s32.totalorder 2, %s12
    // Predicated region
    $region45: #{botneck2_forward.3} parent=5 // pred_check
      %p529 = pneg %p528
    $region46: #{botneck2_forward.3} parent=5 // pred_check_branch
      %531 = sbr.rel (%p529) target = $region48
    $region47: #{botneck2_forward.3} parent=5 // pred_region
      %s532 = ssub.s32 %s12, 2
      // Predicated region
      $region49: #{botneck2_forward.3} parent=47 // pred_check
        %p533 = pneg %p109
      $region50: #{botneck2_forward.3} parent=47 // pred_check_branch
        %535 = sbr.rel (%p533) target = $region52
      $region51: #{botneck2_forward.3} parent=47 // pred_region
        %s536 = smul.u32 2, %s18
        %p537 = scmp.lt.s32.totalorder %s536, 3
        %s538 = scalar_select %p537, %s536, 3
        %s539 = smul.addr %s538, 4
        %s540 = scalar_lea.vmem %s3, %s539
      $region52: #{botneck2_forward.3} parent=47 // pred_fallthru
        _
      // Predicated region
      $region53: #{botneck2_forward.3} parent=47 // pred_check
        %p541 = pneg %p135
      $region54: #{botneck2_forward.3} parent=47 // pred_check_branch
        %543 = sbr.rel (%p541) target = $region56
      $region55: #{botneck2_forward.3} parent=47 // pred_region
        %s544 = smul.u32 2, %s18
        %p545 = scmp.lt.s32.totalorder %s544, 3
        %s546 = scalar_select %p545, %s544, 3
        %s547 = smul.addr %s546, 4
        %s548 = scalar_lea.vmem %s4, %s547
      $region56: #{botneck2_forward.3} parent=47 // pred_fallthru
        _
      // Predicated region
      $region57: #{botneck2_forward.3} parent=47 // pred_check
        %p549 = pneg %p161
      $region58: #{botneck2_forward.3} parent=47 // pred_check_branch
        %551 = sbr.rel (%p549) target = $region60
      $region59: #{botneck2_forward.3} parent=47 // pred_region
        %p552 = scmp.lt.s32.totalorder %s18, 1
        %s553 = scalar_select %p552, %s18, 1
        %s554 = smul.addr %s553, 4
        %s555 = scalar_lea.vmem %s5, %s554
      $region60: #{botneck2_forward.3} parent=47 // pred_fallthru
        _
    $region48: #{botneck2_forward.3} parent=5 // pred_fallthru
      _
  $region6: #{botneck2_forward.3} parent=0 // loop_footer
    %s16 = sadd.s32 1, %s12
  $region7: #{botneck2_forward.3} parent=0 // loop_footer_branch
    %11 = sbr.rel target = $region3
  $region8: #{botneck2_forward.3} parent=0 // loop_exit
    _

// kernel: botneck2_forward.5
$region0: #{botneck2_forward.5}
  #allocation0 [shape = 'u32[]', space=smem, size = 0x4, offset = 0x4, fixed_abs, tag = 'smem constant byte address 0x4 - core index']
  #allocation1 [shape = 'u32[144,128]{1,0:T(1,128)}', space=vmem, size = 0x12000, scoped, tag = 'internal scratch']
  %s0 = inlined_call_operand.vmem [shape: bf16[32,32], index: 0, kind: input, shape index: {}]
  %s1 = inlined_call_operand.vmem [shape: bf16[32,32], index: 1, kind: input, shape index: {}]
  %s2 = inlined_call_operand.vmem [shape: f32[1,32], index: 2, kind: input, shape index: {}]
  %s3 = inlined_call_operand.vmem [shape: f32[1,32], index: 3, kind: input, shape index: {}]
  %s4 = inlined_call_operand.vmem [shape: f32[1,32], index: 4, kind: input, shape index: {}]
  %s5 = inlined_call_operand.hbm [shape: f32[32,32], index: 5, kind: output, shape index: {}]
  %s6 = sld [smem:[#allocation0]]
  $region53: #{botneck2_forward.5} parent=0
    _
  %s8 = ssub.s32 1, %s6
  %s9 = scalar_select 0, %s8, %s6
  $region1: #{botneck2_forward.5} parent=0
    #allocation2 [shape = 'u8[16384]{0}', space=vmem, size = 0x4000, scoped, tag = 'output window, operand 0']
    #allocation3 [shape = 's32[2]{0}', space=sflag, size = 0x8, scoped, tag = 'scoped memory for botneck2_forward.5']
    %10 = vsyncpa [#allocation3], 0
    %s11 = scalar_lea.sflag [#allocation3], 1
    %12 = vsyncpa %s11, 0
    loop: start=0, step=1, limit=4
    $region2: #{botneck2_forward.5} parent=1 // loop_pre_header
      _
    $region3: #{botneck2_forward.5} parent=1 // loop_header
      %s14 = sphi 0, %s18
      %p15 = scmp.ge.s32.totalorder %s14, 4
      %s24 = sphi 0, %s26
      %s27 = sphi 0, %s24
      %s28 = sphi 0, %s27
      %s44 = sphi 0, %s28
      %s50 = sphi 0, %s52
      %s53 = sphi 0, %s50
      %s54 = sphi 0, %s53
      %s70 = sphi 0, %s54
      %s74 = sphi 0, %s74
      %s76 = sphi 0, %s74
      %s77 = sphi 0, %s76
      %s91 = sphi 0, %s77
      %s95 = sphi 0, %s95
      %s97 = sphi 0, %s95
      %s98 = sphi 0, %s97
      %s112 = sphi 0, %s98
      %s116 = sphi 0, %s116
      %s118 = sphi 0, %s116
      %s119 = sphi 0, %s118
      %s133 = sphi 0, %s119
      %s139 = sphi 0, %s141
      %s142 = sphi 0, %s139
      %s143 = sphi 0, %s142
      %s159 = sphi 0, %s143
    $region4: #{botneck2_forward.5} parent=1 // loop_header_branch
      %17 = sbr.rel (%p15) target = $region8
    $region5: #{botneck2_forward.5} parent=1 // loop_body
      %s19 = ssub.s32 %s14, 1
      %s20 = ssub.s32 %s14, 2
      %s21 = sadd.s32 %s14, 1
      %s22 = ssub.s32 %s14, %s21
      %p23 = scmp.eq.s32.totalorder %s22, 0
      %s25 = sadd.s32 %s24, 1
      %s26 = scalar_select %p23, %s24, %s25
      %p29 = pneg %p23
      %p30 = scmp.eq.s32.totalorder %s14, 1
      %p31 = por %p29, %p30
      %p32 = scmp.ne.s32.totalorder %s24, %s27
      %p33 = scmp.eq.s32.totalorder %s14, 0
      %p34 = por %p32, %p33
      %p35 = scmp.ne.s32.totalorder %s24, %s27
      %p36 = scmp.eq.s32.totalorder %s19, 1
      %p37 = por %p35, %p36
      %p38 = scmp.ne.s32.totalorder %s27, %s28
      %p39 = scmp.eq.s32.totalorder %s19, 0
      %p40 = por %p38, %p39
      %p41 = scmp.ne.s32.totalorder %s27, %s28
      %p42 = scmp.eq.s32.totalorder %s20, 1
      %p43 = por %p41, %p42
      %p45 = scmp.ne.s32.totalorder %s28, %s44
      %p46 = scmp.eq.s32.totalorder %s20, 0
      %p47 = por %p45, %p46
      %s48 = ssub.s32 %s14, %s21
      %p49 = scmp.eq.s32.totalorder %s48, 0
      %s51 = sadd.s32 %s50, 1
      %s52 = scalar_select %p49, %s50, %s51
      %p55 = pneg %p49
      %p56 = scmp.eq.s32.totalorder %s14, 1
      %p57 = por %p55, %p56
      %p58 = scmp.ne.s32.totalorder %s50, %s53
      %p59 = scmp.eq.s32.totalorder %s14, 0
      %p60 = por %p58, %p59
      %p61 = scmp.ne.s32.totalorder %s50, %s53
      %p62 = scmp.eq.s32.totalorder %s19, 1
      %p63 = por %p61, %p62
      %p64 = scmp.ne.s32.totalorder %s53, %s54
      %p65 = scmp.eq.s32.totalorder %s19, 0
      %p66 = por %p64, %p65
      %p67 = scmp.ne.s32.totalorder %s53, %s54
      %p68 = scmp.eq.s32.totalorder %s20, 1
      %p69 = por %p67, %p68
      %p71 = scmp.ne.s32.totalorder %s54, %s70
      %p72 = scmp.eq.s32.totalorder %s20, 0
      %p73 = por %p71, %p72
      %s75 = sadd.s32 %s74, 1
      %p78 = scmp.eq.s32.totalorder %s14, 1
      %p79 = scmp.ne.s32.totalorder %s74, %s76
      %p80 = scmp.eq.s32.totalorder %s14, 0
      %p81 = por %p79, %p80
      %p82 = scmp.ne.s32.totalorder %s74, %s76
      %p83 = scmp.eq.s32.totalorder %s19, 1
      %p84 = por %p82, %p83
      %p85 = scmp.ne.s32.totalorder %s76, %s77
      %p86 = scmp.eq.s32.totalorder %s19, 0
      %p87 = por %p85, %p86
      %p88 = scmp.ne.s32.totalorder %s76, %s77
      %p89 = scmp.eq.s32.totalorder %s20, 1
      %p90 = por %p88, %p89
      %p92 = scmp.ne.s32.totalorder %s77, %s91
      %p93 = scmp.eq.s32.totalorder %s20, 0
      %p94 = por %p92, %p93
      %s96 = sadd.s32 %s95, 1
      %p99 = scmp.eq.s32.totalorder %s14, 1
      %p100 = scmp.ne.s32.totalorder %s95, %s97
      %p101 = scmp.eq.s32.totalorder %s14, 0
      %p102 = por %p100, %p101
      %p103 = scmp.ne.s32.totalorder %s95, %s97
      %p104 = scmp.eq.s32.totalorder %s19, 1
      %p105 = por %p103, %p104
      %p106 = scmp.ne.s32.totalorder %s97, %s98
      %p107 = scmp.eq.s32.totalorder %s19, 0
      %p108 = por %p106, %p107
      %p109 = scmp.ne.s32.totalorder %s97, %s98
      %p110 = scmp.eq.s32.totalorder %s20, 1
      %p111 = por %p109, %p110
      %p113 = scmp.ne.s32.totalorder %s98, %s112
      %p114 = scmp.eq.s32.totalorder %s20, 0
      %p115 = por %p113, %p114
      %s117 = sadd.s32 %s116, 1
      %p120 = scmp.eq.s32.totalorder %s14, 1
      %p121 = scmp.ne.s32.totalorder %s116, %s118
      %p122 = scmp.eq.s32.totalorder %s14, 0
      %p123 = por %p121, %p122
      %p124 = scmp.ne.s32.totalorder %s116, %s118
      %p125 = scmp.eq.s32.totalorder %s19, 1
      %p126 = por %p124, %p125
      %p127 = scmp.ne.s32.totalorder %s118, %s119
      %p128 = scmp.eq.s32.totalorder %s19, 0
      %p129 = por %p127, %p128
      %p130 = scmp.ne.s32.totalorder %s118, %s119
      %p131 = scmp.eq.s32.totalorder %s20, 1
      %p132 = por %p130, %p131
      %p134 = scmp.ne.s32.totalorder %s119, %s133
      %p135 = scmp.eq.s32.totalorder %s20, 0
      %p136 = por %p134, %p135
      %s137 = ssub.s32 %s14, %s21
      %p138 = scmp.eq.s32.totalorder %s137, 0
      %s140 = sadd.s32 %s139, 1
      %s141 = scalar_select %p138, %s139, %s140
      %p144 = pneg %p138
      %p145 = scmp.eq.s32.totalorder %s14, 1
      %p146 = por %p144, %p145
      %p147 = scmp.ne.s32.totalorder %s139, %s142
      %p148 = scmp.eq.s32.totalorder %s14, 0
      %p149 = por %p147, %p148
      %p150 = scmp.ne.s32.totalorder %s139, %s142
      %p151 = scmp.eq.s32.totalorder %s19, 1
      %p152 = por %p150, %p151
      %p153 = scmp.ne.s32.totalorder %s142, %s143
      %p154 = scmp.eq.s32.totalorder %s19, 0
      %p155 = por %p153, %p154
      %p156 = scmp.ne.s32.totalorder %s142, %s143
      %p157 = scmp.eq.s32.totalorder %s20, 1
      %p158 = por %p156, %p157
      %p160 = scmp.ne.s32.totalorder %s143, %s159
      %p161 = scmp.eq.s32.totalorder %s20, 0
      %p162 = por %p160, %p161
      %p163 = scmp.le.s32.totalorder 1, %s14
      %p164 = scmp.lt.s32.totalorder %s14, 3
      %p165 = pnand %p163, %p164
      %p166 = pneg %p165
      // Predicated region
      $region9: #{botneck2_forward.5} parent=5 // pred_check
        _
      $region10: #{botneck2_forward.5} parent=5 // pred_check_branch
        %168 = sbr.rel (%p165) target = $region12
      $region11: #{botneck2_forward.5} parent=5 // pred_region
        %s169 = ssub.s32 %s14, 1
        // Predicated region
        $region13: #{botneck2_forward.5} parent=11 // pred_check
          %p170 = pneg %p87
        $region14: #{botneck2_forward.5} parent=11 // pred_check_branch
          %172 = sbr.rel (%p170) target = $region16
        $region15: #{botneck2_forward.5} parent=11 // pred_region
          _
        $region16: #{botneck2_forward.5} parent=11 // pred_fallthru
          _
        // Predicated region
        $region17: #{botneck2_forward.5} parent=11 // pred_check
          %p173 = pneg %p108
        $region18: #{botneck2_forward.5} parent=11 // pred_check_branch
          %175 = sbr.rel (%p173) target = $region20
        $region19: #{botneck2_forward.5} parent=11 // pred_region
          _
        $region20: #{botneck2_forward.5} parent=11 // pred_fallthru
          _
        // Predicated region
        $region21: #{botneck2_forward.5} parent=11 // pred_check
          %p176 = pneg %p129
        $region22: #{botneck2_forward.5} parent=11 // pred_check_branch
          %178 = sbr.rel (%p176) target = $region24
        $region23: #{botneck2_forward.5} parent=11 // pred_region
          _
        $region24: #{botneck2_forward.5} parent=11 // pred_fallthru
          _
      $region12: #{botneck2_forward.5} parent=5 // pred_fallthru
        _
      %p179 = scmp.lt.s32.totalorder %s14, 2
      // Predicated region
      $region25: #{botneck2_forward.5} parent=5 // pred_check
        %p180 = pneg %p179
      $region26: #{botneck2_forward.5} parent=5 // pred_check_branch
        %182 = sbr.rel (%p180) target = $region28
      $region27: #{botneck2_forward.5} parent=5 // pred_region
        // Predicated region
        $region29: #{botneck2_forward.5} parent=27 // pred_check
          %p183 = pneg %p34
        $region30: #{botneck2_forward.5} parent=27 // pred_check_branch
          %185 = sbr.rel (%p183) target = $region32
        $region31: #{botneck2_forward.5} parent=27 // pred_region
          %s186 = smul.u32 2, %s14
          %p187 = scmp.lt.s32.totalorder %s186, 3
          %s188 = scalar_select %p187, %s186, 3
          %s189 = smul.addr %s188, 4
          %s190 = scalar_lea.vmem %s0, %s189
          %s191 = smul.u32 2, %s14
        $region32: #{botneck2_forward.5} parent=27 // pred_fallthru
          _
        // Predicated region
        $region33: #{botneck2_forward.5} parent=27 // pred_check
          %p192 = pneg %p60
        $region34: #{botneck2_forward.5} parent=27 // pred_check_branch
          %194 = sbr.rel (%p192) target = $region36
        $region35: #{botneck2_forward.5} parent=27 // pred_region
          %s195 = smul.u32 2, %s14
          %p196 = scmp.lt.s32.totalorder %s195, 3
          %s197 = scalar_select %p196, %s195, 3
          %s198 = smul.addr %s197, 4
          %s199 = scalar_lea.vmem %s1, %s198
          %s200 = smul.u32 2, %s14
        $region36: #{botneck2_forward.5} parent=27 // pred_fallthru
          _
      $region28: #{botneck2_forward.5} parent=5 // pred_fallthru
        _
      %p201 = scmp.le.s32.totalorder 1, %s14
      %p202 = scmp.lt.s32.totalorder %s14, 3
      %p203 = pnand %p201, %p202
      %p204 = pneg %p203
      // Predicated region
      $region37: #{botneck2_forward.5} parent=5 // pred_check
        _
      $region38: #{botneck2_forward.5} parent=5 // pred_check_branch
        %206 = sbr.rel (%p203) target = $region40
      $region39: #{botneck2_forward.5} parent=5 // pred_region
        %s207 = ssub.s32 %s14, 1
        %s208 = smul.u32 2, %s19
        %p209 = scmp.lt.s32.totalorder %s208, 3
        %s210 = scalar_select %p209, %s208, 3
        %s211 = smul.addr %s210, 4
        %s212 = scalar_lea.vmem %s0, %s211
        %p213 = pneg %p40
        %p214 = pneg %p37
        %s215 = smul.u32 2, %s19
        %p216 = scmp.lt.s32.totalorder %s215, 3
        %s217 = scalar_select %p216, %s215, 3
        %s218 = smul.addr %s217, 4
        %s219 = scalar_lea.vmem %s1, %s218
        %p220 = pneg %p66
        %p221 = pneg %p63
        %p222 = pneg %p87
        %p223 = pneg %p84
        %p224 = pneg %p108
        %p225 = pneg %p105
        %p226 = pneg %p129
        %p227 = pneg %p126
        %p228 = pneg %p155
        %p229 = pneg %p152
        %s230 = sand.u32 %s142, 1
        %s231 = scalar_lea.sflag [#allocation3], %s230
        %s232 = sand.u32 %s142, 1
        %s233 = smul.addr %s232, 16
        %s234 = scalar_lea.vmem [#allocation2], %s233
        %s235 = smul.u32 2, %s19
        %p236 = scmp.lt.s32.totalorder %s235, 3
        %s237 = scalar_select %p236, %s235, 3
        %s238 = smul.addr %s237, 4
        %s239 = scalar_lea.vmem %s0, %s238
        %s240 = smul.u32 2, %s19
        %s241 = smul.u32 2, %s19
        %p242 = scmp.lt.s32.totalorder %s241, 3
        %s243 = scalar_select %p242, %s241, 3
        %s244 = smul.addr %s243, 4
        %s245 = scalar_lea.vmem %s1, %s244
        %s246 = smul.u32 2, %s19
        %s247 = smul.u32 2, %s19
        %v248 = vld [vmem:[%s239] sm:$0xf]
        %v249 = vld [vmem:[%s239 + $0x4] sm:$0xf]
        %v250 = vunpack.c.l.bf16 %v248
        %v251 = vunpack.c.l.bf16 %v249
        %v252 = vld [vmem:[%s2] sm:$0x1]
        %v254 = vlaneseq
        %v255 = vshrl.u32 %v254, 7
        %v256 = vsub.s32 0, %v255
        %v257 = vrot.slane %v252, %v256
        %v259 = vmul.f32 %v250, %v257
        %v260 = vmul.f32 %v251, %v257
        %v261 = vld [vmem:[%s245] sm:$0xf]
        %v262 = vld [vmem:[%s245 + $0x4] sm:$0xf]
        %v263 = vunpack.c.l.bf16 %v261
        %v264 = vunpack.c.l.bf16 %v262
        %v265 = vld [vmem:[%s3] sm:$0x1]
        %v267 = vlaneseq
        %v268 = vshrl.u32 %v267, 7
        %v269 = vsub.s32 0, %v268
        %v270 = vrot.slane %v265, %v269
        %v272 = vmul.f32 %v263, %v270
        %v273 = vmul.f32 %v264, %v270
        %v274 = vadd.f32 %v259, %v272
        %v275 = vadd.f32 %v260, %v273
        %v276 = vld [vmem:[%s4] sm:$0x1]
        %v278 = vlaneseq
        %v279 = vshrl.u32 %v278, 7
        %v280 = vsub.s32 0, %v279
        %v281 = vrot.slane %v276, %v280
        %v283 = vadd.f32 %v274, %v281
        %v284 = vadd.f32 %v275, %v281
        %v285 = vmax.f32 %v283, 0.0
        %v286 = vmax.f32 %v284, 0.0
        %vm287 = vcmask 261120
        %288 = vst.msk [vmem:[%s234] sm:$0xff] %vm287, %v285
        %289 = vst.msk [vmem:[%s234 + $0x8] sm:$0xff] %vm287, %v286
        %s290 = sand.u32 %s142, 1
        %s291 = scalar_lea.sflag [#allocation3], %s290
        %s292 = sand.u32 %s142, 1
        %s293 = smul.addr %s292, 16
        %s294 = scalar_lea.vmem [#allocation2], %s293
        // Predicated region
        $region41: #{botneck2_forward.5} parent=39 // pred_check
          %p295 = pneg %p152
        $region42: #{botneck2_forward.5} parent=39 // pred_check_branch
          %297 = sbr.rel (%p295) target = $region44
        $region43: #{botneck2_forward.5} parent=39 // pred_region
          %s298 = smul.u32 2, %s19
          %s300 = ssub.s32 256, 256
          %301 = vsyncadd %s291, %s300
          %s302 = smul.addr %s298, 128
          %s303 = scalar_lea.hbm %s5, %s302
          %s304 = sshll.u32 %s294, 4
          %s305 = int_to_ptr.vmem [resolvable:$true] %s304
          %310 = dma.vmem_to_hbm [thread:$0]  %s305, 256, %s303, %s291, 128, 128, 8
        $region44: #{botneck2_forward.5} parent=39 // pred_fallthru
          _
      $region40: #{botneck2_forward.5} parent=5 // pred_fallthru
        _
      %p311 = scmp.le.s32.totalorder 2, %s14
      // Predicated region
      $region45: #{botneck2_forward.5} parent=5 // pred_check
        %p312 = pneg %p311
      $region46: #{botneck2_forward.5} parent=5 // pred_check_branch
        %314 = sbr.rel (%p312) target = $region48
      $region47: #{botneck2_forward.5} parent=5 // pred_region
        %s315 = ssub.s32 %s14, 2
        // Predicated region
        $region49: #{botneck2_forward.5} parent=47 // pred_check
          %p316 = pneg %p158
        $region50: #{botneck2_forward.5} parent=47 // pred_check_branch
          %318 = sbr.rel (%p316) target = $region52
        $region51: #{botneck2_forward.5} parent=47 // pred_region
          %s319 = sand.u32 %s143, 1
          %s320 = scalar_lea.sflag [#allocation3], %s319
          %s321 = sand.u32 %s143, 1
          %s322 = smul.addr %s321, 16
          %s323 = scalar_lea.vmem [#allocation2], %s322
          %324 = dma.done %s320, 256
        $region52: #{botneck2_forward.5} parent=47 // pred_fallthru
          _
      $region48: #{botneck2_forward.5} parent=5 // pred_fallthru
        _
    $region6: #{botneck2_forward.5} parent=1 // loop_footer
      %s18 = sadd.s32 1, %s14
    $region7: #{botneck2_forward.5} parent=1 // loop_footer_branch
      %13 = sbr.rel target = $region3
    $region8: #{botneck2_forward.5} parent=1 // loop_exit
      _
    %325 = vsyncpa [#allocation3], 1
    %s326 = scalar_lea.sflag [#allocation3], 1
    %327 = vsyncpa %s326, 1

// kernel: botneck2_forward.4
$region0: #{botneck2_forward.4}
  #allocation0 [shape = 'u32[]', space=smem, size = 0x4, offset = 0x4, fixed_abs, tag = 'smem constant byte address 0x4 - core index']
  #allocation1 [shape = 'u32[144,128]{1,0:T(1,128)}', space=vmem, size = 0x12000, scoped, tag = 'internal scratch']
  %s0 = inlined_call_operand.vmem [shape: bf16[2,16,32], index: 0, kind: input, shape index: {}]
  %s1 = inlined_call_operand.vmem [shape: f32[1,32], index: 1, kind: input, shape index: {}]
  %s2 = inlined_call_operand.vmem [shape: f32[1,32], index: 2, kind: input, shape index: {}]
  %s3 = inlined_call_operand.vmem [shape: bf16[32,96], index: 3, kind: input, shape index: {}]
  %s4 = inlined_call_operand.vmem [shape: f32[1,96], index: 4, kind: input, shape index: {}]
  %s5 = inlined_call_operand.vmem [shape: bf16[16,32], index: 5, kind: input, shape index: {}]
  %s6 = inlined_call_operand.vmem [shape: bf16[2,16,32], index: 6, kind: output, shape index: {0}]
  %s7 = inlined_call_operand.vmem [shape: f32[2,2,32], index: 7, kind: output, shape index: {1}]
  %8 = xla_tuple %s6, %s7
  %s9 = sld [smem:[#allocation0]]
  $region65: #{botneck2_forward.4} parent=0
    _
  %s11 = ssub.s32 1, %s9
  %s12 = scalar_select 0, %s11, %s9
  loop: start=0, step=1, limit=4
  $region2: #{botneck2_forward.4} parent=0 // loop_pre_header
    _
  $region3: #{botneck2_forward.4} parent=0 // loop_header
    %s14 = sphi 0, %s18
    %p15 = scmp.ge.s32.totalorder %s14, 4
    %s24 = sphi 0, %s26
    %s27 = sphi 0, %s24
    %s28 = sphi 0, %s27
    %s44 = sphi 0, %s28
    %s48 = sphi 0, %s48
    %s50 = sphi 0, %s48
    %s51 = sphi 0, %s50
    %s65 = sphi 0, %s51
    %s69 = sphi 0, %s69
    %s71 = sphi 0, %s69
    %s72 = sphi 0, %s71
    %s86 = sphi 0, %s72
    %s90 = sphi 0, %s90
    %s92 = sphi 0, %s90
    %s93 = sphi 0, %s92
    %s107 = sphi 0, %s93
    %s111 = sphi 0, %s111
    %s113 = sphi 0, %s111
    %s114 = sphi 0, %s113
    %s128 = sphi 0, %s114
    %s132 = sphi 0, %s132
    %s134 = sphi 0, %s132
    %s135 = sphi 0, %s134
    %s149 = sphi 0, %s135
    %s155 = sphi 0, %s157
    %s158 = sphi 0, %s155
    %s159 = sphi 0, %s158
    %s175 = sphi 0, %s159
    %s181 = sphi 0, %s183
    %s184 = sphi 0, %s181
    %s185 = sphi 0, %s184
    %s201 = sphi 0, %s185
  $region4: #{botneck2_forward.4} parent=0 // loop_header_branch
    %17 = sbr.rel (%p15) target = $region8
  $region5: #{botneck2_forward.4} parent=0 // loop_body
    %s19 = ssub.s32 %s14, 1
    %s20 = ssub.s32 %s14, 2
    %s21 = sadd.s32 %s14, 1
    %s22 = ssub.s32 %s14, %s21
    %p23 = scmp.eq.s32.totalorder %s22, 0
    %s25 = sadd.s32 %s24, 1
    %s26 = scalar_select %p23, %s24, %s25
    %p29 = pneg %p23
    %p30 = scmp.eq.s32.totalorder %s14, 1
    %p31 = por %p29, %p30
    %p32 = scmp.ne.s32.totalorder %s24, %s27
    %p33 = scmp.eq.s32.totalorder %s14, 0
    %p34 = por %p32, %p33
    %p35 = scmp.ne.s32.totalorder %s24, %s27
    %p36 = scmp.eq.s32.totalorder %s19, 1
    %p37 = por %p35, %p36
    %p38 = scmp.ne.s32.totalorder %s27, %s28
    %p39 = scmp.eq.s32.totalorder %s19, 0
    %p40 = por %p38, %p39
    %p41 = scmp.ne.s32.totalorder %s27, %s28
    %p42 = scmp.eq.s32.totalorder %s20, 1
    %p43 = por %p41, %p42
    %p45 = scmp.ne.s32.totalorder %s28, %s44
    %p46 = scmp.eq.s32.totalorder %s20, 0
    %p47 = por %p45, %p46
    %s49 = sadd.s32 %s48, 1
    %p52 = scmp.eq.s32.totalorder %s14, 1
    %p53 = scmp.ne.s32.totalorder %s48, %s50
    %p54 = scmp.eq.s32.totalorder %s14, 0
    %p55 = por %p53, %p54
    %p56 = scmp.ne.s32.totalorder %s48, %s50
    %p57 = scmp.eq.s32.totalorder %s19, 1
    %p58 = por %p56, %p57
    %p59 = scmp.ne.s32.totalorder %s50, %s51
    %p60 = scmp.eq.s32.totalorder %s19, 0
    %p61 = por %p59, %p60
    %p62 = scmp.ne.s32.totalorder %s50, %s51
    %p63 = scmp.eq.s32.totalorder %s20, 1
    %p64 = por %p62, %p63
    %p66 = scmp.ne.s32.totalorder %s51, %s65
    %p67 = scmp.eq.s32.totalorder %s20, 0
    %p68 = por %p66, %p67
    %s70 = sadd.s32 %s69, 1
    %p73 = scmp.eq.s32.totalorder %s14, 1
    %p74 = scmp.ne.s32.totalorder %s69, %s71
    %p75 = scmp.eq.s32.totalorder %s14, 0
    %p76 = por %p74, %p75
    %p77 = scmp.ne.s32.totalorder %s69, %s71
    %p78 = scmp.eq.s32.totalorder %s19, 1
    %p79 = por %p77, %p78
    %p80 = scmp.ne.s32.totalorder %s71, %s72
    %p81 = scmp.eq.s32.totalorder %s19, 0
    %p82 = por %p80, %p81
    %p83 = scmp.ne.s32.totalorder %s71, %s72
    %p84 = scmp.eq.s32.totalorder %s20, 1
    %p85 = por %p83, %p84
    %p87 = scmp.ne.s32.totalorder %s72, %s86
    %p88 = scmp.eq.s32.totalorder %s20, 0
    %p89 = por %p87, %p88
    %s91 = sadd.s32 %s90, 1
    %p94 = scmp.eq.s32.totalorder %s14, 1
    %p95 = scmp.ne.s32.totalorder %s90, %s92
    %p96 = scmp.eq.s32.totalorder %s14, 0
    %p97 = por %p95, %p96
    %p98 = scmp.ne.s32.totalorder %s90, %s92
    %p99 = scmp.eq.s32.totalorder %s19, 1
    %p100 = por %p98, %p99
    %p101 = scmp.ne.s32.totalorder %s92, %s93
    %p102 = scmp.eq.s32.totalorder %s19, 0
    %p103 = por %p101, %p102
    %p104 = scmp.ne.s32.totalorder %s92, %s93
    %p105 = scmp.eq.s32.totalorder %s20, 1
    %p106 = por %p104, %p105
    %p108 = scmp.ne.s32.totalorder %s93, %s107
    %p109 = scmp.eq.s32.totalorder %s20, 0
    %p110 = por %p108, %p109
    %s112 = sadd.s32 %s111, 1
    %p115 = scmp.eq.s32.totalorder %s14, 1
    %p116 = scmp.ne.s32.totalorder %s111, %s113
    %p117 = scmp.eq.s32.totalorder %s14, 0
    %p118 = por %p116, %p117
    %p119 = scmp.ne.s32.totalorder %s111, %s113
    %p120 = scmp.eq.s32.totalorder %s19, 1
    %p121 = por %p119, %p120
    %p122 = scmp.ne.s32.totalorder %s113, %s114
    %p123 = scmp.eq.s32.totalorder %s19, 0
    %p124 = por %p122, %p123
    %p125 = scmp.ne.s32.totalorder %s113, %s114
    %p126 = scmp.eq.s32.totalorder %s20, 1
    %p127 = por %p125, %p126
    %p129 = scmp.ne.s32.totalorder %s114, %s128
    %p130 = scmp.eq.s32.totalorder %s20, 0
    %p131 = por %p129, %p130
    %s133 = sadd.s32 %s132, 1
    %p136 = scmp.eq.s32.totalorder %s14, 1
    %p137 = scmp.ne.s32.totalorder %s132, %s134
    %p138 = scmp.eq.s32.totalorder %s14, 0
    %p139 = por %p137, %p138
    %p140 = scmp.ne.s32.totalorder %s132, %s134
    %p141 = scmp.eq.s32.totalorder %s19, 1
    %p142 = por %p140, %p141
    %p143 = scmp.ne.s32.totalorder %s134, %s135
    %p144 = scmp.eq.s32.totalorder %s19, 0
    %p145 = por %p143, %p144
    %p146 = scmp.ne.s32.totalorder %s134, %s135
    %p147 = scmp.eq.s32.totalorder %s20, 1
    %p148 = por %p146, %p147
    %p150 = scmp.ne.s32.totalorder %s135, %s149
    %p151 = scmp.eq.s32.totalorder %s20, 0
    %p152 = por %p150, %p151
    %s153 = ssub.s32 %s14, %s21
    %p154 = scmp.eq.s32.totalorder %s153, 0
    %s156 = sadd.s32 %s155, 1
    %s157 = scalar_select %p154, %s155, %s156
    %p160 = pneg %p154
    %p161 = scmp.eq.s32.totalorder %s14, 1
    %p162 = por %p160, %p161
    %p163 = scmp.ne.s32.totalorder %s155, %s158
    %p164 = scmp.eq.s32.totalorder %s14, 0
    %p165 = por %p163, %p164
    %p166 = scmp.ne.s32.totalorder %s155, %s158
    %p167 = scmp.eq.s32.totalorder %s19, 1
    %p168 = por %p166, %p167
    %p169 = scmp.ne.s32.totalorder %s158, %s159
    %p170 = scmp.eq.s32.totalorder %s19, 0
    %p171 = por %p169, %p170
    %p172 = scmp.ne.s32.totalorder %s158, %s159
    %p173 = scmp.eq.s32.totalorder %s20, 1
    %p174 = por %p172, %p173
    %p176 = scmp.ne.s32.totalorder %s159, %s175
    %p177 = scmp.eq.s32.totalorder %s20, 0
    %p178 = por %p176, %p177
    %s179 = ssub.s32 %s14, %s21
    %p180 = scmp.eq.s32.totalorder %s179, 0
    %s182 = sadd.s32 %s181, 1
    %s183 = scalar_select %p180, %s181, %s182
    %p186 = pneg %p180
    %p187 = scmp.eq.s32.totalorder %s14, 1
    %p188 = por %p186, %p187
    %p189 = scmp.ne.s32.totalorder %s181, %s184
    %p190 = scmp.eq.s32.totalorder %s14, 0
    %p191 = por %p189, %p190
    %p192 = scmp.ne.s32.totalorder %s181, %s184
    %p193 = scmp.eq.s32.totalorder %s19, 1
    %p194 = por %p192, %p193
    %p195 = scmp.ne.s32.totalorder %s184, %s185
    %p196 = scmp.eq.s32.totalorder %s19, 0
    %p197 = por %p195, %p196
    %p198 = scmp.ne.s32.totalorder %s184, %s185
    %p199 = scmp.eq.s32.totalorder %s20, 1
    %p200 = por %p198, %p199
    %p202 = scmp.ne.s32.totalorder %s185, %s201
    %p203 = scmp.eq.s32.totalorder %s20, 0
    %p204 = por %p202, %p203
    %p205 = scmp.le.s32.totalorder 1, %s14
    %p206 = scmp.lt.s32.totalorder %s14, 3
    %p207 = pnand %p205, %p206
    %p208 = pneg %p207
    // Predicated region
    $region9: #{botneck2_forward.4} parent=5 // pred_check
      _
    $region10: #{botneck2_forward.4} parent=5 // pred_check_branch
      %210 = sbr.rel (%p207) target = $region12
    $region11: #{botneck2_forward.4} parent=5 // pred_region
      %s211 = ssub.s32 %s14, 1
      // Predicated region
      $region13: #{botneck2_forward.4} parent=11 // pred_check
        %p212 = pneg %p61
      $region14: #{botneck2_forward.4} parent=11 // pred_check_branch
        %214 = sbr.rel (%p212) target = $region16
      $region15: #{botneck2_forward.4} parent=11 // pred_region
        _
      $region16: #{botneck2_forward.4} parent=11 // pred_fallthru
        _
      // Predicated region
      $region17: #{botneck2_forward.4} parent=11 // pred_check
        %p215 = pneg %p82
      $region18: #{botneck2_forward.4} parent=11 // pred_check_branch
        %217 = sbr.rel (%p215) target = $region20
      $region19: #{botneck2_forward.4} parent=11 // pred_region
        _
      $region20: #{botneck2_forward.4} parent=11 // pred_fallthru
        _
      // Predicated region
      $region21: #{botneck2_forward.4} parent=11 // pred_check
        %p218 = pneg %p103
      $region22: #{botneck2_forward.4} parent=11 // pred_check_branch
        %220 = sbr.rel (%p218) target = $region24
      $region23: #{botneck2_forward.4} parent=11 // pred_region
        _
      $region24: #{botneck2_forward.4} parent=11 // pred_fallthru
        _
      // Predicated region
      $region25: #{botneck2_forward.4} parent=11 // pred_check
        %p221 = pneg %p124
      $region26: #{botneck2_forward.4} parent=11 // pred_check_branch
        %223 = sbr.rel (%p221) target = $region28
      $region27: #{botneck2_forward.4} parent=11 // pred_region
        _
      $region28: #{botneck2_forward.4} parent=11 // pred_fallthru
        _
      // Predicated region
      $region29: #{botneck2_forward.4} parent=11 // pred_check
        %p224 = pneg %p145
      $region30: #{botneck2_forward.4} parent=11 // pred_check_branch
        %226 = sbr.rel (%p224) target = $region32
      $region31: #{botneck2_forward.4} parent=11 // pred_region
        _
      $region32: #{botneck2_forward.4} parent=11 // pred_fallthru
        _
    $region12: #{botneck2_forward.4} parent=5 // pred_fallthru
      _
    %p227 = scmp.lt.s32.totalorder %s14, 2
    // Predicated region
    $region33: #{botneck2_forward.4} parent=5 // pred_check
      %p228 = pneg %p227
    $region34: #{botneck2_forward.4} parent=5 // pred_check_branch
      %230 = sbr.rel (%p228) target = $region36
    $region35: #{botneck2_forward.4} parent=5 // pred_region
      // Predicated region
      $region37: #{botneck2_forward.4} parent=35 // pred_check
        %p231 = pneg %p34
      $region38: #{botneck2_forward.4} parent=35 // pred_check_branch
        %233 = sbr.rel (%p231) target = $region40
      $region39: #{botneck2_forward.4} parent=35 // pred_region
        %p234 = scmp.lt.s32.totalorder %s14, 1
        %s235 = scalar_select %p234, %s14, 1
        %s236 = smul.addr %s235, 2
        %s237 = smul.addr %s236, 4
        %s238 = scalar_lea.vmem %s0, %s237
      $region40: #{botneck2_forward.4} parent=35 // pred_fallthru
        _
    $region36: #{botneck2_forward.4} parent=5 // pred_fallthru
      _
    %p239 = scmp.le.s32.totalorder 1, %s14
    %p240 = scmp.lt.s32.totalorder %s14, 3
    %p241 = pnand %p239, %p240
    %p242 = pneg %p241
    // Predicated region
    $region41: #{botneck2_forward.4} parent=5 // pred_check
      _
    $region42: #{botneck2_forward.4} parent=5 // pred_check_branch
      %244 = sbr.rel (%p241) target = $region44
    $region43: #{botneck2_forward.4} parent=5 // pred_region
      %s245 = ssub.s32 %s14, 1
      %p246 = scmp.lt.s32.totalorder %s19, 1
      %s247 = scalar_select %p246, %s19, 1
      %s248 = smul.addr %s247, 2
      %s249 = smul.addr %s248, 4
      %s250 = scalar_lea.vmem %s0, %s249
      %p251 = pneg %p40
      %p252 = pneg %p37
      %p253 = pneg %p61
      %p254 = pneg %p58
      %p255 = pneg %p82
      %p256 = pneg %p79
      %p257 = pneg %p103
      %p258 = pneg %p100
      %p259 = pneg %p124
      %p260 = pneg %p121
      %p261 = pneg %p145
      %p262 = pneg %p142
      %p263 = pneg %p171
      %p264 = pneg %p168
      %p265 = scmp.lt.s32.totalorder %s19, 1
      %s266 = scalar_select %p265, %s19, 1
      %s267 = smul.addr %s266, 2
      %s268 = smul.addr %s267, 4
      %s269 = scalar_lea.vmem %s6, %s268
      %p270 = pneg %p197
      %p271 = pneg %p194
      %p272 = scmp.lt.s32.totalorder %s19, 1
      %s273 = scalar_select %p272, %s19, 1
      %s274 = smul.addr %s273, 2
      %s275 = scalar_lea.vmem %s7, %s274
      %p276 = scmp.lt.s32.totalorder %s19, 1
      %s277 = scalar_select %p276, %s19, 1
      %s278 = smul.addr %s277, 2
      %s279 = smul.addr %s278, 4
      %s280 = scalar_lea.vmem %s0, %s279
      %p281 = scmp.lt.s32.totalorder %s19, 1
      %s282 = scalar_select %p281, %s19, 1
      %s283 = smul.addr %s282, 2
      %s284 = smul.addr %s283, 4
      %s285 = scalar_lea.vmem %s6, %s284
      %p286 = scmp.lt.s32.totalorder %s19, 1
      %s287 = scalar_select %p286, %s19, 1
      %s288 = smul.addr %s287, 2
      %s289 = scalar_lea.vmem %s7, %s288
      %v291 = vld [vmem:[%s280] sm:$0xf]
      %v292 = vld [vmem:[%s280 + $0x4] sm:$0xf]
      %v293 = vunpack.c.l.bf16 %v291
      %v294 = vunpack.c.l.bf16 %v292
      %v295 = vld [vmem:[%s1] sm:$0x1]
      %v297 = vlaneseq
      %v298 = vshrl.u32 %v297, 7
      %v299 = vsub.s32 0, %v298
      %v300 = vrot.slane %v295, %v299
      %v302 = vmul.f32 %v293, %v300
      %v303 = vmul.f32 %v294, %v300
      %v304 = vld [vmem:[%s2] sm:$0x1]
      %v306 = vlaneseq
      %v307 = vshrl.u32 %v306, 7
      %v308 = vsub.s32 0, %v307
      %v309 = vrot.slane %v304, %v308
      %v311 = vadd.f32 %v302, %v309
      %v312 = vadd.f32 %v303, %v309
      %v313 = vmax.f32 %v311, 0.0
      %v314 = vmax.f32 %v312, 0.0
      %v315 = vpack.c.bf16 %v314, %v313
      %v316 = vld [vmem:[%s3] sm:$0xf]
      %v317 = vld [vmem:[%s3 + $0x4] sm:$0xf]
      %v318 = vld [vmem:[%s3 + $0x8] sm:$0xf]
      %v319 = vld [vmem:[%s3 + $0xc] sm:$0xf]
      %v320 = vld [vmem:[%s4] sm:$0x1]
      %v322 = vlaneseq
      %v323 = vshrl.u32 %v322, 7
      %v324 = vsub.s32 0, %v323
      %v325 = vrot.slane %v320, %v324
      %v331 = vunpack.c.l.b16 %v316
      %v332 = vunpack.c.l.b16 %v317
      %v333 = vunpack.c.l.b16 %v318
      %v334 = vunpack.c.l.b16 %v319
      %v335 = vpack.c.b16 %v332, %v331
      %v336 = vpack.c.b16 %v334, %v333
      %vm339 = vcmask 261120
      %v341 = vsel %vm339, %v315, 0
      %343 = vmatprep.subr.bf16.mxu0 0
      %344 = vmatpush1.bf16.msra.mxu0 0
      %345 = vmatprep.subr.bf16.mxu0 0
      %346 = vmatpush1.bf16.msra.mxu0 0
      %347 = vmatprep.subr.bf16.mxu0 0
      %348 = vmatpush1.bf16.msra.mxu0 0
      %349 = vmatprep.subr.bf16.mxu0 0
      %350 = vmatpush1.bf16.msra.mxu0 0
      %351 = vmatprep.subr.bf16.mxu0 0
      %352 = vmatpush1.bf16.msra.mxu0 0
      %353 = vmatprep.subr.bf16.mxu0 0
      %354 = vmatpush1.bf16.msra.mxu0 0
      %355 = vmatprep.subr.bf16.mxu0 0
      %356 = vmatpush1.bf16.msra.mxu0 %v336
      %357 = vmatprep.subr.bf16.mxu0 0
      %358 = vmatpush1.bf16.msra.mxu0 %v335
      %359 = vmatprep.subr.bf16.mxu0 0
      %360 = vmatpush2.bf16.msra.mxu0 0
      %361 = vmatprep.subr.bf16.mxu0 0
      %362 = vmatpush2.bf16.msra.mxu0 0
      %363 = vmatprep.subr.bf16.mxu0 0
      %364 = vmatpush2.bf16.msra.mxu0 0
      %365 = vmatprep.subr.bf16.mxu0 0
      %366 = vmatpush2.bf16.msra.mxu0 0
      %367 = vmatprep.subr.bf16.mxu0 0
      %368 = vmatpush2.bf16.msra.mxu0 0
      %369 = vmatprep.subr.bf16.mxu0 0
      %370 = vmatpush2.bf16.msra.mxu0 0
      %371 = vmatprep.subr.bf16.mxu0 0
      %372 = vmatpush2.bf16.msra.mxu0 0
      %373 = vmatprep.subr.bf16.mxu0 0
      %374 = vmatpush2.bf16.msra.mxu0 0
      %375 = vmatprep.mubr.bf16.mxu0 0
      %376 = vmatmul.mubr.bf16.gmra.mxu0 %v341
      %v377 = vpop.f32.mrf.mxu0
      %v378 = vadd.f32 %v325, %v377
      %v379 = vpop.f32.mrf.mxu0
      %v380 = vpop.f32.mrf.mxu0
      %v381 = vadd.f32 %v325, %v380
      %v382 = vpop.f32.mrf.mxu0
      %383 = vdwg.mxu0
      %v384 = vpack.c.bf16 %v381, %v378
      %v385 = vld [vmem:[%s5] sm:$0xf]
      %v386 = vld [vmem:[%s5 + $0x4] sm:$0xf]
      %v389 = vunpack.c.l.b16 %v385
      %v390 = vunpack.c.l.b16 %v386
      %v391 = vpack.c.b16 %v390, %v389
      %vm392 = vcmask 31744
      %v394 = vsel %vm392, %v391, 0
      %v397 = vsel %vm392, %v384, 0
      %399 = vmatprep.subr.bf16.mxu0 0
      %400 = vmatpush1.bf16.xpose.msra.mxu0 0
      %401 = vmatprep.subr.bf16.mxu0 0
      %402 = vmatpush1.bf16.xpose.msra.mxu0 0
      %403 = vmatprep.subr.bf16.mxu0 0
      %404 = vmatpush1.bf16.xpose.msra.mxu0 0
      %405 = vmatprep.subr.bf16.mxu0 0
      %406 = vmatpush1.bf16.xpose.msra.mxu0 0
      %407 = vmatprep.subr.bf16.mxu0 0
      %408 = vmatpush1.bf16.xpose.msra.mxu0 0
      %409 = vmatprep.subr.bf16.mxu0 0
      %410 = vmatpush1.bf16.xpose.msra.mxu0 0
      %411 = vmatprep.subr.bf16.mxu0 0
      %412 = vmatpush1.bf16.xpose.msra.mxu0 0
      %413 = vmatprep.subr.bf16.mxu0 0
      %414 = vmatpush1.bf16.xpose.msra.mxu0 %v397
      %415 = vmatprep.subr.bf16.mxu0 0
      %416 = vmatpush2.bf16.xpose.msra.mxu0 0
      %417 = vmatprep.subr.bf16.mxu0 0
      %418 = vmatpush2.bf16.xpose.msra.mxu0 0
      %419 = vmatprep.subr.bf16.mxu0 0
      %420 = vmatpush2.bf16.xpose.msra.mxu0 0
      %421 = vmatprep.subr.bf16.mxu0 0
      %422 = vmatpush2.bf16.xpose.msra.mxu0 0
      %423 = vmatprep.subr.bf16.mxu0 0
      %424 = vmatpush2.bf16.xpose.msra.mxu0 0
      %425 = vmatprep.subr.bf16.mxu0 0
      %426 = vmatpush2.bf16.xpose.msra.mxu0 0
      %427 = vmatprep.subr.bf16.mxu0 0
      %428 = vmatpush2.bf16.xpose.msra.mxu0 0
      %429 = vmatprep.subr.bf16.mxu0 0
      %430 = vmatpush2.bf16.xpose.msra.mxu0 0
      %431 = vmatprep.mubr.bf16.mxu0 0
      %432 = vmatmul.mubr.bf16.gmra.mxu0 %v394
      %v433 = vpop.f32.mrf.mxu0
      %v434 = vadd.f32 0.0, %v433
      %v435 = vpop.f32.mrf.mxu0
      %v436 = vpop.f32.mrf.mxu0
      %v437 = vadd.f32 0.0, %v436
      %v438 = vpop.f32.mrf.mxu0
      %439 = vdwg.mxu0
      %441 = vrot.lane.b32.xlu0 %v384, 96
      %v442 = vpop.permute.xlu0 %441
      %v444 = vsel %vm392, %v442, 0
      %446 = vmatprep.subr.bf16.mxu0 0
      %447 = vmatpush1.bf16.xpose.msra.mxu0 0
      %448 = vmatprep.subr.bf16.mxu0 0
      %449 = vmatpush1.bf16.xpose.msra.mxu0 0
      %450 = vmatprep.subr.bf16.mxu0 0
      %451 = vmatpush1.bf16.xpose.msra.mxu0 0
      %452 = vmatprep.subr.bf16.mxu0 0
      %453 = vmatpush1.bf16.xpose.msra.mxu0 0
      %454 = vmatprep.subr.bf16.mxu0 0
      %455 = vmatpush1.bf16.xpose.msra.mxu0 0
      %456 = vmatprep.subr.bf16.mxu0 0
      %457 = vmatpush1.bf16.xpose.msra.mxu0 0
      %458 = vmatprep.subr.bf16.mxu0 0
      %459 = vmatpush1.bf16.xpose.msra.mxu0 0
      %460 = vmatprep.subr.bf16.mxu0 0
      %461 = vmatpush1.bf16.xpose.msra.mxu0 %v444
      %462 = vmatprep.subr.bf16.mxu0 0
      %463 = vmatpush2.bf16.xpose.msra.mxu0 0
      %464 = vmatprep.subr.bf16.mxu0 0
      %465 = vmatpush2.bf16.xpose.msra.mxu0 0
      %466 = vmatprep.subr.bf16.mxu0 0
      %467 = vmatpush2.bf16.xpose.msra.mxu0 0
      %468 = vmatprep.subr.bf16.mxu0 0
      %469 = vmatpush2.bf16.xpose.msra.mxu0 0
      %470 = vmatprep.subr.bf16.mxu0 0
      %471 = vmatpush2.bf16.xpose.msra.mxu0 0
      %472 = vmatprep.subr.bf16.mxu0 0
      %473 = vmatpush2.bf16.xpose.msra.mxu0 0
      %474 = vmatprep.subr.bf16.mxu0 0
      %475 = vmatpush2.bf16.xpose.msra.mxu0 0
      %476 = vmatprep.subr.bf16.mxu0 0
      %477 = vmatpush2.bf16.xpose.msra.mxu0 0
      %478 = vmatprep.mubr.bf16.mxu0 0
      %479 = vmatmul.mubr.bf16.gmra.mxu0 %v397
      %v480 = vpop.f32.mrf.mxu0
      %v481 = vadd.f32 %v434, %v480
      %v482 = vpop.f32.mrf.mxu0
      %v483 = vpop.f32.mrf.mxu0
      %v484 = vadd.f32 %v437, %v483
      %v485 = vpop.f32.mrf.mxu0
      %486 = vdwg.mxu0
      %vm487 = vcmask 130048
      %v488 = vsel %vm487, %v481, -inf
      %489 = vmax.xlane.f32.xlu0 %v488
      %v490 = vpop.xlane.xlu0 %489
      %v491 = vsel %vm487, %v484, -inf
      %492 = vmax.xlane.f32.xlu0 %v491
      %v493 = vpop.xlane.xlu0 %492
      %v494 = vsub.f32 %v481, %v490
      %v495 = vsub.f32 %v484, %v493
      %v496 = vmul.f32 %v494, 1.442695
      %v497 = vpow.pop %v496
      %v498 = vmul.f32 %v495, 1.442695
      %v499 = vpow.pop %v498
      %v500 = vsel %vm487, %v497, 0.0
      %501 = vadd.xlane.f32.xlu0 %v500
      %v502 = vpop.xlane.xlu0 %501
      %v503 = vsel %vm487, %v499, 0.0
      %504 = vadd.xlane.f32.xlu0 %v503
      %v505 = vpop.xlane.xlu0 %504
      %v506 = vrcp.pop %v502
      %v507 = vrcp.pop %v505
      %v508 = vmul.f32 %v497, %v506
      %v509 = vmul.f32 %v499, %v507
      %v510 = vpack.c.bf16 %v509, %v508
      %511 = vrot.lane.b32.xlu0 %v384, 64
      %v512 = vpop.permute.xlu0 %511
      %v515 = vsel %vm487, %v510, 0
      %517 = vmatprep.subr.bf16.mxu0 0
      %518 = vmatpush1.bf16.msra.mxu0 0
      %519 = vmatprep.subr.bf16.mxu0 0
      %520 = vmatpush1.bf16.msra.mxu0 0
      %521 = vmatprep.subr.bf16.mxu0 0
      %522 = vmatpush1.bf16.msra.mxu0 0
      %523 = vmatprep.subr.bf16.mxu0 0
      %524 = vmatpush1.bf16.msra.mxu0 0
      %525 = vmatprep.subr.bf16.mxu0 0
      %526 = vmatpush1.bf16.msra.mxu0 0
      %527 = vmatprep.subr.bf16.mxu0 0
      %528 = vmatpush1.bf16.msra.mxu0 0
      %529 = vmatprep.subr.bf16.mxu0 0
      %530 = vmatpush1.bf16.msra.mxu0 0
      %531 = vmatprep.subr.bf16.mxu0 0
      %532 = vmatpush1.bf16.msra.mxu0 %v512
      %533 = vmatprep.subr.bf16.mxu0 0
      %534 = vmatpush2.bf16.msra.mxu0 0
      %535 = vmatprep.subr.bf16.mxu0 0
      %536 = vmatpush2.bf16.msra.mxu0 0
      %537 = vmatprep.subr.bf16.mxu0 0
      %538 = vmatpush2.bf16.msra.mxu0 0
      %539 = vmatprep.subr.bf16.mxu0 0
      %540 = vmatpush2.bf16.msra.mxu0 0
      %541 = vmatprep.subr.bf16.mxu0 0
      %542 = vmatpush2.bf16.msra.mxu0 0
      %543 = vmatprep.subr.bf16.mxu0 0
      %544 = vmatpush2.bf16.msra.mxu0 0
      %545 = vmatprep.subr.bf16.mxu0 0
      %546 = vmatpush2.bf16.msra.mxu0 0
      %547 = vmatprep.subr.bf16.mxu0 0
      %548 = vmatpush2.bf16.msra.mxu0 0
      %549 = vmatprep.mubr.bf16.mxu0 0
      %550 = vmatmul.mubr.bf16.gmra.mxu0 %v515
      %v551 = vpop.f32.mrf.mxu0
      %v552 = vadd.f32 0.0, %v551
      %v553 = vpop.f32.mrf.mxu0
      %v554 = vpop.f32.mrf.mxu0
      %v555 = vadd.f32 0.0, %v554
      %v556 = vpop.f32.mrf.mxu0
      %557 = vdwg.mxu0
      %v558 = vpack.c.bf16 %v555, %v552
      %v560 = vunpack.c.l.b16 %v558
      %v561 = vunpack.c.h.b16 %v558
      %v562 = vpack.c.b16 %v560, %v560
      %v563 = vpack.c.b16 %v561, %v561
      %vm566 = vcmask 27648
      %567 = vst.msk [vmem:[%s285] sm:$0xf] %vm566, %v562
      %568 = vst.msk [vmem:[%s285 + $0x4] sm:$0xf] %vm566, %v563
      %v569 = vsel %vm392, %v552, 0.0
      %v570 = vsel %vm392, %v555, 0.0
      %v571 = vadd.f32 %v569, %v570
      %v572 = vrot.slane %v571, 4
      %v573 = vadd.f32 %v571, %v572
      %v574 = vrot.slane %v573, 2
      %v575 = vadd.f32 %v573, %v574
      %v576 = vrot.slane %v575, 1
      %v577 = vadd.f32 %v575, %v576
      %vm578 = vcmask 24576
      %579 = vst.msk [vmem:[%s289] sm:$0x1] %vm578, %v577
      %v580 = vmul.f32 %v552, %v552
      %v581 = vmul.f32 %v555, %v555
      %v582 = vsel %vm392, %v580, 0.0
      %v583 = vsel %vm392, %v581, 0.0
      %v584 = vadd.f32 %v582, %v583
      %v585 = vrot.slane %v584, 4
      %v586 = vadd.f32 %v584, %v585
      %v587 = vrot.slane %v586, 2
      %v588 = vadd.f32 %v586, %v587
      %v589 = vrot.slane %v588, 1
      %v590 = vadd.f32 %v588, %v589
      %591 = vst.msk [vmem:[%s289 + $0x1] sm:$0x1] %vm578, %v590
      %592 = vrot.lane.b32.xlu0 %v391, 124
      %v593 = vpop.permute.xlu0 %592
      %594 = vrot.lane.b32.xlu0 %v384, 124
      %v595 = vpop.permute.xlu0 %594
      %v597 = vsel %vm392, %v593, 0
      %v600 = vsel %vm392, %v595, 0
      %602 = vmatprep.subr.bf16.mxu0 0
      %603 = vmatpush1.bf16.xpose.msra.mxu0 0
      %604 = vmatprep.subr.bf16.mxu0 0
      %605 = vmatpush1.bf16.xpose.msra.mxu0 0
      %606 = vmatprep.subr.bf16.mxu0 0
      %607 = vmatpush1.bf16.xpose.msra.mxu0 0
      %608 = vmatprep.subr.bf16.mxu0 0
      %609 = vmatpush1.bf16.xpose.msra.mxu0 0
      %610 = vmatprep.subr.bf16.mxu0 0
      %611 = vmatpush1.bf16.xpose.msra.mxu0 0
      %612 = vmatprep.subr.bf16.mxu0 0
      %613 = vmatpush1.bf16.xpose.msra.mxu0 0
      %614 = vmatprep.subr.bf16.mxu0 0
      %615 = vmatpush1.bf16.xpose.msra.mxu0 0
      %616 = vmatprep.subr.bf16.mxu0 0
      %617 = vmatpush1.bf16.xpose.msra.mxu0 %v600
      %618 = vmatprep.subr.bf16.mxu0 0
      %619 = vmatpush2.bf16.xpose.msra.mxu0 0
      %620 = vmatprep.subr.bf16.mxu0 0
      %621 = vmatpush2.bf16.xpose.msra.mxu0 0
      %622 = vmatprep.subr.bf16.mxu0 0
      %623 = vmatpush2.bf16.xpose.msra.mxu0 0
      %624 = vmatprep.subr.bf16.mxu0 0
      %625 = vmatpush2.bf16.xpose.msra.mxu0 0
      %626 = vmatprep.subr.bf16.mxu0 0
      %627 = vmatpush2.bf16.xpose.msra.mxu0 0
      %628 = vmatprep.subr.bf16.mxu0 0
      %629 = vmatpush2.bf16.xpose.msra.mxu0 0
      %630 = vmatprep.subr.bf16.mxu0 0
      %631 = vmatpush2.bf16.xpose.msra.mxu0 0
      %632 = vmatprep.subr.bf16.mxu0 0
      %633 = vmatpush2.bf16.xpose.msra.mxu0 0
      %634 = vmatprep.mubr.bf16.mxu0 0
      %635 = vmatmul.mubr.bf16.gmra.mxu0 %v597
      %v636 = vpop.f32.mrf.mxu0
      %v637 = vadd.f32 0.0, %v636
      %v638 = vpop.f32.mrf.mxu0
      %v639 = vpop.f32.mrf.mxu0
      %v640 = vadd.f32 0.0, %v639
      %v641 = vpop.f32.mrf.mxu0
      %642 = vdwg.mxu0
      %643 = vrot.lane.b32.xlu0 %v384, 92
      %v644 = vpop.permute.xlu0 %643
      %v646 = vsel %vm392, %v644, 0
      %648 = vmatprep.subr.bf16.mxu0 0
      %649 = vmatpush1.bf16.xpose.msra.mxu0 0
      %650 = vmatprep.subr.bf16.mxu0 0
      %651 = vmatpush1.bf16.xpose.msra.mxu0 0
      %652 = vmatprep.subr.bf16.mxu0 0
      %653 = vmatpush1.bf16.xpose.msra.mxu0 0
      %654 = vmatprep.subr.bf16.mxu0 0
      %655 = vmatpush1.bf16.xpose.msra.mxu0 0
      %656 = vmatprep.subr.bf16.mxu0 0
      %657 = vmatpush1.bf16.xpose.msra.mxu0 0
      %658 = vmatprep.subr.bf16.mxu0 0
      %659 = vmatpush1.bf16.xpose.msra.mxu0 0
      %660 = vmatprep.subr.bf16.mxu0 0
      %661 = vmatpush1.bf16.xpose.msra.mxu0 0
      %662 = vmatprep.subr.bf16.mxu0 0
      %663 = vmatpush1.bf16.xpose.msra.mxu0 %v646
      %664 = vmatprep.subr.bf16.mxu0 0
      %665 = vmatpush2.bf16.xpose.msra.mxu0 0
      %666 = vmatprep.subr.bf16.mxu0 0
      %667 = vmatpush2.bf16.xpose.msra.mxu0 0
      %668 = vmatprep.subr.bf16.mxu0 0
      %669 = vmatpush2.bf16.xpose.msra.mxu0 0
      %670 = vmatprep.subr.bf16.mxu0 0
      %671 = vmatpush2.bf16.xpose.msra.mxu0 0
      %672 = vmatprep.subr.bf16.mxu0 0
      %673 = vmatpush2.bf16.xpose.msra.mxu0 0
      %674 = vmatprep.subr.bf16.mxu0 0
      %675 = vmatpush2.bf16.xpose.msra.mxu0 0
      %676 = vmatprep.subr.bf16.mxu0 0
      %677 = vmatpush2.bf16.xpose.msra.mxu0 0
      %678 = vmatprep.subr.bf16.mxu0 0
      %679 = vmatpush2.bf16.xpose.msra.mxu0 0
      %680 = vmatprep.mubr.bf16.mxu0 0
      %681 = vmatmul.mubr.bf16.gmra.mxu0 %v600
      %v682 = vpop.f32.mrf.mxu0
      %v683 = vadd.f32 %v637, %v682
      %v684 = vpop.f32.mrf.mxu0
      %v685 = vpop.f32.mrf.mxu0
      %v686 = vadd.f32 %v640, %v685
      %v687 = vpop.f32.mrf.mxu0
      %688 = vdwg.mxu0
      %v689 = vsel %vm487, %v683, -inf
      %690 = vmax.xlane.f32.xlu0 %v689
      %v691 = vpop.xlane.xlu0 %690
      %v692 = vsel %vm487, %v686, -inf
      %693 = vmax.xlane.f32.xlu0 %v692
      %v694 = vpop.xlane.xlu0 %693
      %v695 = vsub.f32 %v683, %v691
      %v696 = vsub.f32 %v686, %v694
      %v697 = vmul.f32 %v695, 1.442695
      %v698 = vpow.pop %v697
      %v699 = vmul.f32 %v696, 1.442695
      %v700 = vpow.pop %v699
      %v701 = vsel %vm487, %v698, 0.0
      %702 = vadd.xlane.f32.xlu0 %v701
      %v703 = vpop.xlane.xlu0 %702
      %v704 = vsel %vm487, %v700, 0.0
      %705 = vadd.xlane.f32.xlu0 %v704
      %v706 = vpop.xlane.xlu0 %705
      %v707 = vrcp.pop %v703
      %v708 = vrcp.pop %v706
      %v709 = vmul.f32 %v698, %v707
      %v710 = vmul.f32 %v700, %v708
      %v711 = vpack.c.bf16 %v710, %v709
      %712 = vrot.lane.b32.xlu0 %v384, 60
      %v713 = vpop.permute.xlu0 %712
      %v716 = vsel %vm487, %v711, 0
      %718 = vmatprep.subr.bf16.mxu0 0
      %719 = vmatpush1.bf16.msra.mxu0 0
      %720 = vmatprep.subr.bf16.mxu0 0
      %721 = vmatpush1.bf16.msra.mxu0 0
      %722 = vmatprep.subr.bf16.mxu0 0
      %723 = vmatpush1.bf16.msra.mxu0 0
      %724 = vmatprep.subr.bf16.mxu0 0
      %725 = vmatpush1.bf16.msra.mxu0 0
      %726 = vmatprep.subr.bf16.mxu0 0
      %727 = vmatpush1.bf16.msra.mxu0 0
      %728 = vmatprep.subr.bf16.mxu0 0
      %729 = vmatpush1.bf16.msra.mxu0 0
      %730 = vmatprep.subr.bf16.mxu0 0
      %731 = vmatpush1.bf16.msra.mxu0 0
      %732 = vmatprep.subr.bf16.mxu0 0
      %733 = vmatpush1.bf16.msra.mxu0 %v713
      %734 = vmatprep.subr.bf16.mxu0 0
      %735 = vmatpush2.bf16.msra.mxu0 0
      %736 = vmatprep.subr.bf16.mxu0 0
      %737 = vmatpush2.bf16.msra.mxu0 0
      %738 = vmatprep.subr.bf16.mxu0 0
      %739 = vmatpush2.bf16.msra.mxu0 0
      %740 = vmatprep.subr.bf16.mxu0 0
      %741 = vmatpush2.bf16.msra.mxu0 0
      %742 = vmatprep.subr.bf16.mxu0 0
      %743 = vmatpush2.bf16.msra.mxu0 0
      %744 = vmatprep.subr.bf16.mxu0 0
      %745 = vmatpush2.bf16.msra.mxu0 0
      %746 = vmatprep.subr.bf16.mxu0 0
      %747 = vmatpush2.bf16.msra.mxu0 0
      %748 = vmatprep.subr.bf16.mxu0 0
      %749 = vmatpush2.bf16.msra.mxu0 0
      %750 = vmatprep.mubr.bf16.mxu0 0
      %751 = vmatmul.mubr.bf16.gmra.mxu0 %v716
      %v752 = vpop.f32.mrf.mxu0
      %v753 = vadd.f32 0.0, %v752
      %v754 = vpop.f32.mrf.mxu0
      %v755 = vpop.f32.mrf.mxu0
      %v756 = vadd.f32 0.0, %v755
      %v757 = vpop.f32.mrf.mxu0
      %758 = vdwg.mxu0
      %v759 = vpack.c.bf16 %v756, %v753
      %v761 = vunpack.c.l.b16 %v759
      %v762 = vunpack.c.h.b16 %v759
      %v763 = vpack.c.b16 %v761, %v761
      %v764 = vpack.c.b16 %v762, %v762
      %765 = vrot.lane.b32.xlu0 %v763, 4
      %v766 = vpop.permute.xlu0 %765
      %767 = vrot.lane.b32.xlu0 %v764, 4
      %v768 = vpop.permute.xlu0 %767
      %vm771 = vcmask 60448
      %772 = vst.msk [vmem:[%s285] sm:$0xf] %vm771, %v766
      %773 = vst.msk [vmem:[%s285 + $0x4] sm:$0xf] %vm771, %v768
      %v774 = vsel %vm392, %v753, 0.0
      %v775 = vsel %vm392, %v756, 0.0
      %v776 = vadd.f32 %v774, %v775
      %v777 = vrot.slane %v776, 4
      %v778 = vadd.f32 %v776, %v777
      %v779 = vrot.slane %v778, 2
      %v780 = vadd.f32 %v778, %v779
      %v781 = vrot.slane %v780, 1
      %v782 = vadd.f32 %v780, %v781
      %784 = vrot.lane.b32.xlu0 %v782, 4
      %v785 = vpop.permute.xlu0 %784
      %vm787 = vcmask 57376
      %788 = vst.msk [vmem:[%s289] sm:$0x1] %vm787, %v785
      %v789 = vmul.f32 %v753, %v753
      %v790 = vmul.f32 %v756, %v756
      %v791 = vsel %vm392, %v789, 0.0
      %v792 = vsel %vm392, %v790, 0.0
      %v793 = vadd.f32 %v791, %v792
      %v794 = vrot.slane %v793, 4
      %v795 = vadd.f32 %v793, %v794
      %v796 = vrot.slane %v795, 2
      %v797 = vadd.f32 %v795, %v796
      %v798 = vrot.slane %v797, 1
      %v799 = vadd.f32 %v797, %v798
      %801 = vrot.lane.b32.xlu0 %v799, 4
      %v802 = vpop.permute.xlu0 %801
      %804 = vst.msk [vmem:[%s289 + $0x1] sm:$0x1] %vm787, %v802
      %805 = vrot.lane.b32.xlu0 %v391, 120
      %v806 = vpop.permute.xlu0 %805
      %807 = vrot.lane.b32.xlu0 %v384, 120
      %v808 = vpop.permute.xlu0 %807
      %v810 = vsel %vm392, %v806, 0
      %v813 = vsel %vm392, %v808, 0
      %815 = vmatprep.subr.bf16.mxu0 0
      %816 = vmatpush1.bf16.xpose.msra.mxu0 0
      %817 = vmatprep.subr.bf16.mxu0 0
      %818 = vmatpush1.bf16.xpose.msra.mxu0 0
      %819 = vmatprep.subr.bf16.mxu0 0
      %820 = vmatpush1.bf16.xpose.msra.mxu0 0
      %821 = vmatprep.subr.bf16.mxu0 0
      %822 = vmatpush1.bf16.xpose.msra.mxu0 0
      %823 = vmatprep.subr.bf16.mxu0 0
      %824 = vmatpush1.bf16.xpose.msra.mxu0 0
      %825 = vmatprep.subr.bf16.mxu0 0
      %826 = vmatpush1.bf16.xpose.msra.mxu0 0
      %827 = vmatprep.subr.bf16.mxu0 0
      %828 = vmatpush1.bf16.xpose.msra.mxu0 0
      %829 = vmatprep.subr.bf16.mxu0 0
      %830 = vmatpush1.bf16.xpose.msra.mxu0 %v813
      %831 = vmatprep.subr.bf16.mxu0 0
      %832 = vmatpush2.bf16.xpose.msra.mxu0 0
      %833 = vmatprep.subr.bf16.mxu0 0
      %834 = vmatpush2.bf16.xpose.msra.mxu0 0
      %835 = vmatprep.subr.bf16.mxu0 0
      %836 = vmatpush2.bf16.xpose.msra.mxu0 0
      %837 = vmatprep.subr.bf16.mxu0 0
      %838 = vmatpush2.bf16.xpose.msra.mxu0 0
      %839 = vmatprep.subr.bf16.mxu0 0
      %840 = vmatpush2.bf16.xpose.msra.mxu0 0
      %841 = vmatprep.subr.bf16.mxu0 0
      %842 = vmatpush2.bf16.xpose.msra.mxu0 0
      %843 = vmatprep.subr.bf16.mxu0 0
      %844 = vmatpush2.bf16.xpose.msra.mxu0 0
      %845 = vmatprep.subr.bf16.mxu0 0
      %846 = vmatpush2.bf16.xpose.msra.mxu0 0
      %847 = vmatprep.mubr.bf16.mxu0 0
      %848 = vmatmul.mubr.bf16.gmra.mxu0 %v810
      %v849 = vpop.f32.mrf.mxu0
      %v850 = vadd.f32 0.0, %v849
      %v851 = vpop.f32.mrf.mxu0
      %v852 = vpop.f32.mrf.mxu0
      %v853 = vadd.f32 0.0, %v852
      %v854 = vpop.f32.mrf.mxu0
      %855 = vdwg.mxu0
      %856 = vrot.lane.b32.xlu0 %v384, 88
      %v857 = vpop.permute.xlu0 %856
      %v859 = vsel %vm392, %v857, 0
      %861 = vmatprep.subr.bf16.mxu0 0
      %862 = vmatpush1.bf16.xpose.msra.mxu0 0
      %863 = vmatprep.subr.bf16.mxu0 0
      %864 = vmatpush1.bf16.xpose.msra.mxu0 0
      %865 = vmatprep.subr.bf16.mxu0 0
      %866 = vmatpush1.bf16.xpose.msra.mxu0 0
      %867 = vmatprep.subr.bf16.mxu0 0
      %868 = vmatpush1.bf16.xpose.msra.mxu0 0
      %869 = vmatprep.subr.bf16.mxu0 0
      %870 = vmatpush1.bf16.xpose.msra.mxu0 0
      %871 = vmatprep.subr.bf16.mxu0 0
      %872 = vmatpush1.bf16.xpose.msra.mxu0 0
      %873 = vmatprep.subr.bf16.mxu0 0
      %874 = vmatpush1.bf16.xpose.msra.mxu0 0
      %875 = vmatprep.subr.bf16.mxu0 0
      %876 = vmatpush1.bf16.xpose.msra.mxu0 %v859
      %877 = vmatprep.subr.bf16.mxu0 0
      %878 = vmatpush2.bf16.xpose.msra.mxu0 0
      %879 = vmatprep.subr.bf16.mxu0 0
      %880 = vmatpush2.bf16.xpose.msra.mxu0 0
      %881 = vmatprep.subr.bf16.mxu0 0
      %882 = vmatpush2.bf16.xpose.msra.mxu0 0
      %883 = vmatprep.subr.bf16.mxu0 0
      %884 = vmatpush2.bf16.xpose.msra.mxu0 0
      %885 = vmatprep.subr.bf16.mxu0 0
      %886 = vmatpush2.bf16.xpose.msra.mxu0 0
      %887 = vmatprep.subr.bf16.mxu0 0
      %888 = vmatpush2.bf16.xpose.msra.mxu0 0
      %889 = vmatprep.subr.bf16.mxu0 0
      %890 = vmatpush2.bf16.xpose.msra.mxu0 0
      %891 = vmatprep.subr.bf16.mxu0 0
      %892 = vmatpush2.bf16.xpose.msra.mxu0 0
      %893 = vmatprep.mubr.bf16.mxu0 0
      %894 = vmatmul.mubr.bf16.gmra.mxu0 %v813
      %v895 = vpop.f32.mrf.mxu0
      %v896 = vadd.f32 %v850, %v895
      %v897 = vpop.f32.mrf.mxu0
      %v898 = vpop.f32.mrf.mxu0
      %v899 = vadd.f32 %v853, %v898
      %v900 = vpop.f32.mrf.mxu0
      %901 = vdwg.mxu0
      %v902 = vsel %vm487, %v896, -inf
      %903 = vmax.xlane.f32.xlu0 %v902
      %v904 = vpop.xlane.xlu0 %903
      %v905 = vsel %vm487, %v899, -inf
      %906 = vmax.xlane.f32.xlu0 %v905
      %v907 = vpop.xlane.xlu0 %906
      %v908 = vsub.f32 %v896, %v904
      %v909 = vsub.f32 %v899, %v907
      %v910 = vmul.f32 %v908, 1.442695
      %v911 = vpow.pop %v910
      %v912 = vmul.f32 %v909, 1.442695
      %v913 = vpow.pop %v912
      %v914 = vsel %vm487, %v911, 0.0
      %915 = vadd.xlane.f32.xlu0 %v914
      %v916 = vpop.xlane.xlu0 %915
      %v917 = vsel %vm487, %v913, 0.0
      %918 = vadd.xlane.f32.xlu0 %v917
      %v919 = vpop.xlane.xlu0 %918
      %v920 = vrcp.pop %v916
      %v921 = vrcp.pop %v919
      %v922 = vmul.f32 %v911, %v920
      %v923 = vmul.f32 %v913, %v921
      %v924 = vpack.c.bf16 %v923, %v922
      %925 = vrot.lane.b32.xlu0 %v384, 56
      %v926 = vpop.permute.xlu0 %925
      %v929 = vsel %vm487, %v924, 0
      %931 = vmatprep.subr.bf16.mxu0 0
      %932 = vmatpush1.bf16.msra.mxu0 0
      %933 = vmatprep.subr.bf16.mxu0 0
      %934 = vmatpush1.bf16.msra.mxu0 0
      %935 = vmatprep.subr.bf16.mxu0 0
      %936 = vmatpush1.bf16.msra.mxu0 0
      %937 = vmatprep.subr.bf16.mxu0 0
      %938 = vmatpush1.bf16.msra.mxu0 0
      %939 = vmatprep.subr.bf16.mxu0 0
      %940 = vmatpush1.bf16.msra.mxu0 0
      %941 = vmatprep.subr.bf16.mxu0 0
      %942 = vmatpush1.bf16.msra.mxu0 0
      %943 = vmatprep.subr.bf16.mxu0 0
      %944 = vmatpush1.bf16.msra.mxu0 0
      %945 = vmatprep.subr.bf16.mxu0 0
      %946 = vmatpush1.bf16.msra.mxu0 %v926
      %947 = vmatprep.subr.bf16.mxu0 0
      %948 = vmatpush2.bf16.msra.mxu0 0
      %949 = vmatprep.subr.bf16.mxu0 0
      %950 = vmatpush2.bf16.msra.mxu0 0
      %951 = vmatprep.subr.bf16.mxu0 0
      %952 = vmatpush2.bf16.msra.mxu0 0
      %953 = vmatprep.subr.bf16.mxu0 0
      %954 = vmatpush2.bf16.msra.mxu0 0
      %955 = vmatprep.subr.bf16.mxu0 0
      %956 = vmatpush2.bf16.msra.mxu0 0
      %957 = vmatprep.subr.bf16.mxu0 0
      %958 = vmatpush2.bf16.msra.mxu0 0
      %959 = vmatprep.subr.bf16.mxu0 0
      %960 = vmatpush2.bf16.msra.mxu0 0
      %961 = vmatprep.subr.bf16.mxu0 0
      %962 = vmatpush2.bf16.msra.mxu0 0
      %963 = vmatprep.mubr.bf16.mxu0 0
      %964 = vmatmul.mubr.bf16.gmra.mxu0 %v929
      %v965 = vpop.f32.mrf.mxu0
      %v966 = vadd.f32 0.0, %v965
      %v967 = vpop.f32.mrf.mxu0
      %v968 = vpop.f32.mrf.mxu0
      %v969 = vadd.f32 0.0, %v968
      %v970 = vpop.f32.mrf.mxu0
      %971 = vdwg.mxu0
      %v972 = vpack.c.bf16 %v969, %v966
      %v974 = vunpack.c.l.b16 %v972
      %v975 = vunpack.c.h.b16 %v972
      %v976 = vpack.c.b16 %v974, %v974
      %v977 = vpack.c.b16 %v975, %v975
      %978 = vrot.lane.b32.xlu0 %v976, 8
      %v979 = vpop.permute.xlu0 %978
      %980 = vrot.lane.b32.xlu0 %v977, 8
      %v981 = vpop.permute.xlu0 %980
      %vm984 = vcmask 93248
      %985 = vst.msk [vmem:[%s285] sm:$0xf] %vm984, %v979
      %986 = vst.msk [vmem:[%s285 + $0x4] sm:$0xf] %vm984, %v981
      %v987 = vsel %vm392, %v966, 0.0
      %v988 = vsel %vm392, %v969, 0.0
      %v989 = vadd.f32 %v987, %v988
      %v990 = vrot.slane %v989, 4
      %v991 = vadd.f32 %v989, %v990
      %v992 = vrot.slane %v991, 2
      %v993 = vadd.f32 %v991, %v992
      %v994 = vrot.slane %v993, 1
      %v995 = vadd.f32 %v993, %v994
      %997 = vrot.lane.b32.xlu0 %v995, 8
      %v998 = vpop.permute.xlu0 %997
      %vm1000 = vcmask 90176
      %1001 = vst.msk [vmem:[%s289] sm:$0x1] %vm1000, %v998
      %v1002 = vmul.f32 %v966, %v966
      %v1003 = vmul.f32 %v969, %v969
      %v1004 = vsel %vm392, %v1002, 0.0
      %v1005 = vsel %vm392, %v1003, 0.0
      %v1006 = vadd.f32 %v1004, %v1005
      %v1007 = vrot.slane %v1006, 4
      %v1008 = vadd.f32 %v1006, %v1007
      %v1009 = vrot.slane %v1008, 2
      %v1010 = vadd.f32 %v1008, %v1009
      %v1011 = vrot.slane %v1010, 1
      %v1012 = vadd.f32 %v1010, %v1011
      %1014 = vrot.lane.b32.xlu0 %v1012, 8
      %v1015 = vpop.permute.xlu0 %1014
      %1017 = vst.msk [vmem:[%s289 + $0x1] sm:$0x1] %vm1000, %v1015
      %1018 = vrot.lane.b32.xlu0 %v391, 116
      %v1019 = vpop.permute.xlu0 %1018
      %1020 = vrot.lane.b32.xlu0 %v384, 116
      %v1021 = vpop.permute.xlu0 %1020
      %v1023 = vsel %vm392, %v1019, 0
      %v1026 = vsel %vm392, %v1021, 0
      %1028 = vmatprep.subr.bf16.mxu0 0
      %1029 = vmatpush1.bf16.xpose.msra.mxu0 0
      %1030 = vmatprep.subr.bf16.mxu0 0
      %1031 = vmatpush1.bf16.xpose.msra.mxu0 0
      %1032 = vmatprep.subr.bf16.mxu0 0
      %1033 = vmatpush1.bf16.xpose.msra.mxu0 0
      %1034 = vmatprep.subr.bf16.mxu0 0
      %1035 = vmatpush1.bf16.xpose.msra.mxu0 0
      %1036 = vmatprep.subr.bf16.mxu0 0
      %1037 = vmatpush1.bf16.xpose.msra.mxu0 0
      %1038 = vmatprep.subr.bf16.mxu0 0
      %1039 = vmatpush1.bf16.xpose.msra.mxu0 0
      %1040 = vmatprep.subr.bf16.mxu0 0
      %1041 = vmatpush1.bf16.xpose.msra.mxu0 0
      %1042 = vmatprep.subr.bf16.mxu0 0
      %1043 = vmatpush1.bf16.xpose.msra.mxu0 %v1026
      %1044 = vmatprep.subr.bf16.mxu0 0
      %1045 = vmatpush2.bf16.xpose.msra.mxu0 0
      %1046 = vmatprep.subr.bf16.mxu0 0
      %1047 = vmatpush2.bf16.xpose.msra.mxu0 0
      %1048 = vmatprep.subr.bf16.mxu0 0
      %1049 = vmatpush2.bf16.xpose.msra.mxu0 0
      %1050 = vmatprep.subr.bf16.mxu0 0
      %1051 = vmatpush2.bf16.xpose.msra.mxu0 0
      %1052 = vmatprep.subr.bf16.mxu0 0
      %1053 = vmatpush2.bf16.xpose.msra.mxu0 0
      %1054 = vmatprep.subr.bf16.mxu0 0
      %1055 = vmatpush2.bf16.xpose.msra.mxu0 0
      %1056 = vmatprep.subr.bf16.mxu0 0
      %1057 = vmatpush2.bf16.xpose.msra.mxu0 0
      %1058 = vmatprep.subr.bf16.mxu0 0
      %1059 = vmatpush2.bf16.xpose.msra.mxu0 0
      %1060 = vmatprep.mubr.bf16.mxu0 0
      %1061 = vmatmul.mubr.bf16.gmra.mxu0 %v1023
      %v1062 = vpop.f32.mrf.mxu0
      %v1063 = vadd.f32 0.0, %v1062
      %v1064 = vpop.f32.mrf.mxu0
      %v1065 = vpop.f32.mrf.mxu0
      %v1066 = vadd.f32 0.0, %v1065
      %v1067 = vpop.f32.mrf.mxu0
      %1068 = vdwg.mxu0
      %1069 = vrot.lane.b32.xlu0 %v384, 84
      %v1070 = vpop.permute.xlu0 %1069
      %v1072 = vsel %vm392, %v1070, 0
      %1074 = vmatprep.subr.bf16.mxu0 0
      %1075 = vmatpush1.bf16.xpose.msra.mxu0 0
      %1076 = vmatprep.subr.bf16.mxu0 0
      %1077 = vmatpush1.bf16.xpose.msra.mxu0 0
      %1078 = vmatprep.subr.bf16.mxu0 0
      %1079 = vmatpush1.bf16.xpose.msra.mxu0 0
      %1080 = vmatprep.subr.bf16.mxu0 0
      %1081 = vmatpush1.bf16.xpose.msra.mxu0 0
      %1082 = vmatprep.subr.bf16.mxu0 0
      %1083 = vmatpush1.bf16.xpose.msra.mxu0 0
      %1084 = vmatprep.subr.bf16.mxu0 0
      %1085 = vmatpush1.bf16.xpose.msra.mxu0 0
      %1086 = vmatprep.subr.bf16.mxu0 0
      %1087 = vmatpush1.bf16.xpose.msra.mxu0 0
      %1088 = vmatprep.subr.bf16.mxu0 0
      %1089 = vmatpush1.bf16.xpose.msra.mxu0 %v1072
      %1090 = vmatprep.subr.bf16.mxu0 0
      %1091 = vmatpush2.bf16.xpose.msra.mxu0 0
      %1092 = vmatprep.subr.bf16.mxu0 0
      %1093 = vmatpush2.bf16.xpose.msra.mxu0 0
      %1094 = vmatprep.subr.bf16.mxu0 0
      %1095 = vmatpush2.bf16.xpose.msra.mxu0 0
      %1096 = vmatprep.subr.bf16.mxu0 0
      %1097 = vmatpush2.bf16.xpose.msra.mxu0 0
      %1098 = vmatprep.subr.bf16.mxu0 0
      %1099 = vmatpush2.bf16.xpose.msra.mxu0 0
      %1100 = vmatprep.subr.bf16.mxu0 0
      %1101 = vmatpush2.bf16.xpose.msra.mxu0 0
      %1102 = vmatprep.subr.bf16.mxu0 0
      %1103 = vmatpush2.bf16.xpose.msra.mxu0 0
      %1104 = vmatprep.subr.bf16.mxu0 0
      %1105 = vmatpush2.bf16.xpose.msra.mxu0 0
      %1106 = vmatprep.mubr.bf16.mxu0 0
      %1107 = vmatmul.mubr.bf16.gmra.mxu0 %v1026
      %v1108 = vpop.f32.mrf.mxu0
      %v1109 = vadd.f32 %v1063, %v1108
      %v1110 = vpop.f32.mrf.mxu0
      %v1111 = vpop.f32.mrf.mxu0
      %v1112 = vadd.f32 %v1066, %v1111
      %v1113 = vpop.f32.mrf.mxu0
      %1114 = vdwg.mxu0
      %v1115 = vsel %vm487, %v1109, -inf
      %1116 = vmax.xlane.f32.xlu0 %v1115
      %v1117 = vpop.xlane.xlu0 %1116
      %v1118 = vsel %vm487, %v1112, -inf
      %1119 = vmax.xlane.f32.xlu0 %v1118
      %v1120 = vpop.xlane.xlu0 %1119
      %v1121 = vsub.f32 %v1109, %v1117
      %v1122 = vsub.f32 %v1112, %v1120
      %v1123 = vmul.f32 %v1121, 1.442695
      %v1124 = vpow.pop %v1123
      %v1125 = vmul.f32 %v1122, 1.442695
      %v1126 = vpow.pop %v1125
      %v1127 = vsel %vm487, %v1124, 0.0
      %1128 = vadd.xlane.f32.xlu0 %v1127
      %v1129 = vpop.xlane.xlu0 %1128
      %v1130 = vsel %vm487, %v1126, 0.0
      %1131 = vadd.xlane.f32.xlu0 %v1130
      %v1132 = vpop.xlane.xlu0 %1131
      %v1133 = vrcp.pop %v1129
      %v1134 = vrcp.pop %v1132
      %v1135 = vmul.f32 %v1124, %v1133
      %v1136 = vmul.f32 %v1126, %v1134
      %v1137 = vpack.c.bf16 %v1136, %v1135
      %1138 = vrot.lane.b32.xlu0 %v384, 52
      %v1139 = vpop.permute.xlu0 %1138
      %v1142 = vsel %vm487, %v1137, 0
      %1144 = vmatprep.subr.bf16.mxu0 0
      %1145 = vmatpush1.bf16.msra.mxu0 0
      %1146 = vmatprep.subr.bf16.mxu0 0
      %1147 = vmatpush1.bf16.msra.mxu0 0
      %1148 = vmatprep.subr.bf16.mxu0 0
      %1149 = vmatpush1.bf16.msra.mxu0 0
      %1150 = vmatprep.subr.bf16.mxu0 0
      %1151 = vmatpush1.bf16.msra.mxu0 0
      %1152 = vmatprep.subr.bf16.mxu0 0
      %1153 = vmatpush1.bf16.msra.mxu0 0
      %1154 = vmatprep.subr.bf16.mxu0 0
      %1155 = vmatpush1.bf16.msra.mxu0 0
      %1156 = vmatprep.subr.bf16.mxu0 0
      %1157 = vmatpush1.bf16.msra.mxu0 0
      %1158 = vmatprep.subr.bf16.mxu0 0
      %1159 = vmatpush1.bf16.msra.mxu0 %v1139
      %1160 = vmatprep.subr.bf16.mxu0 0
      %1161 = vmatpush2.bf16.msra.mxu0 0
      %1162 = vmatprep.subr.bf16.mxu0 0
      %1163 = vmatpush2.bf16.msra.mxu0 0
      %1164 = vmatprep.subr.bf16.mxu0 0
      %1165 = vmatpush2.bf16.msra.mxu0 0
      %1166 = vmatprep.subr.bf16.mxu0 0
      %1167 = vmatpush2.bf16.msra.mxu0 0
      %1168 = vmatprep.subr.bf16.mxu0 0
      %1169 = vmatpush2.bf16.msra.mxu0 0
      %1170 = vmatprep.subr.bf16.mxu0 0
      %1171 = vmatpush2.bf16.msra.mxu0 0
      %1172 = vmatprep.subr.bf16.mxu0 0
      %1173 = vmatpush2.bf16.msra.mxu0 0
      %1174 = vmatprep.subr.bf16.mxu0 0
      %1175 = vmatpush2.bf16.msra.mxu0 0
      %1176 = vmatprep.mubr.bf16.mxu0 0
      %1177 = vmatmul.mubr.bf16.gmra.mxu0 %v1142
      %v1178 = vpop.f32.mrf.mxu0
      %v1179 = vadd.f32 0.0, %v1178
      %v1180 = vpop.f32.mrf.mxu0
      %v1181 = vpop.f32.mrf.mxu0
      %v1182 = vadd.f32 0.0, %v1181
      %v1183 = vpop.f32.mrf.mxu0
      %1184 = vdwg.mxu0
      %v1185 = vpack.c.bf16 %v1182, %v1179
      %v1187 = vunpack.c.l.b16 %v1185
      %v1188 = vunpack.c.h.b16 %v1185
      %v1189 = vpack.c.b16 %v1187, %v1187
      %v1190 = vpack.c.b16 %v1188, %v1188
      %1191 = vrot.lane.b32.xlu0 %v1189, 12
      %v1192 = vpop.permute.xlu0 %1191
      %1193 = vrot.lane.b32.xlu0 %v1190, 12
      %v1194 = vpop.permute.xlu0 %1193
      %vm1197 = vcmask 126048
      %1198 = vst.msk [vmem:[%s285] sm:$0xf] %vm1197, %v1192
      %1199 = vst.msk [vmem:[%s285 + $0x4] sm:$0xf] %vm1197, %v1194
      %v1200 = vsel %vm392, %v1179, 0.0
      %v1201 = vsel %vm392, %v1182, 0.0
      %v1202 = vadd.f32 %v1200, %v1201
      %v1203 = vrot.slane %v1202, 4
      %v1204 = vadd.f32 %v1202, %v1203
      %v1205 = vrot.slane %v1204, 2
      %v1206 = vadd.f32 %v1204, %v1205
      %v1207 = vrot.slane %v1206, 1
      %v1208 = vadd.f32 %v1206, %v1207
      %1210 = vrot.lane.b32.xlu0 %v1208, 12
      %v1211 = vpop.permute.xlu0 %1210
      %vm1213 = vcmask 122976
      %1214 = vst.msk [vmem:[%s289] sm:$0x1] %vm1213, %v1211
      %v1215 = vmul.f32 %v1179, %v1179
      %v1216 = vmul.f32 %v1182, %v1182
      %v1217 = vsel %vm392, %v1215, 0.0
      %v1218 = vsel %vm392, %v1216, 0.0
      %v1219 = vadd.f32 %v1217, %v1218
      %v1220 = vrot.slane %v1219, 4
      %v1221 = vadd.f32 %v1219, %v1220
      %v1222 = vrot.slane %v1221, 2
      %v1223 = vadd.f32 %v1221, %v1222
      %v1224 = vrot.slane %v1223, 1
      %v1225 = vadd.f32 %v1223, %v1224
      %1227 = vrot.lane.b32.xlu0 %v1225, 12
      %v1228 = vpop.permute.xlu0 %1227
      %1230 = vst.msk [vmem:[%s289 + $0x1] sm:$0x1] %vm1213, %v1228
      %1231 = vrot.lane.b32.xlu0 %v391, 112
      %v1232 = vpop.permute.xlu0 %1231
      %1233 = vrot.lane.b32.xlu0 %v384, 112
      %v1234 = vpop.permute.xlu0 %1233
      %v1236 = vsel %vm392, %v1232, 0
      %v1239 = vsel %vm392, %v1234, 0
      %1241 = vmatprep.subr.bf16.mxu0 0
      %1242 = vmatpush1.bf16.xpose.msra.mxu0 0
      %1243 = vmatprep.subr.bf16.mxu0 0
      %1244 = vmatpush1.bf16.xpose.msra.mxu0 0
      %1245 = vmatprep.subr.bf16.mxu0 0
      %1246 = vmatpush1.bf16.xpose.msra.mxu0 0
      %1247 = vmatprep.subr.bf16.mxu0 0
      %1248 = vmatpush1.bf16.xpose.msra.mxu0 0
      %1249 = vmatprep.subr.bf16.mxu0 0
      %1250 = vmatpush1.bf16.xpose.msra.mxu0 0
      %1251 = vmatprep.subr.bf16.mxu0 0
      %1252 = vmatpush1.bf16.xpose.msra.mxu0 0
      %1253 = vmatprep.subr.bf16.mxu0 0
      %1254 = vmatpush1.bf16.xpose.msra.mxu0 0
      %1255 = vmatprep.subr.bf16.mxu0 0
      %1256 = vmatpush1.bf16.xpose.msra.mxu0 %v1239
      %1257 = vmatprep.subr.bf16.mxu0 0
      %1258 = vmatpush2.bf16.xpose.msra.mxu0 0
      %1259 = vmatprep.subr.bf16.mxu0 0
      %1260 = vmatpush2.bf16.xpose.msra.mxu0 0
      %1261 = vmatprep.subr.bf16.mxu0 0
      %1262 = vmatpush2.bf16.xpose.msra.mxu0 0
      %1263 = vmatprep.subr.bf16.mxu0 0
      %1264 = vmatpush2.bf16.xpose.msra.mxu0 0
      %1265 = vmatprep.subr.bf16.mxu0 0
      %1266 = vmatpush2.bf16.xpose.msra.mxu0 0
      %1267 = vmatprep.subr.bf16.mxu0 0
      %1268 = vmatpush2.bf16.xpose.msra.mxu0 0
      %1269 = vmatprep.subr.bf16.mxu0 0
      %1270 = vmatpush2.bf16.xpose.msra.mxu0 0
      %1271 = vmatprep.subr.bf16.mxu0 0
      %1272 = vmatpush2.bf16.xpose.msra.mxu0 0
      %1273 = vmatprep.mubr.bf16.mxu0 0
      %1274 = vmatmul.mubr.bf16.gmra.mxu0 %v1236
      %v1275 = vpop.f32.mrf.mxu0
      %v1276 = vadd.f32 0.0, %v1275
      %v1277 = vpop.f32.mrf.mxu0
      %v1278 = vpop.f32.mrf.mxu0
      %v1279 = vadd.f32 0.0, %v1278
      %v1280 = vpop.f32.mrf.mxu0
      %1281 = vdwg.mxu0
      %1282 = vrot.lane.b32.xlu0 %v384, 80
      %v1283 = vpop.permute.xlu0 %1282
      %v1285 = vsel %vm392, %v1283, 0
      %1287 = vmatprep.subr.bf16.mxu0 0
      %1288 = vmatpush1.bf16.xpose.msra.mxu0 0
      %1289 = vmatprep.subr.bf16.mxu0 0
      %1290 = vmatpush1.bf16.xpose.msra.mxu0 0
      %1291 = vmatprep.subr.bf16.mxu0 0
      %1292 = vmatpush1.bf16.xpose.msra.mxu0 0
      %1293 = vmatprep.subr.bf16.mxu0 0
      %1294 = vmatpush1.bf16.xpose.msra.mxu0 0
      %1295 = vmatprep.subr.bf16.mxu0 0
      %1296 = vmatpush1.bf16.xpose.msra.mxu0 0
      %1297 = vmatprep.subr.bf16.mxu0 0
      %1298 = vmatpush1.bf16.xpose.msra.mxu0 0
      %1299 = vmatprep.subr.bf16.mxu0 0
      %1300 = vmatpush1.bf16.xpose.msra.mxu0 0
      %1301 = vmatprep.subr.bf16.mxu0 0
      %1302 = vmatpush1.bf16.xpose.msra.mxu0 %v1285
      %1303 = vmatprep.subr.bf16.mxu0 0
      %1304 = vmatpush2.bf16.xpose.msra.mxu0 0
      %1305 = vmatprep.subr.bf16.mxu0 0
      %1306 = vmatpush2.bf16.xpose.msra.mxu0 0
      %1307 = vmatprep.subr.bf16.mxu0 0
      %1308 = vmatpush2.bf16.xpose.msra.mxu0 0
      %1309 = vmatprep.subr.bf16.mxu0 0
      %1310 = vmatpush2.bf16.xpose.msra.mxu0 0
      %1311 = vmatprep.subr.bf16.mxu0 0
      %1312 = vmatpush2.bf16.xpose.msra.mxu0 0
      %1313 = vmatprep.subr.bf16.mxu0 0
      %1314 = vmatpush2.bf16.xpose.msra.mxu0 0
      %1315 = vmatprep.subr.bf16.mxu0 0
      %1316 = vmatpush2.bf16.xpose.msra.mxu0 0
      %1317 = vmatprep.subr.bf16.mxu0 0
      %1318 = vmatpush2.bf16.xpose.msra.mxu0 0
      %1319 = vmatprep.mubr.bf16.mxu0 0
      %1320 = vmatmul.mubr.bf16.gmra.mxu0 %v1239
      %v1321 = vpop.f32.mrf.mxu0
      %v1322 = vadd.f32 %v1276, %v1321
      %v1323 = vpop.f32.mrf.mxu0
      %v1324 = vpop.f32.mrf.mxu0
      %v1325 = vadd.f32 %v1279, %v1324
      %v1326 = vpop.f32.mrf.mxu0
      %1327 = vdwg.mxu0
      %v1328 = vsel %vm487, %v1322, -inf
      %1329 = vmax.xlane.f32.xlu0 %v1328
      %v1330 = vpop.xlane.xlu0 %1329
      %v1331 = vsel %vm487, %v1325, -inf
      %1332 = vmax.xlane.f32.xlu0 %v1331
      %v1333 = vpop.xlane.xlu0 %1332
      %v1334 = vsub.f32 %v1322, %v1330
      %v1335 = vsub.f32 %v1325, %v1333
      %v1336 = vmul.f32 %v1334, 1.442695
      %v1337 = vpow.pop %v1336
      %v1338 = vmul.f32 %v1335, 1.442695
      %v1339 = vpow.pop %v1338
      %v1340 = vsel %vm487, %v1337, 0.0
      %1341 = vadd.xlane.f32.xlu0 %v1340
      %v1342 = vpop.xlane.xlu0 %1341
      %v1343 = vsel %vm487, %v1339, 0.0
      %1344 = vadd.xlane.f32.xlu0 %v1343
      %v1345 = vpop.xlane.xlu0 %1344
      %v1346 = vrcp.pop %v1342
      %v1347 = vrcp.pop %v1345
      %v1348 = vmul.f32 %v1337, %v1346
      %v1349 = vmul.f32 %v1339, %v1347
      %v1350 = vpack.c.bf16 %v1349, %v1348
      %1351 = vrot.lane.b32.xlu0 %v384, 48
      %v1352 = vpop.permute.xlu0 %1351
      %v1355 = vsel %vm487, %v1350, 0
      %1357 = vmatprep.subr.bf16.mxu0 0
      %1358 = vmatpush1.bf16.msra.mxu0 0
      %1359 = vmatprep.subr.bf16.mxu0 0
      %1360 = vmatpush1.bf16.msra.mxu0 0
      %1361 = vmatprep.subr.bf16.mxu0 0
      %1362 = vmatpush1.bf16.msra.mxu0 0
      %1363 = vmatprep.subr.bf16.mxu0 0
      %1364 = vmatpush1.bf16.msra.mxu0 0
      %1365 = vmatprep.subr.bf16.mxu0 0
      %1366 = vmatpush1.bf16.msra.mxu0 0
      %1367 = vmatprep.subr.bf16.mxu0 0
      %1368 = vmatpush1.bf16.msra.mxu0 0
      %1369 = vmatprep.subr.bf16.mxu0 0
      %1370 = vmatpush1.bf16.msra.mxu0 0
      %1371 = vmatprep.subr.bf16.mxu0 0
      %1372 = vmatpush1.bf16.msra.mxu0 %v1352
      %1373 = vmatprep.subr.bf16.mxu0 0
      %1374 = vmatpush2.bf16.msra.mxu0 0
      %1375 = vmatprep.subr.bf16.mxu0 0
      %1376 = vmatpush2.bf16.msra.mxu0 0
      %1377 = vmatprep.subr.bf16.mxu0 0
      %1378 = vmatpush2.bf16.msra.mxu0 0
      %1379 = vmatprep.subr.bf16.mxu0 0
      %1380 = vmatpush2.bf16.msra.mxu0 0
      %1381 = vmatprep.subr.bf16.mxu0 0
      %1382 = vmatpush2.bf16.msra.mxu0 0
      %1383 = vmatprep.subr.bf16.mxu0 0
      %1384 = vmatpush2.bf16.msra.mxu0 0
      %1385 = vmatprep.subr.bf16.mxu0 0
      %1386 = vmatpush2.bf16.msra.mxu0 0
      %1387 = vmatprep.subr.bf16.mxu0 0
      %1388 = vmatpush2.bf16.msra.mxu0 0
      %1389 = vmatprep.mubr.bf16.mxu0 0
      %1390 = vmatmul.mubr.bf16.gmra.mxu0 %v1355
      %v1391 = vpop.f32.mrf.mxu0
      %v1392 = vadd.f32 0.0, %v1391
      %v1393 = vpop.f32.mrf.mxu0
      %v1394 = vpop.f32.mrf.mxu0
      %v1395 = vadd.f32 0.0, %v1394
      %v1396 = vpop.f32.mrf.mxu0
      %1397 = vdwg.mxu0
      %v1398 = vpack.c.bf16 %v1395, %v1392
      %v1400 = vunpack.c.l.b16 %v1398
      %v1401 = vunpack.c.h.b16 %v1398
      %v1402 = vpack.c.b16 %v1400, %v1400
      %v1403 = vpack.c.b16 %v1401, %v1401
      %1404 = vrot.lane.b32.xlu0 %v1402, 16
      %v1405 = vpop.permute.xlu0 %1404
      %1406 = vrot.lane.b32.xlu0 %v1403, 16
      %v1407 = vpop.permute.xlu0 %1406
      %vm1410 = vcmask 158848
      %1411 = vst.msk [vmem:[%s285] sm:$0xf] %vm1410, %v1405
      %1412 = vst.msk [vmem:[%s285 + $0x4] sm:$0xf] %vm1410, %v1407
      %v1413 = vsel %vm392, %v1392, 0.0
      %v1414 = vsel %vm392, %v1395, 0.0
      %v1415 = vadd.f32 %v1413, %v1414
      %v1416 = vrot.slane %v1415, 4
      %v1417 = vadd.f32 %v1415, %v1416
      %v1418 = vrot.slane %v1417, 2
      %v1419 = vadd.f32 %v1417, %v1418
      %v1420 = vrot.slane %v1419, 1
      %v1421 = vadd.f32 %v1419, %v1420
      %1423 = vrot.lane.b32.xlu0 %v1421, 16
      %v1424 = vpop.permute.xlu0 %1423
      %vm1426 = vcmask 155776
      %1427 = vst.msk [vmem:[%s289] sm:$0x1] %vm1426, %v1424
      %v1428 = vmul.f32 %v1392, %v1392
      %v1429 = vmul.f32 %v1395, %v1395
      %v1430 = vsel %vm392, %v1428, 0.0
      %v1431 = vsel %vm392, %v1429, 0.0
      %v1432 = vadd.f32 %v1430, %v1431
      %v1433 = vrot.slane %v1432, 4
      %v1434 = vadd.f32 %v1432, %v1433
      %v1435 = vrot.slane %v1434, 2
      %v1436 = vadd.f32 %v1434, %v1435
      %v1437 = vrot.slane %v1436, 1
      %v1438 = vadd.f32 %v1436, %v1437
      %1440 = vrot.lane.b32.xlu0 %v1438, 16
      %v1441 = vpop.permute.xlu0 %1440
      %1443 = vst.msk [vmem:[%s289 + $0x1] sm:$0x1] %vm1426, %v1441
      %1444 = vrot.lane.b32.xlu0 %v391, 108
      %v1445 = vpop.permute.xlu0 %1444
      %1446 = vrot.lane.b32.xlu0 %v384, 108
      %v1447 = vpop.permute.xlu0 %1446
      %v1449 = vsel %vm392, %v1445, 0
      %v1452 = vsel %vm392, %v1447, 0
      %1454 = vmatprep.subr.bf16.mxu0 0
      %1455 = vmatpush1.bf16.xpose.msra.mxu0 0
      %1456 = vmatprep.subr.bf16.mxu0 0
      %1457 = vmatpush1.bf16.xpose.msra.mxu0 0
      %1458 = vmatprep.subr.bf16.mxu0 0
      %1459 = vmatpush1.bf16.xpose.msra.mxu0 0
      %1460 = vmatprep.subr.bf16.mxu0 0
      %1461 = vmatpush1.bf16.xpose.msra.mxu0 0
      %1462 = vmatprep.subr.bf16.mxu0 0
      %1463 = vmatpush1.bf16.xpose.msra.mxu0 0
      %1464 = vmatprep.subr.bf16.mxu0 0
      %1465 = vmatpush1.bf16.xpose.msra.mxu0 0
      %1466 = vmatprep.subr.bf16.mxu0 0
      %1467 = vmatpush1.bf16.xpose.msra.mxu0 0
      %1468 = vmatprep.subr.bf16.mxu0 0
      %1469 = vmatpush1.bf16.xpose.msra.mxu0 %v1452
      %1470 = vmatprep.subr.bf16.mxu0 0
      %1471 = vmatpush2.bf16.xpose.msra.mxu0 0
      %1472 = vmatprep.subr.bf16.mxu0 0
      %1473 = vmatpush2.bf16.xpose.msra.mxu0 0
      %1474 = vmatprep.subr.bf16.mxu0 0
      %1475 = vmatpush2.bf16.xpose.msra.mxu0 0
      %1476 = vmatprep.subr.bf16.mxu0 0
      %1477 = vmatpush2.bf16.xpose.msra.mxu0 0
      %1478 = vmatprep.subr.bf16.mxu0 0
      %1479 = vmatpush2.bf16.xpose.msra.mxu0 0
      %1480 = vmatprep.subr.bf16.mxu0 0
      %1481 = vmatpush2.bf16.xpose.msra.mxu0 0
      %1482 = vmatprep.subr.bf16.mxu0 0
      %1483 = vmatpush2.bf16.xpose.msra.mxu0 0
      %1484 = vmatprep.subr.bf16.mxu0 0
      %1485 = vmatpush2.bf16.xpose.msra.mxu0 0
      %1486 = vmatprep.mubr.bf16.mxu0 0
      %1487 = vmatmul.mubr.bf16.gmra.mxu0 %v1449
      %v1488 = vpop.f32.mrf.mxu0
      %v1489 = vadd.f32 0.0, %v1488
      %v1490 = vpop.f32.mrf.mxu0
      %v1491 = vpop.f32.mrf.mxu0
      %v1492 = vadd.f32 0.0, %v1491
      %v1493 = vpop.f32.mrf.mxu0
      %1494 = vdwg.mxu0
      %1495 = vrot.lane.b32.xlu0 %v384, 76
      %v1496 = vpop.permute.xlu0 %1495
      %v1498 = vsel %vm392, %v1496, 0
      %1500 = vmatprep.subr.bf16.mxu0 0
      %1501 = vmatpush1.bf16.xpose.msra.mxu0 0
      %1502 = vmatprep.subr.bf16.mxu0 0
      %1503 = vmatpush1.bf16.xpose.msra.mxu0 0
      %1504 = vmatprep.subr.bf16.mxu0 0
      %1505 = vmatpush1.bf16.xpose.msra.mxu0 0
      %1506 = vmatprep.subr.bf16.mxu0 0
      %1507 = vmatpush1.bf16.xpose.msra.mxu0 0
      %1508 = vmatprep.subr.bf16.mxu0 0
      %1509 = vmatpush1.bf16.xpose.msra.mxu0 0
      %1510 = vmatprep.subr.bf16.mxu0 0
      %1511 = vmatpush1.bf16.xpose.msra.mxu0 0
      %1512 = vmatprep.subr.bf16.mxu0 0
      %1513 = vmatpush1.bf16.xpose.msra.mxu0 0
      %1514 = vmatprep.subr.bf16.mxu0 0
      %1515 = vmatpush1.bf16.xpose.msra.mxu0 %v1498
      %1516 = vmatprep.subr.bf16.mxu0 0
      %1517 = vmatpush2.bf16.xpose.msra.mxu0 0
      %1518 = vmatprep.subr.bf16.mxu0 0
      %1519 = vmatpush2.bf16.xpose.msra.mxu0 0
      %1520 = vmatprep.subr.bf16.mxu0 0
      %1521 = vmatpush2.bf16.xpose.msra.mxu0 0
      %1522 = vmatprep.subr.bf16.mxu0 0
      %1523 = vmatpush2.bf16.xpose.msra.mxu0 0
      %1524 = vmatprep.subr.bf16.mxu0 0
      %1525 = vmatpush2.bf16.xpose.msra.mxu0 0
      %1526 = vmatprep.subr.bf16.mxu0 0
      %1527 = vmatpush2.bf16.xpose.msra.mxu0 0
      %1528 = vmatprep.subr.bf16.mxu0 0
      %1529 = vmatpush2.bf16.xpose.msra.mxu0 0
      %1530 = vmatprep.subr.bf16.mxu0 0
      %1531 = vmatpush2.bf16.xpose.msra.mxu0 0
      %1532 = vmatprep.mubr.bf16.mxu0 0
      %1533 = vmatmul.mubr.bf16.gmra.mxu0 %v1452
      %v1534 = vpop.f32.mrf.mxu0
      %v1535 = vadd.f32 %v1489, %v1534
      %v1536 = vpop.f32.mrf.mxu0
      %v1537 = vpop.f32.mrf.mxu0
      %v1538 = vadd.f32 %v1492, %v1537
      %v1539 = vpop.f32.mrf.mxu0
      %1540 = vdwg.mxu0
      %v1541 = vsel %vm487, %v1535, -inf
      %1542 = vmax.xlane.f32.xlu0 %v1541
      %v1543 = vpop.xlane.xlu0 %1542
      %v1544 = vsel %vm487, %v1538, -inf
      %1545 = vmax.xlane.f32.xlu0 %v1544
      %v1546 = vpop.xlane.xlu0 %1545
      %v1547 = vsub.f32 %v1535, %v1543
      %v1548 = vsub.f32 %v1538, %v1546
      %v1549 = vmul.f32 %v1547, 1.442695
      %v1550 = vpow.pop %v1549
      %v1551 = vmul.f32 %v1548, 1.442695
      %v1552 = vpow.pop %v1551
      %v1553 = vsel %vm487, %v1550, 0.0
      %1554 = vadd.xlane.f32.xlu0 %v1553
      %v1555 = vpop.xlane.xlu0 %1554
      %v1556 = vsel %vm487, %v1552, 0.0
      %1557 = vadd.xlane.f32.xlu0 %v1556
      %v1558 = vpop.xlane.xlu0 %1557
      %v1559 = vrcp.pop %v1555
      %v1560 = vrcp.pop %v1558
      %v1561 = vmul.f32 %v1550, %v1559
      %v1562 = vmul.f32 %v1552, %v1560
      %v1563 = vpack.c.bf16 %v1562, %v1561
      %1564 = vrot.lane.b32.xlu0 %v384, 44
      %v1565 = vpop.permute.xlu0 %1564
      %v1568 = vsel %vm487, %v1563, 0
      %1570 = vmatprep.subr.bf16.mxu0 0
      %1571 = vmatpush1.bf16.msra.mxu0 0
      %1572 = vmatprep.subr.bf16.mxu0 0
      %1573 = vmatpush1.bf16.msra.mxu0 0
      %1574 = vmatprep.subr.bf16.mxu0 0
      %1575 = vmatpush1.bf16.msra.mxu0 0
      %1576 = vmatprep.subr.bf16.mxu0 0
      %1577 = vmatpush1.bf16.msra.mxu0 0
      %1578 = vmatprep.subr.bf16.mxu0 0
      %1579 = vmatpush1.bf16.msra.mxu0 0
      %1580 = vmatprep.subr.bf16.mxu0 0
      %1581 = vmatpush1.bf16.msra.mxu0 0
      %1582 = vmatprep.subr.bf16.mxu0 0
      %1583 = vmatpush1.bf16.msra.mxu0 0
      %1584 = vmatprep.subr.bf16.mxu0 0
      %1585 = vmatpush1.bf16.msra.mxu0 %v1565
      %1586 = vmatprep.subr.bf16.mxu0 0
      %1587 = vmatpush2.bf16.msra.mxu0 0
      %1588 = vmatprep.subr.bf16.mxu0 0
      %1589 = vmatpush2.bf16.msra.mxu0 0
      %1590 = vmatprep.subr.bf16.mxu0 0
      %1591 = vmatpush2.bf16.msra.mxu0 0
      %1592 = vmatprep.subr.bf16.mxu0 0
      %1593 = vmatpush2.bf16.msra.mxu0 0
      %1594 = vmatprep.subr.bf16.mxu0 0
      %1595 = vmatpush2.bf16.msra.mxu0 0
      %1596 = vmatprep.subr.bf16.mxu0 0
      %1597 = vmatpush2.bf16.msra.mxu0 0
      %1598 = vmatprep.subr.bf16.mxu0 0
      %1599 = vmatpush2.bf16.msra.mxu0 0
      %1600 = vmatprep.subr.bf16.mxu0 0
      %1601 = vmatpush2.bf16.msra.mxu0 0
      %1602 = vmatprep.mubr.bf16.mxu0 0
      %1603 = vmatmul.mubr.bf16.gmra.mxu0 %v1568
      %v1604 = vpop.f32.mrf.mxu0
      %v1605 = vadd.f32 0.0, %v1604
      %v1606 = vpop.f32.mrf.mxu0
      %v1607 = vpop.f32.mrf.mxu0
      %v1608 = vadd.f32 0.0, %v1607
      %v1609 = vpop.f32.mrf.mxu0
      %1610 = vdwg.mxu0
      %v1611 = vpack.c.bf16 %v1608, %v1605
      %v1613 = vunpack.c.l.b16 %v1611
      %v1614 = vunpack.c.h.b16 %v1611
      %v1615 = vpack.c.b16 %v1613, %v1613
      %v1616 = vpack.c.b16 %v1614, %v1614
      %1617 = vrot.lane.b32.xlu0 %v1615, 20
      %v1618 = vpop.permute.xlu0 %1617
      %1619 = vrot.lane.b32.xlu0 %v1616, 20
      %v1620 = vpop.permute.xlu0 %1619
      %vm1623 = vcmask 191648
      %1624 = vst.msk [vmem:[%s285] sm:$0xf] %vm1623, %v1618
      %1625 = vst.msk [vmem:[%s285 + $0x4] sm:$0xf] %vm1623, %v1620
      %v1626 = vsel %vm392, %v1605, 0.0
      %v1627 = vsel %vm392, %v1608, 0.0
      %v1628 = vadd.f32 %v1626, %v1627
      %v1629 = vrot.slane %v1628, 4
      %v1630 = vadd.f32 %v1628, %v1629
      %v1631 = vrot.slane %v1630, 2
      %v1632 = vadd.f32 %v1630, %v1631
      %v1633 = vrot.slane %v1632, 1
      %v1634 = vadd.f32 %v1632, %v1633
      %1636 = vrot.lane.b32.xlu0 %v1634, 20
      %v1637 = vpop.permute.xlu0 %1636
      %vm1639 = vcmask 188576
      %1640 = vst.msk [vmem:[%s289] sm:$0x1] %vm1639, %v1637
      %v1641 = vmul.f32 %v1605, %v1605
      %v1642 = vmul.f32 %v1608, %v1608
      %v1643 = vsel %vm392, %v1641, 0.0
      %v1644 = vsel %vm392, %v1642, 0.0
      %v1645 = vadd.f32 %v1643, %v1644
      %v1646 = vrot.slane %v1645, 4
      %v1647 = vadd.f32 %v1645, %v1646
      %v1648 = vrot.slane %v1647, 2
      %v1649 = vadd.f32 %v1647, %v1648
      %v1650 = vrot.slane %v1649, 1
      %v1651 = vadd.f32 %v1649, %v1650
      %1653 = vrot.lane.b32.xlu0 %v1651, 20
      %v1654 = vpop.permute.xlu0 %1653
      %1656 = vst.msk [vmem:[%s289 + $0x1] sm:$0x1] %vm1639, %v1654
      %1657 = vrot.lane.b32.xlu0 %v391, 104
      %v1658 = vpop.permute.xlu0 %1657
      %1659 = vrot.lane.b32.xlu0 %v384, 104
      %v1660 = vpop.permute.xlu0 %1659
      %v1662 = vsel %vm392, %v1658, 0
      %v1665 = vsel %vm392, %v1660, 0
      %1667 = vmatprep.subr.bf16.mxu0 0
      %1668 = vmatpush1.bf16.xpose.msra.mxu0 0
      %1669 = vmatprep.subr.bf16.mxu0 0
      %1670 = vmatpush1.bf16.xpose.msra.mxu0 0
      %1671 = vmatprep.subr.bf16.mxu0 0
      %1672 = vmatpush1.bf16.xpose.msra.mxu0 0
      %1673 = vmatprep.subr.bf16.mxu0 0
      %1674 = vmatpush1.bf16.xpose.msra.mxu0 0
      %1675 = vmatprep.subr.bf16.mxu0 0
      %1676 = vmatpush1.bf16.xpose.msra.mxu0 0
      %1677 = vmatprep.subr.bf16.mxu0 0
      %1678 = vmatpush1.bf16.xpose.msra.mxu0 0
      %1679 = vmatprep.subr.bf16.mxu0 0
      %1680 = vmatpush1.bf16.xpose.msra.mxu0 0
      %1681 = vmatprep.subr.bf16.mxu0 0
      %1682 = vmatpush1.bf16.xpose.msra.mxu0 %v1665
      %1683 = vmatprep.subr.bf16.mxu0 0
      %1684 = vmatpush2.bf16.xpose.msra.mxu0 0
      %1685 = vmatprep.subr.bf16.mxu0 0
      %1686 = vmatpush2.bf16.xpose.msra.mxu0 0
      %1687 = vmatprep.subr.bf16.mxu0 0
      %1688 = vmatpush2.bf16.xpose.msra.mxu0 0
      %1689 = vmatprep.subr.bf16.mxu0 0
      %1690 = vmatpush2.bf16.xpose.msra.mxu0 0
      %1691 = vmatprep.subr.bf16.mxu0 0
      %1692 = vmatpush2.bf16.xpose.msra.mxu0 0
      %1693 = vmatprep.subr.bf16.mxu0 0
      %1694 = vmatpush2.bf16.xpose.msra.mxu0 0
      %1695 = vmatprep.subr.bf16.mxu0 0
      %1696 = vmatpush2.bf16.xpose.msra.mxu0 0
      %1697 = vmatprep.subr.bf16.mxu0 0
      %1698 = vmatpush2.bf16.xpose.msra.mxu0 0
      %1699 = vmatprep.mubr.bf16.mxu0 0
      %1700 = vmatmul.mubr.bf16.gmra.mxu0 %v1662
      %v1701 = vpop.f32.mrf.mxu0
      %v1702 = vadd.f32 0.0, %v1701
      %v1703 = vpop.f32.mrf.mxu0
      %v1704 = vpop.f32.mrf.mxu0
      %v1705 = vadd.f32 0.0, %v1704
      %v1706 = vpop.f32.mrf.mxu0
      %1707 = vdwg.mxu0
      %1708 = vrot.lane.b32.xlu0 %v384, 72
      %v1709 = vpop.permute.xlu0 %1708
      %v1711 = vsel %vm392, %v1709, 0
      %1713 = vmatprep.subr.bf16.mxu0 0
      %1714 = vmatpush1.bf16.xpose.msra.mxu0 0
      %1715 = vmatprep.subr.bf16.mxu0 0
      %1716 = vmatpush1.bf16.xpose.msra.mxu0 0
      %1717 = vmatprep.subr.bf16.mxu0 0
      %1718 = vmatpush1.bf16.xpose.msra.mxu0 0
      %1719 = vmatprep.subr.bf16.mxu0 0
      %1720 = vmatpush1.bf16.xpose.msra.mxu0 0
      %1721 = vmatprep.subr.bf16.mxu0 0
      %1722 = vmatpush1.bf16.xpose.msra.mxu0 0
      %1723 = vmatprep.subr.bf16.mxu0 0
      %1724 = vmatpush1.bf16.xpose.msra.mxu0 0
      %1725 = vmatprep.subr.bf16.mxu0 0
      %1726 = vmatpush1.bf16.xpose.msra.mxu0 0
      %1727 = vmatprep.subr.bf16.mxu0 0
      %1728 = vmatpush1.bf16.xpose.msra.mxu0 %v1711
      %1729 = vmatprep.subr.bf16.mxu0 0
      %1730 = vmatpush2.bf16.xpose.msra.mxu0 0
      %1731 = vmatprep.subr.bf16.mxu0 0
      %1732 = vmatpush2.bf16.xpose.msra.mxu0 0
      %1733 = vmatprep.subr.bf16.mxu0 0
      %1734 = vmatpush2.bf16.xpose.msra.mxu0 0
      %1735 = vmatprep.subr.bf16.mxu0 0
      %1736 = vmatpush2.bf16.xpose.msra.mxu0 0
      %1737 = vmatprep.subr.bf16.mxu0 0
      %1738 = vmatpush2.bf16.xpose.msra.mxu0 0
      %1739 = vmatprep.subr.bf16.mxu0 0
      %1740 = vmatpush2.bf16.xpose.msra.mxu0 0
      %1741 = vmatprep.subr.bf16.mxu0 0
      %1742 = vmatpush2.bf16.xpose.msra.mxu0 0
      %1743 = vmatprep.subr.bf16.mxu0 0
      %1744 = vmatpush2.bf16.xpose.msra.mxu0 0
      %1745 = vmatprep.mubr.bf16.mxu0 0
      %1746 = vmatmul.mubr.bf16.gmra.mxu0 %v1665
      %v1747 = vpop.f32.mrf.mxu0
      %v1748 = vadd.f32 %v1702, %v1747
      %v1749 = vpop.f32.mrf.mxu0
      %v1750 = vpop.f32.mrf.mxu0
      %v1751 = vadd.f32 %v1705, %v1750
      %v1752 = vpop.f32.mrf.mxu0
      %1753 = vdwg.mxu0
      %v1754 = vsel %vm487, %v1748, -inf
      %1755 = vmax.xlane.f32.xlu0 %v1754
      %v1756 = vpop.xlane.xlu0 %1755
      %v1757 = vsel %vm487, %v1751, -inf
      %1758 = vmax.xlane.f32.xlu0 %v1757
      %v1759 = vpop.xlane.xlu0 %1758
      %v1760 = vsub.f32 %v1748, %v1756
      %v1761 = vsub.f32 %v1751, %v1759
      %v1762 = vmul.f32 %v1760, 1.442695
      %v1763 = vpow.pop %v1762
      %v1764 = vmul.f32 %v1761, 1.442695
      %v1765 = vpow.pop %v1764
      %v1766 = vsel %vm487, %v1763, 0.0
      %1767 = vadd.xlane.f32.xlu0 %v1766
      %v1768 = vpop.xlane.xlu0 %1767
      %v1769 = vsel %vm487, %v1765, 0.0
      %1770 = vadd.xlane.f32.xlu0 %v1769
      %v1771 = vpop.xlane.xlu0 %1770
      %v1772 = vrcp.pop %v1768
      %v1773 = vrcp.pop %v1771
      %v1774 = vmul.f32 %v1763, %v1772
      %v1775 = vmul.f32 %v1765, %v1773
      %v1776 = vpack.c.bf16 %v1775, %v1774
      %1777 = vrot.lane.b32.xlu0 %v384, 40
      %v1778 = vpop.permute.xlu0 %1777
      %v1781 = vsel %vm487, %v1776, 0
      %1783 = vmatprep.subr.bf16.mxu0 0
      %1784 = vmatpush1.bf16.msra.mxu0 0
      %1785 = vmatprep.subr.bf16.mxu0 0
      %1786 = vmatpush1.bf16.msra.mxu0 0
      %1787 = vmatprep.subr.bf16.mxu0 0
      %1788 = vmatpush1.bf16.msra.mxu0 0
      %1789 = vmatprep.subr.bf16.mxu0 0
      %1790 = vmatpush1.bf16.msra.mxu0 0
      %1791 = vmatprep.subr.bf16.mxu0 0
      %1792 = vmatpush1.bf16.msra.mxu0 0
      %1793 = vmatprep.subr.bf16.mxu0 0
      %1794 = vmatpush1.bf16.msra.mxu0 0
      %1795 = vmatprep.subr.bf16.mxu0 0
      %1796 = vmatpush1.bf16.msra.mxu0 0
      %1797 = vmatprep.subr.bf16.mxu0 0
      %1798 = vmatpush1.bf16.msra.mxu0 %v1778
      %1799 = vmatprep.subr.bf16.mxu0 0
      %1800 = vmatpush2.bf16.msra.mxu0 0
      %1801 = vmatprep.subr.bf16.mxu0 0
      %1802 = vmatpush2.bf16.msra.mxu0 0
      %1803 = vmatprep.subr.bf16.mxu0 0
      %1804 = vmatpush2.bf16.msra.mxu0 0
      %1805 = vmatprep.subr.bf16.mxu0 0
      %1806 = vmatpush2.bf16.msra.mxu0 0
      %1807 = vmatprep.subr.bf16.mxu0 0
      %1808 = vmatpush2.bf16.msra.mxu0 0
      %1809 = vmatprep.subr.bf16.mxu0 0
      %1810 = vmatpush2.bf16.msra.mxu0 0
      %1811 = vmatprep.subr.bf16.mxu0 0
      %1812 = vmatpush2.bf16.msra.mxu0 0
      %1813 = vmatprep.subr.bf16.mxu0 0
      %1814 = vmatpush2.bf16.msra.mxu0 0
      %1815 = vmatprep.mubr.bf16.mxu0 0
      %1816 = vmatmul.mubr.bf16.gmra.mxu0 %v1781
      %v1817 = vpop.f32.mrf.mxu0
      %v1818 = vadd.f32 0.0, %v1817
      %v1819 = vpop.f32.mrf.mxu0
      %v1820 = vpop.f32.mrf.mxu0
      %v1821 = vadd.f32 0.0, %v1820
      %v1822 = vpop.f32.mrf.mxu0
      %1823 = vdwg.mxu0
      %v1824 = vpack.c.bf16 %v1821, %v1818
      %v1826 = vunpack.c.l.b16 %v1824
      %v1827 = vunpack.c.h.b16 %v1824
      %v1828 = vpack.c.b16 %v1826, %v1826
      %v1829 = vpack.c.b16 %v1827, %v1827
      %1830 = vrot.lane.b32.xlu0 %v1828, 24
      %v1831 = vpop.permute.xlu0 %1830
      %1832 = vrot.lane.b32.xlu0 %v1829, 24
      %v1833 = vpop.permute.xlu0 %1832
      %vm1836 = vcmask 224448
      %1837 = vst.msk [vmem:[%s285] sm:$0xf] %vm1836, %v1831
      %1838 = vst.msk [vmem:[%s285 + $0x4] sm:$0xf] %vm1836, %v1833
      %v1839 = vsel %vm392, %v1818, 0.0
      %v1840 = vsel %vm392, %v1821, 0.0
      %v1841 = vadd.f32 %v1839, %v1840
      %v1842 = vrot.slane %v1841, 4
      %v1843 = vadd.f32 %v1841, %v1842
      %v1844 = vrot.slane %v1843, 2
      %v1845 = vadd.f32 %v1843, %v1844
      %v1846 = vrot.slane %v1845, 1
      %v1847 = vadd.f32 %v1845, %v1846
      %1849 = vrot.lane.b32.xlu0 %v1847, 24
      %v1850 = vpop.permute.xlu0 %1849
      %vm1852 = vcmask 221376
      %1853 = vst.msk [vmem:[%s289] sm:$0x1] %vm1852, %v1850
      %v1854 = vmul.f32 %v1818, %v1818
      %v1855 = vmul.f32 %v1821, %v1821
      %v1856 = vsel %vm392, %v1854, 0.0
      %v1857 = vsel %vm392, %v1855, 0.0
      %v1858 = vadd.f32 %v1856, %v1857
      %v1859 = vrot.slane %v1858, 4
      %v1860 = vadd.f32 %v1858, %v1859
      %v1861 = vrot.slane %v1860, 2
      %v1862 = vadd.f32 %v1860, %v1861
      %v1863 = vrot.slane %v1862, 1
      %v1864 = vadd.f32 %v1862, %v1863
      %1866 = vrot.lane.b32.xlu0 %v1864, 24
      %v1867 = vpop.permute.xlu0 %1866
      %1869 = vst.msk [vmem:[%s289 + $0x1] sm:$0x1] %vm1852, %v1867
      %1870 = vrot.lane.b32.xlu0 %v391, 100
      %v1871 = vpop.permute.xlu0 %1870
      %1872 = vrot.lane.b32.xlu0 %v384, 100
      %v1873 = vpop.permute.xlu0 %1872
      %v1875 = vsel %vm392, %v1871, 0
      %v1878 = vsel %vm392, %v1873, 0
      %1880 = vmatprep.subr.bf16.mxu0 0
      %1881 = vmatpush1.bf16.xpose.msra.mxu0 0
      %1882 = vmatprep.subr.bf16.mxu0 0
      %1883 = vmatpush1.bf16.xpose.msra.mxu0 0
      %1884 = vmatprep.subr.bf16.mxu0 0
      %1885 = vmatpush1.bf16.xpose.msra.mxu0 0
      %1886 = vmatprep.subr.bf16.mxu0 0
      %1887 = vmatpush1.bf16.xpose.msra.mxu0 0
      %1888 = vmatprep.subr.bf16.mxu0 0
      %1889 = vmatpush1.bf16.xpose.msra.mxu0 0
      %1890 = vmatprep.subr.bf16.mxu0 0
      %1891 = vmatpush1.bf16.xpose.msra.mxu0 0
      %1892 = vmatprep.subr.bf16.mxu0 0
      %1893 = vmatpush1.bf16.xpose.msra.mxu0 0
      %1894 = vmatprep.subr.bf16.mxu0 0
      %1895 = vmatpush1.bf16.xpose.msra.mxu0 %v1878
      %1896 = vmatprep.subr.bf16.mxu0 0
      %1897 = vmatpush2.bf16.xpose.msra.mxu0 0
      %1898 = vmatprep.subr.bf16.mxu0 0
      %1899 = vmatpush2.bf16.xpose.msra.mxu0 0
      %1900 = vmatprep.subr.bf16.mxu0 0
      %1901 = vmatpush2.bf16.xpose.msra.mxu0 0
      %1902 = vmatprep.subr.bf16.mxu0 0
      %1903 = vmatpush2.bf16.xpose.msra.mxu0 0
      %1904 = vmatprep.subr.bf16.mxu0 0
      %1905 = vmatpush2.bf16.xpose.msra.mxu0 0
      %1906 = vmatprep.subr.bf16.mxu0 0
      %1907 = vmatpush2.bf16.xpose.msra.mxu0 0
      %1908 = vmatprep.subr.bf16.mxu0 0
      %1909 = vmatpush2.bf16.xpose.msra.mxu0 0
      %1910 = vmatprep.subr.bf16.mxu0 0
      %1911 = vmatpush2.bf16.xpose.msra.mxu0 0
      %1912 = vmatprep.mubr.bf16.mxu0 0
      %1913 = vmatmul.mubr.bf16.gmra.mxu0 %v1875
      %v1914 = vpop.f32.mrf.mxu0
      %v1915 = vadd.f32 0.0, %v1914
      %v1916 = vpop.f32.mrf.mxu0
      %v1917 = vpop.f32.mrf.mxu0
      %v1918 = vadd.f32 0.0, %v1917
      %v1919 = vpop.f32.mrf.mxu0
      %1920 = vdwg.mxu0
      %1921 = vrot.lane.b32.xlu0 %v384, 68
      %v1922 = vpop.permute.xlu0 %1921
      %v1924 = vsel %vm392, %v1922, 0
      %1926 = vmatprep.subr.bf16.mxu0 0
      %1927 = vmatpush1.bf16.xpose.msra.mxu0 0
      %1928 = vmatprep.subr.bf16.mxu0 0
      %1929 = vmatpush1.bf16.xpose.msra.mxu0 0
      %1930 = vmatprep.subr.bf16.mxu0 0
      %1931 = vmatpush1.bf16.xpose.msra.mxu0 0
      %1932 = vmatprep.subr.bf16.mxu0 0
      %1933 = vmatpush1.bf16.xpose.msra.mxu0 0
      %1934 = vmatprep.subr.bf16.mxu0 0
      %1935 = vmatpush1.bf16.xpose.msra.mxu0 0
      %1936 = vmatprep.subr.bf16.mxu0 0
      %1937 = vmatpush1.bf16.xpose.msra.mxu0 0
      %1938 = vmatprep.subr.bf16.mxu0 0
      %1939 = vmatpush1.bf16.xpose.msra.mxu0 0
      %1940 = vmatprep.subr.bf16.mxu0 0
      %1941 = vmatpush1.bf16.xpose.msra.mxu0 %v1924
      %1942 = vmatprep.subr.bf16.mxu0 0
      %1943 = vmatpush2.bf16.xpose.msra.mxu0 0
      %1944 = vmatprep.subr.bf16.mxu0 0
      %1945 = vmatpush2.bf16.xpose.msra.mxu0 0
      %1946 = vmatprep.subr.bf16.mxu0 0
      %1947 = vmatpush2.bf16.xpose.msra.mxu0 0
      %1948 = vmatprep.subr.bf16.mxu0 0
      %1949 = vmatpush2.bf16.xpose.msra.mxu0 0
      %1950 = vmatprep.subr.bf16.mxu0 0
      %1951 = vmatpush2.bf16.xpose.msra.mxu0 0
      %1952 = vmatprep.subr.bf16.mxu0 0
      %1953 = vmatpush2.bf16.xpose.msra.mxu0 0
      %1954 = vmatprep.subr.bf16.mxu0 0
      %1955 = vmatpush2.bf16.xpose.msra.mxu0 0
      %1956 = vmatprep.subr.bf16.mxu0 0
      %1957 = vmatpush2.bf16.xpose.msra.mxu0 0
      %1958 = vmatprep.mubr.bf16.mxu0 0
      %1959 = vmatmul.mubr.bf16.gmra.mxu0 %v1878
      %v1960 = vpop.f32.mrf.mxu0
      %v1961 = vadd.f32 %v1915, %v1960
      %v1962 = vpop.f32.mrf.mxu0
      %v1963 = vpop.f32.mrf.mxu0
      %v1964 = vadd.f32 %v1918, %v1963
      %v1965 = vpop.f32.mrf.mxu0
      %1966 = vdwg.mxu0
      %v1967 = vsel %vm487, %v1961, -inf
      %1968 = vmax.xlane.f32.xlu0 %v1967
      %v1969 = vpop.xlane.xlu0 %1968
      %v1970 = vsel %vm487, %v1964, -inf
      %1971 = vmax.xlane.f32.xlu0 %v1970
      %v1972 = vpop.xlane.xlu0 %1971
      %v1973 = vsub.f32 %v1961, %v1969
      %v1974 = vsub.f32 %v1964, %v1972
      %v1975 = vmul.f32 %v1973, 1.442695
      %v1976 = vpow.pop %v1975
      %v1977 = vmul.f32 %v1974, 1.442695
      %v1978 = vpow.pop %v1977
      %v1979 = vsel %vm487, %v1976, 0.0
      %1980 = vadd.xlane.f32.xlu0 %v1979
      %v1981 = vpop.xlane.xlu0 %1980
      %v1982 = vsel %vm487, %v1978, 0.0
      %1983 = vadd.xlane.f32.xlu0 %v1982
      %v1984 = vpop.xlane.xlu0 %1983
      %v1985 = vrcp.pop %v1981
      %v1986 = vrcp.pop %v1984
      %v1987 = vmul.f32 %v1976, %v1985
      %v1988 = vmul.f32 %v1978, %v1986
      %v1989 = vpack.c.bf16 %v1988, %v1987
      %1990 = vrot.lane.b32.xlu0 %v384, 36
      %v1991 = vpop.permute.xlu0 %1990
      %v1994 = vsel %vm487, %v1989, 0
      %1996 = vmatprep.subr.bf16.mxu0 0
      %1997 = vmatpush1.bf16.msra.mxu0 0
      %1998 = vmatprep.subr.bf16.mxu0 0
      %1999 = vmatpush1.bf16.msra.mxu0 0
      %2000 = vmatprep.subr.bf16.mxu0 0
      %2001 = vmatpush1.bf16.msra.mxu0 0
      %2002 = vmatprep.subr.bf16.mxu0 0
      %2003 = vmatpush1.bf16.msra.mxu0 0
      %2004 = vmatprep.subr.bf16.mxu0 0
      %2005 = vmatpush1.bf16.msra.mxu0 0
      %2006 = vmatprep.subr.bf16.mxu0 0
      %2007 = vmatpush1.bf16.msra.mxu0 0
      %2008 = vmatprep.subr.bf16.mxu0 0
      %2009 = vmatpush1.bf16.msra.mxu0 0
      %2010 = vmatprep.subr.bf16.mxu0 0
      %2011 = vmatpush1.bf16.msra.mxu0 %v1991
      %2012 = vmatprep.subr.bf16.mxu0 0
      %2013 = vmatpush2.bf16.msra.mxu0 0
      %2014 = vmatprep.subr.bf16.mxu0 0
      %2015 = vmatpush2.bf16.msra.mxu0 0
      %2016 = vmatprep.subr.bf16.mxu0 0
      %2017 = vmatpush2.bf16.msra.mxu0 0
      %2018 = vmatprep.subr.bf16.mxu0 0
      %2019 = vmatpush2.bf16.msra.mxu0 0
      %2020 = vmatprep.subr.bf16.mxu0 0
      %2021 = vmatpush2.bf16.msra.mxu0 0
      %2022 = vmatprep.subr.bf16.mxu0 0
      %2023 = vmatpush2.bf16.msra.mxu0 0
      %2024 = vmatprep.subr.bf16.mxu0 0
      %2025 = vmatpush2.bf16.msra.mxu0 0
      %2026 = vmatprep.subr.bf16.mxu0 0
      %2027 = vmatpush2.bf16.msra.mxu0 0
      %2028 = vmatprep.mubr.bf16.mxu0 0
      %2029 = vmatmul.mubr.bf16.gmra.mxu0 %v1994
      %v2030 = vpop.f32.mrf.mxu0
      %v2031 = vadd.f32 0.0, %v2030
      %v2032 = vpop.f32.mrf.mxu0
      %v2033 = vpop.f32.mrf.mxu0
      %v2034 = vadd.f32 0.0, %v2033
      %v2035 = vpop.f32.mrf.mxu0
      %2036 = vdwg.mxu0
      %v2037 = vpack.c.bf16 %v2034, %v2031
      %v2039 = vunpack.c.l.b16 %v2037
      %v2040 = vunpack.c.h.b16 %v2037
      %v2041 = vpack.c.b16 %v2039, %v2039
      %v2042 = vpack.c.b16 %v2040, %v2040
      %2043 = vrot.lane.b32.xlu0 %v2041, 28
      %v2044 = vpop.permute.xlu0 %2043
      %2045 = vrot.lane.b32.xlu0 %v2042, 28
      %v2046 = vpop.permute.xlu0 %2045
      %vm2049 = vcmask 257248
      %2050 = vst.msk [vmem:[%s285] sm:$0xf] %vm2049, %v2044
      %2051 = vst.msk [vmem:[%s285 + $0x4] sm:$0xf] %vm2049, %v2046
      %v2052 = vsel %vm392, %v2031, 0.0
      %v2053 = vsel %vm392, %v2034, 0.0
      %v2054 = vadd.f32 %v2052, %v2053
      %v2055 = vrot.slane %v2054, 4
      %v2056 = vadd.f32 %v2054, %v2055
      %v2057 = vrot.slane %v2056, 2
      %v2058 = vadd.f32 %v2056, %v2057
      %v2059 = vrot.slane %v2058, 1
      %v2060 = vadd.f32 %v2058, %v2059
      %2062 = vrot.lane.b32.xlu0 %v2060, 28
      %v2063 = vpop.permute.xlu0 %2062
      %vm2065 = vcmask 254176
      %2066 = vst.msk [vmem:[%s289] sm:$0x1] %vm2065, %v2063
      %v2067 = vmul.f32 %v2031, %v2031
      %v2068 = vmul.f32 %v2034, %v2034
      %v2069 = vsel %vm392, %v2067, 0.0
      %v2070 = vsel %vm392, %v2068, 0.0
      %v2071 = vadd.f32 %v2069, %v2070
      %v2072 = vrot.slane %v2071, 4
      %v2073 = vadd.f32 %v2071, %v2072
      %v2074 = vrot.slane %v2073, 2
      %v2075 = vadd.f32 %v2073, %v2074
      %v2076 = vrot.slane %v2075, 1
      %v2077 = vadd.f32 %v2075, %v2076
      %2079 = vrot.lane.b32.xlu0 %v2077, 28
      %v2080 = vpop.permute.xlu0 %2079
      %2082 = vst.msk [vmem:[%s289 + $0x1] sm:$0x1] %vm2065, %v2080
      %p2083 = scmp.lt.s32.totalorder %s19, 1
      %s2084 = scalar_select %p2083, %s19, 1
      %s2085 = smul.addr %s2084, 2
      %s2086 = smul.addr %s2085, 4
      %s2087 = scalar_lea.vmem %s6, %s2086
      %p2088 = scmp.lt.s32.totalorder %s19, 1
      %s2089 = scalar_select %p2088, %s19, 1
      %s2090 = smul.addr %s2089, 2
      %s2091 = scalar_lea.vmem %s7, %s2090
      // Predicated region
      $region45: #{botneck2_forward.4} parent=43 // pred_check
        %p2092 = pneg %p168
      $region46: #{botneck2_forward.4} parent=43 // pred_check_branch
        %2094 = sbr.rel (%p2092) target = $region48
      $region47: #{botneck2_forward.4} parent=43 // pred_region
        _
      $region48: #{botneck2_forward.4} parent=43 // pred_fallthru
        _
      // Predicated region
      $region49: #{botneck2_forward.4} parent=43 // pred_check
        %p2095 = pneg %p194
      $region50: #{botneck2_forward.4} parent=43 // pred_check_branch
        %2097 = sbr.rel (%p2095) target = $region52
      $region51: #{botneck2_forward.4} parent=43 // pred_region
        _
      $region52: #{botneck2_forward.4} parent=43 // pred_fallthru
        _
    $region44: #{botneck2_forward.4} parent=5 // pred_fallthru
      _
    %p2098 = scmp.le.s32.totalorder 2, %s14
    // Predicated region
    $region53: #{botneck2_forward.4} parent=5 // pred_check
      %p2099 = pneg %p2098
    $region54: #{botneck2_forward.4} parent=5 // pred_check_branch
      %2101 = sbr.rel (%p2099) target = $region56
    $region55: #{botneck2_forward.4} parent=5 // pred_region
      %s2102 = ssub.s32 %s14, 2
      // Predicated region
      $region57: #{botneck2_forward.4} parent=55 // pred_check
        %p2103 = pneg %p174
      $region58: #{botneck2_forward.4} parent=55 // pred_check_branch
        %2105 = sbr.rel (%p2103) target = $region60
      $region59: #{botneck2_forward.4} parent=55 // pred_region
        %p2106 = scmp.lt.s32.totalorder %s20, 1
        %s2107 = scalar_select %p2106, %s20, 1
        %s2108 = smul.addr %s2107, 2
        %s2109 = smul.addr %s2108, 4
        %s2110 = scalar_lea.vmem %s6, %s2109
      $region60: #{botneck2_forward.4} parent=55 // pred_fallthru
        _
      // Predicated region
      $region61: #{botneck2_forward.4} parent=55 // pred_check
        %p2111 = pneg %p200
      $region62: #{botneck2_forward.4} parent=55 // pred_check_branch
        %2113 = sbr.rel (%p2111) target = $region64
      $region63: #{botneck2_forward.4} parent=55 // pred_region
        %p2114 = scmp.lt.s32.totalorder %s20, 1
        %s2115 = scalar_select %p2114, %s20, 1
        %s2116 = smul.addr %s2115, 2
        %s2117 = scalar_lea.vmem %s7, %s2116
      $region64: #{botneck2_forward.4} parent=55 // pred_fallthru
        _
    $region56: #{botneck2_forward.4} parent=5 // pred_fallthru
      _
  $region6: #{botneck2_forward.4} parent=0 // loop_footer
    %s18 = sadd.s32 1, %s14
  $region7: #{botneck2_forward.4} parent=0 // loop_footer_branch
    %13 = sbr.rel target = $region3
  $region8: #{botneck2_forward.4} parent=0 // loop_exit
    _

</llo_original>
